<compile_context>
chip_gen: v6e
topology: v6e:2x2x1
jax: 0.10.0
libtpu: 0.0.40
codegen_flags: <defaults>
</compile_context>

<pallas_src>
import functools

import jax
import jax.numpy as jnp
from jax import lax
from jax.experimental import pallas as pl
from jax.experimental.pallas import tpu as pltpu

PAD_INDEX = 0


# ------------------------------ small helpers -------------------------------

def _round_up(x, m):
    return (x + m - 1) // m * m


def _pick_time_chunk(T, B_pad, feat, H, max_chunk=32,
                     vmem_budget=8 * 1024 * 1024):
    """Timesteps per grid step, sized from a VMEM budget.

    Per chunk-timestep (f32 bytes):
      * 2 dirs x 2 pipeline buffers of the x stream: 4 * B_pad * feat * 4
      * 2 dirs of gi scratch:                        2 * B_pad * 3H  * 4
    """
    per_t = 4 * B_pad * (4 * feat + 6 * H)
    tc = max(1, min(max_chunk, T, vmem_budget // max(per_t, 1)))
    return int(tc)


# --------------------- fused Lin + projection + BiGRU + mean -----------------

def _encoder_kernel(xf_ref, xb_ref, wcf_ref, wcb_ref, bcf_ref, bcb_ref,
                    whh_ref, bn_ref, linw_ref, linb_ref,
                    fs_ref, mean_ref,
                    hf_scr, hb_scr, sumx_scr, gif_scr, gib_scr,
                    *, H, T_src):
    c = pl.program_id(0)
    nc = pl.num_programs(0)
    TC, B_pad, feat = xf_ref.shape
    G = 3 * H

    @pl.when(c == 0)
    def _():
        hf_scr[...] = jnp.zeros_like(hf_scr)
        hb_scr[...] = jnp.zeros_like(hb_scr)
        sumx_scr[...] = jnp.zeros_like(sumx_scr)

    x_f = xf_ref[...]                      # (TC, B_pad, feat)  forward chunk c
    x_b = xb_ref[...]                      # (TC, B_pad, feat)  backward chunk nc-1-c

    # --- emb-mean accumulator: the fwd stream visits every timestep exactly
    #     once; zero-padded rows (time >= T_h) contribute nothing. ---
    sumx_scr[...] += jnp.sum(x_f, axis=0)

    # --- Lin + input-to-hidden projection for the whole chunk, per direction.
    #     Lin is pre-folded into wc_*; bf16 MXU operands, f32 accumulation.
    #     The gi chunks stay in VMEM scratch (no HBM round-trip). ---
    xf2 = x_f.reshape(TC * B_pad, feat).astype(jnp.bfloat16)
    xb2 = x_b.reshape(TC * B_pad, feat).astype(jnp.bfloat16)
    gif_scr[...] = (jnp.dot(xf2, wcf_ref[...],
                            preferred_element_type=jnp.float32)
                    + bcf_ref[...]).reshape(TC, B_pad, G)
    gib_scr[...] = (jnp.dot(xb2, wcb_ref[...],
                            preferred_element_type=jnp.float32)
                    + bcb_ref[...]).reshape(TC, B_pad, G)

    whh = whh_ref[...]                     # (2H, 6H) block-diagonal
    bn = bn_ref[...]                       # (1, 2H) = [b_hn_f | b_hn_b]
    bn_f = bn[:, :H]
    bn_b = bn[:, H:]

    def step(s, carry):
        hf, hb = carry
        # ONE block-diagonal MXU matmul advances both directions.
        hcat = jnp.concatenate([hf, hb], axis=-1)                    # (B, 2H)
        gh = jnp.dot(hcat, whh, preferred_element_type=jnp.float32)  # (B, 6H)
        gi_f = gif_scr[s]                  # fwd consumes local time s
        gi_b = gib_scr[TC - 1 - s]         # bwd consumes local time TC-1-s
        # forward cell (gi already holds b_ih and the r/z parts of b_hh)
        r_f = jax.nn.sigmoid(gi_f[:, 0:H] + gh[:, 0:H])
        z_f = jax.nn.sigmoid(gi_f[:, H:2 * H] + gh[:, H:2 * H])
        n_f = jnp.tanh(gi_f[:, 2 * H:G] + r_f * (gh[:, 2 * H:G] + bn_f))
        hf_new = (1.0 - z_f) * n_f + z_f * hf
        # backward cell
        r_b = jax.nn.sigmoid(gi_b[:, 0:H] + gh[:, G:G + H])
        z_b = jax.nn.sigmoid(gi_b[:, H:2 * H] + gh[:, G + H:G + 2 * H])
        n_b = jnp.tanh(gi_b[:, 2 * H:G] + r_b * (gh[:, G + 2 * H:] + bn_b))
        hb_new = (1.0 - z_b) * n_b + z_b * hb
        # mask out the chunk-rounding time-padding steps (t >= T_src)
        t_f = c * TC + s
        t_b = (nc - 1 - c) * TC + (TC - 1 - s)
        keep_f = (t_f < T_src).astype(jnp.float32)
        keep_b = (t_b < T_src).astype(jnp.float32)
        hf = keep_f * hf_new + (1.0 - keep_f) * hf
        hb = keep_b * hb_new + (1.0 - keep_b) * hb
        return hf, hb

    hf, hb = lax.fori_loop(0, TC, step, (hf_scr[...], hb_scr[...]), unroll=True)
    hf_scr[...] = hf
    hb_scr[...] = hb

    @pl.when(c == nc - 1)
    def _():
        fs_ref[0] = hf                     # forward final state (after t=T_src-1)
        fs_ref[1] = hb                     # backward final state (after t=0)
        # mean_t Lin(x_t) = (sum_t x_t / T_src) @ lin_W^T + lin_b  (f32, exact)
        mean_ref[...] = (jnp.dot(sumx_scr[...] * (1.0 / T_src), linw_ref[...],
                                 preferred_element_type=jnp.float32)
                         + linb_ref[...])


# ------------------------------ Encoder forward -------------------------------

def encoder_forward(src, hidden, params, *, max_time_chunk=32):
    """src: (B, T_src) int32 token ids; hidden: (B, T_h, 2*rnn_hidden) f32.

    Returns (final_states (1, B, 2H), src_embedding.mean(dim=1) (B, E))."""
    B, T_src = src.shape
    T_h, feat = hidden.shape[1], hidden.shape[2]
    if T_src < T_h:
        raise ValueError("src length must be >= hidden length")

    H = params["whh_f"].shape[1]           # torch weight_hh: (3H, H)
    E = params["lin_w"].shape[0]           # torch Lin weight: (E, feat)
    G = 3 * H

    B_pad = _round_up(B, 8)
    TC = _pick_time_chunk(T_src, B_pad, feat, H, max_chunk=max_time_chunk)
    nc = (T_src + TC - 1) // TC
    T_pad = nc * TC

    # time-major, zero-padded GRU input.  Time rows T_h..T_src-1 match the
    # reference's zero concat; rows >= T_src are masked inside the kernel.
    x_tm = jnp.transpose(hidden, (1, 0, 2)).astype(jnp.float32)
    x_tm = jnp.pad(x_tm, ((0, T_pad - T_h), (0, B_pad - B), (0, 0)))

    # ---- fold Lin into the input-to-hidden weights (exact algebra) ----
    lin_wT = params["lin_w"].T.astype(jnp.float32)          # (feat, E)
    lin_b = params["lin_b"].reshape(1, E).astype(jnp.float32)
    zH = jnp.zeros((H,), jnp.float32)

    def fold(wih, bih, bhh):
        wT = wih.T                                           # (E, 3H)
        wc = (lin_wT @ wT).astype(jnp.bfloat16)              # (feat, 3H)
        bc = lin_b @ wT + (bih + jnp.concatenate([bhh[:2 * H], zH])).reshape(1, G)
        return wc, bc.astype(jnp.float32)

    wc_f, bc_f = fold(params["wih_f"], params["bih_f"], params["bhh_f"])
    wc_b, bc_b = fold(params["wih_b"], params["bih_b"], params["bhh_b"])

    # block-diagonal recurrent weight: [hf|hb](B,2H) @ whh_blk -> [gh_f | gh_b]
    whh_blk = jnp.zeros((2 * H, 2 * G), jnp.float32)
    whh_blk = whh_blk.at[:H, :G].set(params["whh_f"].T)
    whh_blk = whh_blk.at[H:, G:].set(params["whh_b"].T)
    bn_cat = jnp.concatenate(
        [params["bhh_f"][2 * H:], params["bhh_b"][2 * H:]]).reshape(1, 2 * H)

    kernel = functools.partial(_encoder_kernel, H=H, T_src=T_src)

    finals, mean_pad = pl.pallas_call(
        kernel,
        out_shape=(jax.ShapeDtypeStruct((2, B_pad, H), jnp.float32),
                   jax.ShapeDtypeStruct((B_pad, E), jnp.float32)),
        grid_spec=pltpu.PrefetchScalarGridSpec(
            num_scalar_prefetch=0,
            grid=(nc,),
            in_specs=[
                pl.BlockSpec((TC, B_pad, feat), lambda c: (c, 0, 0)),           # x fwd
                pl.BlockSpec((TC, B_pad, feat), lambda c: (nc - 1 - c, 0, 0)),  # x bwd
                pl.BlockSpec((feat, G), lambda c: (0, 0)),       # wc_f (bf16)
                pl.BlockSpec((feat, G), lambda c: (0, 0)),       # wc_b (bf16)
                pl.BlockSpec((1, G), lambda c: (0, 0)),          # bc_f
                pl.BlockSpec((1, G), lambda c: (0, 0)),          # bc_b
                pl.BlockSpec((2 * H, 2 * G), lambda c: (0, 0)),  # whh block-diag
                pl.BlockSpec((1, 2 * H), lambda c: (0, 0)),      # b_hn cat
                pl.BlockSpec((feat, E), lambda c: (0, 0)),       # lin_W^T (f32)
                pl.BlockSpec((1, E), lambda c: (0, 0)),          # lin_b
            ],
            out_specs=[pl.BlockSpec((2, B_pad, H), lambda c: (0, 0, 0)),
                       pl.BlockSpec((B_pad, E), lambda c: (0, 0))],
            scratch_shapes=[
                pltpu.VMEM((B_pad, H), jnp.float32),      # h forward
                pltpu.VMEM((B_pad, H), jnp.float32),      # h backward
                pltpu.VMEM((B_pad, feat), jnp.float32),   # sum_t x_t
                pltpu.VMEM((TC, B_pad, G), jnp.float32),  # gi forward chunk
                pltpu.VMEM((TC, B_pad, G), jnp.float32),  # gi backward chunk
            ],
        ),
        compiler_params=pltpu.CompilerParams(
            dimension_semantics=("arbitrary",),           # serial recurrence
            vmem_limit_bytes=48 * 1024 * 1024),
    )(x_tm, x_tm, wc_f, wc_b, bc_f, bc_b, whh_blk, bn_cat, lin_wT, lin_b)

    # chunk(2, dim=0) + cat(dim=2)  ->  (num_layers=1, B, 2H)
    final_states = jnp.concatenate([finals[0, :B], finals[1, :B]], axis=1)[None]
    return final_states, mean_pad[:B]


# ------------------------- pure-JAX reference check --------------------------

def _gru_cell_ref(x, h, wih, whh, bih, bhh):
    gi = x @ wih.T + bih
    gh = h @ whh.T + bhh
    H = h.shape[-1]
    r = jax.nn.sigmoid(gi[:, :H] + gh[:, :H])
    z = jax.nn.sigmoid(gi[:, H:2 * H] + gh[:, H:2 * H])
    n = jnp.tanh(gi[:, 2 * H:] + r * gh[:, 2 * H:])
    return (1.0 - z) * n + z * h


def encoder_forward_ref(src, hidden, params):
    B, T_src = src.shape
    feat = hidden.shape[2]
    zero = jnp.zeros((B, T_src - hidden.shape[1], feat), dtype=hidden.dtype)
    src_emb_in = jnp.concatenate([hidden, zero], axis=1)
    src_embedding = src_emb_in @ params["lin_w"].T + params["lin_b"]

    H = params["whh_f"].shape[1]
    hf = jnp.zeros((B, H), jnp.float32)
    hb = jnp.zeros((B, H), jnp.float32)
    for t in range(T_src):
        hf = _gru_cell_ref(src_embedding[:, t], hf, params["wih_f"],
                           params["whh_f"], params["bih_f"], params["bhh_f"])
        hb = _gru_cell_ref(src_embedding[:, T_src - 1 - t], hb, params["wih_b"],
                           params["whh_b"], params["bih_b"], params["bhh_b"])
    fs = jnp.concatenate([hf, hb], axis=1)[None]                  # (1, B, 2H)
    return fs, src_embedding.mean(axis=1)


# ----------------------------------- main ------------------------------------

if __name__ == "__main__":
    rnn_hidden = 16            # GRU hidden size
    embed_size = 32            # Lin out_features == GRU input size
    feat = 2 * rnn_hidden      # Lin in_features (opt.rnn_hidden * 2)
    vocab = 100

    key = jax.random.PRNGKey(0)
    ks = jax.random.split(key, 12)

    def unif(k, shape, fan_in):
        bound = 1.0 / jnp.sqrt(fan_in)
        return jax.random.uniform(k, shape, jnp.float32, -bound, bound)

    params = {
        "lin_w": unif(ks[0], (embed_size, feat), feat),        # torch (out, in)
        "lin_b": unif(ks[1], (embed_size,), feat),
        # forward-direction GRU (weight_ih_l0, weight_hh_l0, biases), gates r,z,n
        "wih_f": unif(ks[2], (3 * rnn_hidden, embed_size), rnn_hidden),
        "whh_f": unif(ks[3], (3 * rnn_hidden, rnn_hidden), rnn_hidden),
        "bih_f": unif(ks[4], (3 * rnn_hidden,), rnn_hidden),
        "bhh_f": unif(ks[5], (3 * rnn_hidden,), rnn_hidden),
        # reverse-direction GRU
        "wih_b": unif(ks[6], (3 * rnn_hidden, embed_size), rnn_hidden),
        "whh_b": unif(ks[7], (3 * rnn_hidden, rnn_hidden), rnn_hidden),
        "bih_b": unif(ks[8], (3 * rnn_hidden,), rnn_hidden),
        "bhh_b": unif(ks[9], (3 * rnn_hidden,), rnn_hidden),
    }

    def run_case(name, B, T_src, T_h, pad_tail, max_time_chunk):
        # token ids with trailing PAD to give unequal lengths (no-op path)
        src = jax.random.randint(ks[10], (B, T_src), 1, vocab).astype(jnp.int32)
        if pad_tail:
            src = src.at[B - 1, T_src - pad_tail:].set(PAD_INDEX)
        hidden = jax.random.normal(ks[11], (B, T_h, feat), jnp.float32)

        fwd = jax.jit(functools.partial(encoder_forward,
                                        max_time_chunk=max_time_chunk))
        final_states, emb_mean = fwd(src, hidden, params)
        jax.block_until_ready((final_states, emb_mean))

        fs_ref, mean_ref = encoder_forward_ref(src, hidden, params)
        assert final_states.shape == (1, B, 2 * rnn_hidden), name
        assert emb_mean.shape == (B, embed_size), name
        # bf16 MXU operands in the input projection -> slightly looser tolerance
        assert jnp.allclose(final_states, fs_ref, atol=2e-2, rtol=2e-2), name
        assert jnp.allclose(emb_mean, mean_ref, atol=2e-2, rtol=2e-2), name

    # case 1: chunk covers the whole sequence (single grid step)
    run_case("case1", B=2, T_src=8, T_h=5, pad_tail=3, max_time_chunk=32)
    # case 2: multi-chunk grid + time padding with masked tail steps (T=11, TC=4)
    run_case("case2", B=3, T_src=11, T_h=6, pad_tail=4, max_time_chunk=4)

    print("KERNEL_OK")
</pallas_src>

<mosaic_0001>
module attributes {stable_mosaic.version = 11 : i64} {
  func.func @_encoder_kernel(%arg0: i32, %arg1: memref<8x8x32xf32, #tpu.memory_space<vmem>>, %arg2: memref<8x8x32xf32, #tpu.memory_space<vmem>>, %arg3: memref<32x48xbf16, #tpu.memory_space<vmem>>, %arg4: memref<32x48xbf16, #tpu.memory_space<vmem>>, %arg5: memref<1x48xf32, #tpu.memory_space<vmem>>, %arg6: memref<1x48xf32, #tpu.memory_space<vmem>>, %arg7: memref<32x96xf32, #tpu.memory_space<vmem>>, %arg8: memref<1x32xf32, #tpu.memory_space<vmem>>, %arg9: memref<32x32xf32, #tpu.memory_space<vmem>>, %arg10: memref<1x32xf32, #tpu.memory_space<vmem>>, %arg11: memref<2x8x16xf32, #tpu.memory_space<vmem>>, %arg12: memref<8x32xf32, #tpu.memory_space<vmem>>, %arg13: memref<8x16xf32, #tpu.memory_space<vmem>>, %arg14: memref<8x16xf32, #tpu.memory_space<vmem>>, %arg15: memref<8x32xf32, #tpu.memory_space<vmem>>, %arg16: memref<8x8x48xf32, #tpu.memory_space<vmem>>, %arg17: memref<8x8x48xf32, #tpu.memory_space<vmem>>) attributes {dimension_semantics = [#tpu.dimension_semantics<arbitrary>], iteration_bounds = array<i64: 1>, scalar_prefetch = 0 : i64, scratch_operands = 5 : i64, tpu.core_type = #tpu.core_type<tc>, window_params = [{transform_indices = @transform_0, window_bounds = array<i64: 8, 8, 32>}, {transform_indices = @transform_1, window_bounds = array<i64: 8, 8, 32>}, {pipeline_mode = #tpu.pipeline_mode<synchronous>, transform_indices = @transform_2, window_bounds = array<i64: 32, 48>}, {pipeline_mode = #tpu.pipeline_mode<synchronous>, transform_indices = @transform_3, window_bounds = array<i64: 32, 48>}, {pipeline_mode = #tpu.pipeline_mode<synchronous>, transform_indices = @transform_4, window_bounds = array<i64: 1, 48>}, {pipeline_mode = #tpu.pipeline_mode<synchronous>, transform_indices = @transform_5, window_bounds = array<i64: 1, 48>}, {pipeline_mode = #tpu.pipeline_mode<synchronous>, transform_indices = @transform_6, window_bounds = array<i64: 32, 96>}, {pipeline_mode = #tpu.pipeline_mode<synchronous>, transform_indices = @transform_7, window_bounds = array<i64: 1, 32>}, {pipeline_mode = #tpu.pipeline_mode<synchronous>, transform_indices = @transform_8, window_bounds = array<i64: 32, 32>}, {pipeline_mode = #tpu.pipeline_mode<synchronous>, transform_indices = @transform_9, window_bounds = array<i64: 1, 32>}, {pipeline_mode = #tpu.pipeline_mode<synchronous>, transform_indices = @transform_10, window_bounds = array<i64: 2, 8, 16>}, {pipeline_mode = #tpu.pipeline_mode<synchronous>, transform_indices = @transform_11, window_bounds = array<i64: 8, 32>}]} {
    %c0_i32 = arith.constant 0 : i32
    %0 = arith.cmpi eq, %arg0, %c0_i32 : i32
    %1 = arith.extui %0 : i1 to i32
    %c0_i32_0 = arith.constant 0 : i32
    %2 = arith.cmpi ne, %1, %c0_i32_0 : i32
    scf.if %2 {
      %cst_201 = arith.constant 0.000000e+00 : f32
      %750 = vector.broadcast %cst_201 : f32 to vector<8x16xf32>
      %c0_202 = arith.constant 0 : index
      %c0_203 = arith.constant 0 : index
      %751 = vector.load %arg13[%c0_202, %c0_203] : memref<8x16xf32, #tpu.memory_space<vmem>>, vector<8x16xf32>
      tpu.vector_store %arg13[%c0_202, %c0_203], %750 {strides = array<i32>} : memref<8x16xf32, #tpu.memory_space<vmem>>, vector<8x16xf32>,
      %cst_204 = arith.constant 0.000000e+00 : f32
      %752 = vector.broadcast %cst_204 : f32 to vector<8x16xf32>
      %c0_205 = arith.constant 0 : index
      %c0_206 = arith.constant 0 : index
      %753 = vector.load %arg14[%c0_205, %c0_206] : memref<8x16xf32, #tpu.memory_space<vmem>>, vector<8x16xf32>
      tpu.vector_store %arg14[%c0_205, %c0_206], %752 {strides = array<i32>} : memref<8x16xf32, #tpu.memory_space<vmem>>, vector<8x16xf32>,
      %cst_207 = arith.constant 0.000000e+00 : f32
      %754 = vector.broadcast %cst_207 : f32 to vector<8x32xf32>
      %c0_208 = arith.constant 0 : index
      %c0_209 = arith.constant 0 : index
      %755 = vector.load %arg15[%c0_208, %c0_209] : memref<8x32xf32, #tpu.memory_space<vmem>>, vector<8x32xf32>
      tpu.vector_store %arg15[%c0_208, %c0_209], %754 {strides = array<i32>} : memref<8x32xf32, #tpu.memory_space<vmem>>, vector<8x32xf32>,
    } else {
    }
    %c0 = arith.constant 0 : index
    %c0_1 = arith.constant 0 : index
    %c0_2 = arith.constant 0 : index
    %3 = vector.load %arg1[%c0, %c0_1, %c0_2] : memref<8x8x32xf32, #tpu.memory_space<vmem>>, vector<8x8x32xf32>
    %c0_3 = arith.constant 0 : index
    %c0_4 = arith.constant 0 : index
    %c0_5 = arith.constant 0 : index
    %4 = vector.load %arg2[%c0_3, %c0_4, %c0_5] : memref<8x8x32xf32, #tpu.memory_space<vmem>>, vector<8x8x32xf32>
    %c0_6 = arith.constant 0 : index
    %c0_7 = arith.constant 0 : index
    %5 = vector.load %arg15[%c0_6, %c0_7] : memref<8x32xf32, #tpu.memory_space<vmem>>, vector<8x32xf32>
    %cst = arith.constant dense<0.000000e+00> : vector<8x32xf32>
    %6 = vector.multi_reduction <add>, %3, %cst [0] : vector<8x8x32xf32> to vector<8x32xf32>
    %7 = arith.addf %5, %6 : vector<8x32xf32>
    %c0_8 = arith.constant 0 : index
    %c0_9 = arith.constant 0 : index
    %8 = vector.load %arg15[%c0_8, %c0_9] : memref<8x32xf32, #tpu.memory_space<vmem>>, vector<8x32xf32>
    tpu.vector_store %arg15[%c0_8, %c0_9], %7 {strides = array<i32>} : memref<8x32xf32, #tpu.memory_space<vmem>>, vector<8x32xf32>,
    %9 = vector.shape_cast %3 : vector<8x8x32xf32> to vector<64x32xf32>
    %10 = arith.truncf %9 : vector<64x32xf32> to vector<64x32xbf16>
    %11 = vector.shape_cast %4 : vector<8x8x32xf32> to vector<64x32xf32>
    %12 = arith.truncf %11 : vector<64x32xf32> to vector<64x32xbf16>
    %c0_10 = arith.constant 0 : index
    %c0_11 = arith.constant 0 : index
    %13 = vector.load %arg3[%c0_10, %c0_11] : memref<32x48xbf16, #tpu.memory_space<vmem>>, vector<32x48xbf16>
    %cst_12 = arith.constant dense<0.000000e+00> : vector<64x48xf32>
    %14 = tpu.matmul %10, %13, %cst_12 {dimension_numbers = #tpu.dot_dimension_numbers<[1], [0], [0], [1], [0, 0, 1, 1], [], []>} : vector<64x32xbf16>, vector<32x48xbf16>, vector<64x48xf32> -> vector<64x48xf32>
    %c0_13 = arith.constant 0 : index
    %c0_14 = arith.constant 0 : index
    %15 = vector.load %arg5[%c0_13, %c0_14] : memref<1x48xf32, #tpu.memory_space<vmem>>, vector<1x48xf32>
    %16 = vector.broadcast %15 : vector<1x48xf32> to vector<64x48xf32>
    %17 = arith.addf %14, %16 : vector<64x48xf32>
    %18 = vector.shape_cast %17 : vector<64x48xf32> to vector<8x8x48xf32>
    %c0_15 = arith.constant 0 : index
    %c0_16 = arith.constant 0 : index
    %c0_17 = arith.constant 0 : index
    %19 = vector.load %arg16[%c0_15, %c0_16, %c0_17] : memref<8x8x48xf32, #tpu.memory_space<vmem>>, vector<8x8x48xf32>
    tpu.vector_store %arg16[%c0_15, %c0_16, %c0_17], %18 {strides = array<i32>} : memref<8x8x48xf32, #tpu.memory_space<vmem>>, vector<8x8x48xf32>,
    %c0_18 = arith.constant 0 : index
    %c0_19 = arith.constant 0 : index
    %20 = vector.load %arg4[%c0_18, %c0_19] : memref<32x48xbf16, #tpu.memory_space<vmem>>, vector<32x48xbf16>
    %cst_20 = arith.constant dense<0.000000e+00> : vector<64x48xf32>
    %21 = tpu.matmul %12, %20, %cst_20 {dimension_numbers = #tpu.dot_dimension_numbers<[1], [0], [0], [1], [0, 0, 1, 1], [], []>} : vector<64x32xbf16>, vector<32x48xbf16>, vector<64x48xf32> -> vector<64x48xf32>
    %c0_21 = arith.constant 0 : index
    %c0_22 = arith.constant 0 : index
    %22 = vector.load %arg6[%c0_21, %c0_22] : memref<1x48xf32, #tpu.memory_space<vmem>>, vector<1x48xf32>
    %23 = vector.broadcast %22 : vector<1x48xf32> to vector<64x48xf32>
    %24 = arith.addf %21, %23 : vector<64x48xf32>
    %25 = vector.shape_cast %24 : vector<64x48xf32> to vector<8x8x48xf32>
    %c0_23 = arith.constant 0 : index
    %c0_24 = arith.constant 0 : index
    %c0_25 = arith.constant 0 : index
    %26 = vector.load %arg17[%c0_23, %c0_24, %c0_25] : memref<8x8x48xf32, #tpu.memory_space<vmem>>, vector<8x8x48xf32>
    tpu.vector_store %arg17[%c0_23, %c0_24, %c0_25], %25 {strides = array<i32>} : memref<8x8x48xf32, #tpu.memory_space<vmem>>, vector<8x8x48xf32>,
    %c0_26 = arith.constant 0 : index
    %c0_27 = arith.constant 0 : index
    %27 = vector.load %arg7[%c0_26, %c0_27] : memref<32x96xf32, #tpu.memory_space<vmem>>, vector<32x96xf32>
    %c0_28 = arith.constant 0 : index
    %c0_29 = arith.constant 0 : index
    %28 = vector.load %arg8[%c0_28, %c0_29] : memref<1x32xf32, #tpu.memory_space<vmem>>, vector<1x32xf32>
    %29 = vector.extract_strided_slice %28 {offsets = [0, 0], sizes = [1, 16], strides = [1, 1]} : vector<1x32xf32> to vector<1x16xf32>
    %30 = vector.extract_strided_slice %28 {offsets = [0, 16], sizes = [1, 16], strides = [1, 1]} : vector<1x32xf32> to vector<1x16xf32>
    %c0_30 = arith.constant 0 : index
    %c0_31 = arith.constant 0 : index
    %31 = vector.load %arg13[%c0_30, %c0_31] : memref<8x16xf32, #tpu.memory_space<vmem>>, vector<8x16xf32>
    %c0_32 = arith.constant 0 : index
    %c0_33 = arith.constant 0 : index
    %32 = vector.load %arg14[%c0_32, %c0_33] : memref<8x16xf32, #tpu.memory_space<vmem>>, vector<8x16xf32>
    %c0_i32_34 = arith.constant 0 : i32
    %33 = tpu.concatenate %31, %32 in 1 : vector<8x16xf32>, vector<8x16xf32> -> vector<8x32xf32>
    %cst_35 = arith.constant dense<0.000000e+00> : vector<8x96xf32>
    %34 = tpu.matmul %33, %27, %cst_35 {dimension_numbers = #tpu.dot_dimension_numbers<[1], [0], [0], [1], [0, 0, 1, 1], [], []>} : vector<8x32xf32>, vector<32x96xf32>, vector<8x96xf32> -> vector<8x96xf32>
    %35 = arith.index_cast %c0_i32_34 : i32 to index
    %c0_36 = arith.constant 0 : index
    %c0_37 = arith.constant 0 : index
    %36 = vector.load %arg16[%35, %c0_36, %c0_37] : memref<8x8x48xf32, #tpu.memory_space<vmem>>, vector<1x8x48xf32>
    %37 = vector.shape_cast %36 : vector<1x8x48xf32> to vector<8x48xf32>
    %c7_i32 = arith.constant 7 : i32
    %38 = arith.subi %c7_i32, %c0_i32_34 : i32
    %39 = arith.index_cast %38 : i32 to index
    %c0_38 = arith.constant 0 : index
    %c0_39 = arith.constant 0 : index
    %40 = vector.load %arg17[%39, %c0_38, %c0_39] : memref<8x8x48xf32, #tpu.memory_space<vmem>>, vector<1x8x48xf32>
    %41 = vector.shape_cast %40 : vector<1x8x48xf32> to vector<8x48xf32>
    %42 = vector.extract_strided_slice %37 {offsets = [0, 0], sizes = [8, 16], strides = [1, 1]} : vector<8x48xf32> to vector<8x16xf32>
    %43 = vector.extract_strided_slice %34 {offsets = [0, 0], sizes = [8, 16], strides = [1, 1]} : vector<8x96xf32> to vector<8x16xf32>
    %44 = arith.addf %42, %43 : vector<8x16xf32>
    %45 = arith.negf %44 : vector<8x16xf32>
    %46 = math.exp %45 : vector<8x16xf32>
    %cst_40 = arith.constant 1.000000e+00 : f32
    %47 = vector.broadcast %cst_40 : f32 to vector<8x16xf32>
    %48 = arith.addf %47, %46 : vector<8x16xf32>
    %49 = arith.divf %47, %48 : vector<8x16xf32>
    %50 = vector.extract_strided_slice %37 {offsets = [0, 16], sizes = [8, 16], strides = [1, 1]} : vector<8x48xf32> to vector<8x16xf32>
    %51 = vector.extract_strided_slice %34 {offsets = [0, 16], sizes = [8, 16], strides = [1, 1]} : vector<8x96xf32> to vector<8x16xf32>
    %52 = arith.addf %50, %51 : vector<8x16xf32>
    %53 = arith.negf %52 : vector<8x16xf32>
    %54 = math.exp %53 : vector<8x16xf32>
    %cst_41 = arith.constant 1.000000e+00 : f32
    %55 = vector.broadcast %cst_41 : f32 to vector<8x16xf32>
    %56 = arith.addf %55, %54 : vector<8x16xf32>
    %57 = arith.divf %55, %56 : vector<8x16xf32>
    %58 = vector.extract_strided_slice %37 {offsets = [0, 32], sizes = [8, 16], strides = [1, 1]} : vector<8x48xf32> to vector<8x16xf32>
    %59 = vector.extract_strided_slice %34 {offsets = [0, 32], sizes = [8, 16], strides = [1, 1]} : vector<8x96xf32> to vector<8x16xf32>
    %60 = vector.broadcast %29 : vector<1x16xf32> to vector<8x16xf32>
    %61 = arith.addf %59, %60 : vector<8x16xf32>
    %62 = arith.mulf %49, %61 : vector<8x16xf32>
    %63 = arith.addf %58, %62 : vector<8x16xf32>
    %64 = math.tanh %63 : vector<8x16xf32>
    %cst_42 = arith.constant 1.000000e+00 : f32
    %65 = vector.broadcast %cst_42 : f32 to vector<8x16xf32>
    %66 = arith.subf %65, %57 : vector<8x16xf32>
    %67 = arith.mulf %66, %64 : vector<8x16xf32>
    %68 = arith.mulf %57, %31 : vector<8x16xf32>
    %69 = arith.addf %67, %68 : vector<8x16xf32>
    %70 = vector.extract_strided_slice %41 {offsets = [0, 0], sizes = [8, 16], strides = [1, 1]} : vector<8x48xf32> to vector<8x16xf32>
    %71 = vector.extract_strided_slice %34 {offsets = [0, 48], sizes = [8, 16], strides = [1, 1]} : vector<8x96xf32> to vector<8x16xf32>
    %72 = arith.addf %70, %71 : vector<8x16xf32>
    %73 = arith.negf %72 : vector<8x16xf32>
    %74 = math.exp %73 : vector<8x16xf32>
    %cst_43 = arith.constant 1.000000e+00 : f32
    %75 = vector.broadcast %cst_43 : f32 to vector<8x16xf32>
    %76 = arith.addf %75, %74 : vector<8x16xf32>
    %77 = arith.divf %75, %76 : vector<8x16xf32>
    %78 = vector.extract_strided_slice %41 {offsets = [0, 16], sizes = [8, 16], strides = [1, 1]} : vector<8x48xf32> to vector<8x16xf32>
    %79 = vector.extract_strided_slice %34 {offsets = [0, 64], sizes = [8, 16], strides = [1, 1]} : vector<8x96xf32> to vector<8x16xf32>
    %80 = arith.addf %78, %79 : vector<8x16xf32>
    %81 = arith.negf %80 : vector<8x16xf32>
    %82 = math.exp %81 : vector<8x16xf32>
    %cst_44 = arith.constant 1.000000e+00 : f32
    %83 = vector.broadcast %cst_44 : f32 to vector<8x16xf32>
    %84 = arith.addf %83, %82 : vector<8x16xf32>
    %85 = arith.divf %83, %84 : vector<8x16xf32>
    %86 = vector.extract_strided_slice %41 {offsets = [0, 32], sizes = [8, 16], strides = [1, 1]} : vector<8x48xf32> to vector<8x16xf32>
    %87 = vector.extract_strided_slice %34 {offsets = [0, 80], sizes = [8, 16], strides = [1, 1]} : vector<8x96xf32> to vector<8x16xf32>
    %88 = vector.broadcast %30 : vector<1x16xf32> to vector<8x16xf32>
    %89 = arith.addf %87, %88 : vector<8x16xf32>
    %90 = arith.mulf %77, %89 : vector<8x16xf32>
    %91 = arith.addf %86, %90 : vector<8x16xf32>
    %92 = math.tanh %91 : vector<8x16xf32>
    %cst_45 = arith.constant 1.000000e+00 : f32
    %93 = vector.broadcast %cst_45 : f32 to vector<8x16xf32>
    %94 = arith.subf %93, %85 : vector<8x16xf32>
    %95 = arith.mulf %94, %92 : vector<8x16xf32>
    %96 = arith.mulf %85, %32 : vector<8x16xf32>
    %97 = arith.addf %95, %96 : vector<8x16xf32>
    %c8_i32 = arith.constant 8 : i32
    %98 = arith.muli %arg0, %c8_i32 : i32
    %99 = arith.addi %98, %c0_i32_34 : i32
    %c0_i32_46 = arith.constant 0 : i32
    %100 = arith.subi %c0_i32_46, %arg0 : i32
    %c8_i32_47 = arith.constant 8 : i32
    %101 = arith.muli %100, %c8_i32_47 : i32
    %c7_i32_48 = arith.constant 7 : i32
    %102 = arith.subi %c7_i32_48, %c0_i32_34 : i32
    %103 = arith.addi %101, %102 : i32
    %c8_i32_49 = arith.constant 8 : i32
    %104 = arith.cmpi slt, %99, %c8_i32_49 : i32
    %105 = arith.extui %104 : i1 to i32
    %106 = arith.sitofp %105 : i32 to f32
    %c8_i32_50 = arith.constant 8 : i32
    %107 = arith.cmpi slt, %103, %c8_i32_50 : i32
    %108 = arith.extui %107 : i1 to i32
    %109 = arith.sitofp %108 : i32 to f32
    %110 = vector.broadcast %106 : f32 to vector<8x16xf32>
    %111 = arith.mulf %110, %69 : vector<8x16xf32>
    %cst_51 = arith.constant 1.000000e+00 : f32
    %112 = arith.subf %cst_51, %106 : f32
    %113 = vector.broadcast %112 : f32 to vector<8x16xf32>
    %114 = arith.mulf %113, %31 : vector<8x16xf32>
    %115 = arith.addf %111, %114 : vector<8x16xf32>
    %116 = vector.broadcast %109 : f32 to vector<8x16xf32>
    %117 = arith.mulf %116, %97 : vector<8x16xf32>
    %cst_52 = arith.constant 1.000000e+00 : f32
    %118 = arith.subf %cst_52, %109 : f32
    %119 = vector.broadcast %118 : f32 to vector<8x16xf32>
    %120 = arith.mulf %119, %32 : vector<8x16xf32>
    %121 = arith.addf %117, %120 : vector<8x16xf32>
    %c1_i32 = arith.constant 1 : i32
    %122 = tpu.concatenate %115, %121 in 1 : vector<8x16xf32>, vector<8x16xf32> -> vector<8x32xf32>
    %cst_53 = arith.constant dense<0.000000e+00> : vector<8x96xf32>
    %123 = tpu.matmul %122, %27, %cst_53 {dimension_numbers = #tpu.dot_dimension_numbers<[1], [0], [0], [1], [0, 0, 1, 1], [], []>} : vector<8x32xf32>, vector<32x96xf32>, vector<8x96xf32> -> vector<8x96xf32>
    %124 = arith.index_cast %c1_i32 : i32 to index
    %c0_54 = arith.constant 0 : index
    %c0_55 = arith.constant 0 : index
    %125 = vector.load %arg16[%124, %c0_54, %c0_55] : memref<8x8x48xf32, #tpu.memory_space<vmem>>, vector<1x8x48xf32>
    %126 = vector.shape_cast %125 : vector<1x8x48xf32> to vector<8x48xf32>
    %c7_i32_56 = arith.constant 7 : i32
    %127 = arith.subi %c7_i32_56, %c1_i32 : i32
    %128 = arith.index_cast %127 : i32 to index
    %c0_57 = arith.constant 0 : index
    %c0_58 = arith.constant 0 : index
    %129 = vector.load %arg17[%128, %c0_57, %c0_58] : memref<8x8x48xf32, #tpu.memory_space<vmem>>, vector<1x8x48xf32>
    %130 = vector.shape_cast %129 : vector<1x8x48xf32> to vector<8x48xf32>
    %131 = vector.extract_strided_slice %126 {offsets = [0, 0], sizes = [8, 16], strides = [1, 1]} : vector<8x48xf32> to vector<8x16xf32>
    %132 = vector.extract_strided_slice %123 {offsets = [0, 0], sizes = [8, 16], strides = [1, 1]} : vector<8x96xf32> to vector<8x16xf32>
    %133 = arith.addf %131, %132 : vector<8x16xf32>
    %134 = arith.negf %133 : vector<8x16xf32>
    %135 = math.exp %134 : vector<8x16xf32>
    %cst_59 = arith.constant 1.000000e+00 : f32
    %136 = vector.broadcast %cst_59 : f32 to vector<8x16xf32>
    %137 = arith.addf %136, %135 : vector<8x16xf32>
    %138 = arith.divf %136, %137 : vector<8x16xf32>
    %139 = vector.extract_strided_slice %126 {offsets = [0, 16], sizes = [8, 16], strides = [1, 1]} : vector<8x48xf32> to vector<8x16xf32>
    %140 = vector.extract_strided_slice %123 {offsets = [0, 16], sizes = [8, 16], strides = [1, 1]} : vector<8x96xf32> to vector<8x16xf32>
    %141 = arith.addf %139, %140 : vector<8x16xf32>
    %142 = arith.negf %141 : vector<8x16xf32>
    %143 = math.exp %142 : vector<8x16xf32>
    %cst_60 = arith.constant 1.000000e+00 : f32
    %144 = vector.broadcast %cst_60 : f32 to vector<8x16xf32>
    %145 = arith.addf %144, %143 : vector<8x16xf32>
    %146 = arith.divf %144, %145 : vector<8x16xf32>
    %147 = vector.extract_strided_slice %126 {offsets = [0, 32], sizes = [8, 16], strides = [1, 1]} : vector<8x48xf32> to vector<8x16xf32>
    %148 = vector.extract_strided_slice %123 {offsets = [0, 32], sizes = [8, 16], strides = [1, 1]} : vector<8x96xf32> to vector<8x16xf32>
    %149 = vector.broadcast %29 : vector<1x16xf32> to vector<8x16xf32>
    %150 = arith.addf %148, %149 : vector<8x16xf32>
    %151 = arith.mulf %138, %150 : vector<8x16xf32>
    %152 = arith.addf %147, %151 : vector<8x16xf32>
    %153 = math.tanh %152 : vector<8x16xf32>
    %cst_61 = arith.constant 1.000000e+00 : f32
    %154 = vector.broadcast %cst_61 : f32 to vector<8x16xf32>
    %155 = arith.subf %154, %146 : vector<8x16xf32>
    %156 = arith.mulf %155, %153 : vector<8x16xf32>
    %157 = arith.mulf %146, %115 : vector<8x16xf32>
    %158 = arith.addf %156, %157 : vector<8x16xf32>
    %159 = vector.extract_strided_slice %130 {offsets = [0, 0], sizes = [8, 16], strides = [1, 1]} : vector<8x48xf32> to vector<8x16xf32>
    %160 = vector.extract_strided_slice %123 {offsets = [0, 48], sizes = [8, 16], strides = [1, 1]} : vector<8x96xf32> to vector<8x16xf32>
    %161 = arith.addf %159, %160 : vector<8x16xf32>
    %162 = arith.negf %161 : vector<8x16xf32>
    %163 = math.exp %162 : vector<8x16xf32>
    %cst_62 = arith.constant 1.000000e+00 : f32
    %164 = vector.broadcast %cst_62 : f32 to vector<8x16xf32>
    %165 = arith.addf %164, %163 : vector<8x16xf32>
    %166 = arith.divf %164, %165 : vector<8x16xf32>
    %167 = vector.extract_strided_slice %130 {offsets = [0, 16], sizes = [8, 16], strides = [1, 1]} : vector<8x48xf32> to vector<8x16xf32>
    %168 = vector.extract_strided_slice %123 {offsets = [0, 64], sizes = [8, 16], strides = [1, 1]} : vector<8x96xf32> to vector<8x16xf32>
    %169 = arith.addf %167, %168 : vector<8x16xf32>
    %170 = arith.negf %169 : vector<8x16xf32>
    %171 = math.exp %170 : vector<8x16xf32>
    %cst_63 = arith.constant 1.000000e+00 : f32
    %172 = vector.broadcast %cst_63 : f32 to vector<8x16xf32>
    %173 = arith.addf %172, %171 : vector<8x16xf32>
    %174 = arith.divf %172, %173 : vector<8x16xf32>
    %175 = vector.extract_strided_slice %130 {offsets = [0, 32], sizes = [8, 16], strides = [1, 1]} : vector<8x48xf32> to vector<8x16xf32>
    %176 = vector.extract_strided_slice %123 {offsets = [0, 80], sizes = [8, 16], strides = [1, 1]} : vector<8x96xf32> to vector<8x16xf32>
    %177 = vector.broadcast %30 : vector<1x16xf32> to vector<8x16xf32>
    %178 = arith.addf %176, %177 : vector<8x16xf32>
    %179 = arith.mulf %166, %178 : vector<8x16xf32>
    %180 = arith.addf %175, %179 : vector<8x16xf32>
    %181 = math.tanh %180 : vector<8x16xf32>
    %cst_64 = arith.constant 1.000000e+00 : f32
    %182 = vector.broadcast %cst_64 : f32 to vector<8x16xf32>
    %183 = arith.subf %182, %174 : vector<8x16xf32>
    %184 = arith.mulf %183, %181 : vector<8x16xf32>
    %185 = arith.mulf %174, %121 : vector<8x16xf32>
    %186 = arith.addf %184, %185 : vector<8x16xf32>
    %c8_i32_65 = arith.constant 8 : i32
    %187 = arith.muli %arg0, %c8_i32_65 : i32
    %188 = arith.addi %187, %c1_i32 : i32
    %c0_i32_66 = arith.constant 0 : i32
    %189 = arith.subi %c0_i32_66, %arg0 : i32
    %c8_i32_67 = arith.constant 8 : i32
    %190 = arith.muli %189, %c8_i32_67 : i32
    %c7_i32_68 = arith.constant 7 : i32
    %191 = arith.subi %c7_i32_68, %c1_i32 : i32
    %192 = arith.addi %190, %191 : i32
    %c8_i32_69 = arith.constant 8 : i32
    %193 = arith.cmpi slt, %188, %c8_i32_69 : i32
    %194 = arith.extui %193 : i1 to i32
    %195 = arith.sitofp %194 : i32 to f32
    %c8_i32_70 = arith.constant 8 : i32
    %196 = arith.cmpi slt, %192, %c8_i32_70 : i32
    %197 = arith.extui %196 : i1 to i32
    %198 = arith.sitofp %197 : i32 to f32
    %199 = vector.broadcast %195 : f32 to vector<8x16xf32>
    %200 = arith.mulf %199, %158 : vector<8x16xf32>
    %cst_71 = arith.constant 1.000000e+00 : f32
    %201 = arith.subf %cst_71, %195 : f32
    %202 = vector.broadcast %201 : f32 to vector<8x16xf32>
    %203 = arith.mulf %202, %115 : vector<8x16xf32>
    %204 = arith.addf %200, %203 : vector<8x16xf32>
    %205 = vector.broadcast %198 : f32 to vector<8x16xf32>
    %206 = arith.mulf %205, %186 : vector<8x16xf32>
    %cst_72 = arith.constant 1.000000e+00 : f32
    %207 = arith.subf %cst_72, %198 : f32
    %208 = vector.broadcast %207 : f32 to vector<8x16xf32>
    %209 = arith.mulf %208, %121 : vector<8x16xf32>
    %210 = arith.addf %206, %209 : vector<8x16xf32>
    %c2_i32 = arith.constant 2 : i32
    %211 = tpu.concatenate %204, %210 in 1 : vector<8x16xf32>, vector<8x16xf32> -> vector<8x32xf32>
    %cst_73 = arith.constant dense<0.000000e+00> : vector<8x96xf32>
    %212 = tpu.matmul %211, %27, %cst_73 {dimension_numbers = #tpu.dot_dimension_numbers<[1], [0], [0], [1], [0, 0, 1, 1], [], []>} : vector<8x32xf32>, vector<32x96xf32>, vector<8x96xf32> -> vector<8x96xf32>
    %213 = arith.index_cast %c2_i32 : i32 to index
    %c0_74 = arith.constant 0 : index
    %c0_75 = arith.constant 0 : index
    %214 = vector.load %arg16[%213, %c0_74, %c0_75] : memref<8x8x48xf32, #tpu.memory_space<vmem>>, vector<1x8x48xf32>
    %215 = vector.shape_cast %214 : vector<1x8x48xf32> to vector<8x48xf32>
    %c7_i32_76 = arith.constant 7 : i32
    %216 = arith.subi %c7_i32_76, %c2_i32 : i32
    %217 = arith.index_cast %216 : i32 to index
    %c0_77 = arith.constant 0 : index
    %c0_78 = arith.constant 0 : index
    %218 = vector.load %arg17[%217, %c0_77, %c0_78] : memref<8x8x48xf32, #tpu.memory_space<vmem>>, vector<1x8x48xf32>
    %219 = vector.shape_cast %218 : vector<1x8x48xf32> to vector<8x48xf32>
    %220 = vector.extract_strided_slice %215 {offsets = [0, 0], sizes = [8, 16], strides = [1, 1]} : vector<8x48xf32> to vector<8x16xf32>
    %221 = vector.extract_strided_slice %212 {offsets = [0, 0], sizes = [8, 16], strides = [1, 1]} : vector<8x96xf32> to vector<8x16xf32>
    %222 = arith.addf %220, %221 : vector<8x16xf32>
    %223 = arith.negf %222 : vector<8x16xf32>
    %224 = math.exp %223 : vector<8x16xf32>
    %cst_79 = arith.constant 1.000000e+00 : f32
    %225 = vector.broadcast %cst_79 : f32 to vector<8x16xf32>
    %226 = arith.addf %225, %224 : vector<8x16xf32>
    %227 = arith.divf %225, %226 : vector<8x16xf32>
    %228 = vector.extract_strided_slice %215 {offsets = [0, 16], sizes = [8, 16], strides = [1, 1]} : vector<8x48xf32> to vector<8x16xf32>
    %229 = vector.extract_strided_slice %212 {offsets = [0, 16], sizes = [8, 16], strides = [1, 1]} : vector<8x96xf32> to vector<8x16xf32>
    %230 = arith.addf %228, %229 : vector<8x16xf32>
    %231 = arith.negf %230 : vector<8x16xf32>
    %232 = math.exp %231 : vector<8x16xf32>
    %cst_80 = arith.constant 1.000000e+00 : f32
    %233 = vector.broadcast %cst_80 : f32 to vector<8x16xf32>
    %234 = arith.addf %233, %232 : vector<8x16xf32>
    %235 = arith.divf %233, %234 : vector<8x16xf32>
    %236 = vector.extract_strided_slice %215 {offsets = [0, 32], sizes = [8, 16], strides = [1, 1]} : vector<8x48xf32> to vector<8x16xf32>
    %237 = vector.extract_strided_slice %212 {offsets = [0, 32], sizes = [8, 16], strides = [1, 1]} : vector<8x96xf32> to vector<8x16xf32>
    %238 = vector.broadcast %29 : vector<1x16xf32> to vector<8x16xf32>
    %239 = arith.addf %237, %238 : vector<8x16xf32>
    %240 = arith.mulf %227, %239 : vector<8x16xf32>
    %241 = arith.addf %236, %240 : vector<8x16xf32>
    %242 = math.tanh %241 : vector<8x16xf32>
    %cst_81 = arith.constant 1.000000e+00 : f32
    %243 = vector.broadcast %cst_81 : f32 to vector<8x16xf32>
    %244 = arith.subf %243, %235 : vector<8x16xf32>
    %245 = arith.mulf %244, %242 : vector<8x16xf32>
    %246 = arith.mulf %235, %204 : vector<8x16xf32>
    %247 = arith.addf %245, %246 : vector<8x16xf32>
    %248 = vector.extract_strided_slice %219 {offsets = [0, 0], sizes = [8, 16], strides = [1, 1]} : vector<8x48xf32> to vector<8x16xf32>
    %249 = vector.extract_strided_slice %212 {offsets = [0, 48], sizes = [8, 16], strides = [1, 1]} : vector<8x96xf32> to vector<8x16xf32>
    %250 = arith.addf %248, %249 : vector<8x16xf32>
    %251 = arith.negf %250 : vector<8x16xf32>
    %252 = math.exp %251 : vector<8x16xf32>
    %cst_82 = arith.constant 1.000000e+00 : f32
    %253 = vector.broadcast %cst_82 : f32 to vector<8x16xf32>
    %254 = arith.addf %253, %252 : vector<8x16xf32>
    %255 = arith.divf %253, %254 : vector<8x16xf32>
    %256 = vector.extract_strided_slice %219 {offsets = [0, 16], sizes = [8, 16], strides = [1, 1]} : vector<8x48xf32> to vector<8x16xf32>
    %257 = vector.extract_strided_slice %212 {offsets = [0, 64], sizes = [8, 16], strides = [1, 1]} : vector<8x96xf32> to vector<8x16xf32>
    %258 = arith.addf %256, %257 : vector<8x16xf32>
    %259 = arith.negf %258 : vector<8x16xf32>
    %260 = math.exp %259 : vector<8x16xf32>
    %cst_83 = arith.constant 1.000000e+00 : f32
    %261 = vector.broadcast %cst_83 : f32 to vector<8x16xf32>
    %262 = arith.addf %261, %260 : vector<8x16xf32>
    %263 = arith.divf %261, %262 : vector<8x16xf32>
    %264 = vector.extract_strided_slice %219 {offsets = [0, 32], sizes = [8, 16], strides = [1, 1]} : vector<8x48xf32> to vector<8x16xf32>
    %265 = vector.extract_strided_slice %212 {offsets = [0, 80], sizes = [8, 16], strides = [1, 1]} : vector<8x96xf32> to vector<8x16xf32>
    %266 = vector.broadcast %30 : vector<1x16xf32> to vector<8x16xf32>
    %267 = arith.addf %265, %266 : vector<8x16xf32>
    %268 = arith.mulf %255, %267 : vector<8x16xf32>
    %269 = arith.addf %264, %268 : vector<8x16xf32>
    %270 = math.tanh %269 : vector<8x16xf32>
    %cst_84 = arith.constant 1.000000e+00 : f32
    %271 = vector.broadcast %cst_84 : f32 to vector<8x16xf32>
    %272 = arith.subf %271, %263 : vector<8x16xf32>
    %273 = arith.mulf %272, %270 : vector<8x16xf32>
    %274 = arith.mulf %263, %210 : vector<8x16xf32>
    %275 = arith.addf %273, %274 : vector<8x16xf32>
    %c8_i32_85 = arith.constant 8 : i32
    %276 = arith.muli %arg0, %c8_i32_85 : i32
    %277 = arith.addi %276, %c2_i32 : i32
    %c0_i32_86 = arith.constant 0 : i32
    %278 = arith.subi %c0_i32_86, %arg0 : i32
    %c8_i32_87 = arith.constant 8 : i32
    %279 = arith.muli %278, %c8_i32_87 : i32
    %c7_i32_88 = arith.constant 7 : i32
    %280 = arith.subi %c7_i32_88, %c2_i32 : i32
    %281 = arith.addi %279, %280 : i32
    %c8_i32_89 = arith.constant 8 : i32
    %282 = arith.cmpi slt, %277, %c8_i32_89 : i32
    %283 = arith.extui %282 : i1 to i32
    %284 = arith.sitofp %283 : i32 to f32
    %c8_i32_90 = arith.constant 8 : i32
    %285 = arith.cmpi slt, %281, %c8_i32_90 : i32
    %286 = arith.extui %285 : i1 to i32
    %287 = arith.sitofp %286 : i32 to f32
    %288 = vector.broadcast %284 : f32 to vector<8x16xf32>
    %289 = arith.mulf %288, %247 : vector<8x16xf32>
    %cst_91 = arith.constant 1.000000e+00 : f32
    %290 = arith.subf %cst_91, %284 : f32
    %291 = vector.broadcast %290 : f32 to vector<8x16xf32>
    %292 = arith.mulf %291, %204 : vector<8x16xf32>
    %293 = arith.addf %289, %292 : vector<8x16xf32>
    %294 = vector.broadcast %287 : f32 to vector<8x16xf32>
    %295 = arith.mulf %294, %275 : vector<8x16xf32>
    %cst_92 = arith.constant 1.000000e+00 : f32
    %296 = arith.subf %cst_92, %287 : f32
    %297 = vector.broadcast %296 : f32 to vector<8x16xf32>
    %298 = arith.mulf %297, %210 : vector<8x16xf32>
    %299 = arith.addf %295, %298 : vector<8x16xf32>
    %c3_i32 = arith.constant 3 : i32
    %300 = tpu.concatenate %293, %299 in 1 : vector<8x16xf32>, vector<8x16xf32> -> vector<8x32xf32>
    %cst_93 = arith.constant dense<0.000000e+00> : vector<8x96xf32>
    %301 = tpu.matmul %300, %27, %cst_93 {dimension_numbers = #tpu.dot_dimension_numbers<[1], [0], [0], [1], [0, 0, 1, 1], [], []>} : vector<8x32xf32>, vector<32x96xf32>, vector<8x96xf32> -> vector<8x96xf32>
    %302 = arith.index_cast %c3_i32 : i32 to index
    %c0_94 = arith.constant 0 : index
    %c0_95 = arith.constant 0 : index
    %303 = vector.load %arg16[%302, %c0_94, %c0_95] : memref<8x8x48xf32, #tpu.memory_space<vmem>>, vector<1x8x48xf32>
    %304 = vector.shape_cast %303 : vector<1x8x48xf32> to vector<8x48xf32>
    %c7_i32_96 = arith.constant 7 : i32
    %305 = arith.subi %c7_i32_96, %c3_i32 : i32
    %306 = arith.index_cast %305 : i32 to index
    %c0_97 = arith.constant 0 : index
    %c0_98 = arith.constant 0 : index
    %307 = vector.load %arg17[%306, %c0_97, %c0_98] : memref<8x8x48xf32, #tpu.memory_space<vmem>>, vector<1x8x48xf32>
    %308 = vector.shape_cast %307 : vector<1x8x48xf32> to vector<8x48xf32>
    %309 = vector.extract_strided_slice %304 {offsets = [0, 0], sizes = [8, 16], strides = [1, 1]} : vector<8x48xf32> to vector<8x16xf32>
    %310 = vector.extract_strided_slice %301 {offsets = [0, 0], sizes = [8, 16], strides = [1, 1]} : vector<8x96xf32> to vector<8x16xf32>
    %311 = arith.addf %309, %310 : vector<8x16xf32>
    %312 = arith.negf %311 : vector<8x16xf32>
    %313 = math.exp %312 : vector<8x16xf32>
    %cst_99 = arith.constant 1.000000e+00 : f32
    %314 = vector.broadcast %cst_99 : f32 to vector<8x16xf32>
    %315 = arith.addf %314, %313 : vector<8x16xf32>
    %316 = arith.divf %314, %315 : vector<8x16xf32>
    %317 = vector.extract_strided_slice %304 {offsets = [0, 16], sizes = [8, 16], strides = [1, 1]} : vector<8x48xf32> to vector<8x16xf32>
    %318 = vector.extract_strided_slice %301 {offsets = [0, 16], sizes = [8, 16], strides = [1, 1]} : vector<8x96xf32> to vector<8x16xf32>
    %319 = arith.addf %317, %318 : vector<8x16xf32>
    %320 = arith.negf %319 : vector<8x16xf32>
    %321 = math.exp %320 : vector<8x16xf32>
    %cst_100 = arith.constant 1.000000e+00 : f32
    %322 = vector.broadcast %cst_100 : f32 to vector<8x16xf32>
    %323 = arith.addf %322, %321 : vector<8x16xf32>
    %324 = arith.divf %322, %323 : vector<8x16xf32>
    %325 = vector.extract_strided_slice %304 {offsets = [0, 32], sizes = [8, 16], strides = [1, 1]} : vector<8x48xf32> to vector<8x16xf32>
    %326 = vector.extract_strided_slice %301 {offsets = [0, 32], sizes = [8, 16], strides = [1, 1]} : vector<8x96xf32> to vector<8x16xf32>
    %327 = vector.broadcast %29 : vector<1x16xf32> to vector<8x16xf32>
    %328 = arith.addf %326, %327 : vector<8x16xf32>
    %329 = arith.mulf %316, %328 : vector<8x16xf32>
    %330 = arith.addf %325, %329 : vector<8x16xf32>
    %331 = math.tanh %330 : vector<8x16xf32>
    %cst_101 = arith.constant 1.000000e+00 : f32
    %332 = vector.broadcast %cst_101 : f32 to vector<8x16xf32>
    %333 = arith.subf %332, %324 : vector<8x16xf32>
    %334 = arith.mulf %333, %331 : vector<8x16xf32>
    %335 = arith.mulf %324, %293 : vector<8x16xf32>
    %336 = arith.addf %334, %335 : vector<8x16xf32>
    %337 = vector.extract_strided_slice %308 {offsets = [0, 0], sizes = [8, 16], strides = [1, 1]} : vector<8x48xf32> to vector<8x16xf32>
    %338 = vector.extract_strided_slice %301 {offsets = [0, 48], sizes = [8, 16], strides = [1, 1]} : vector<8x96xf32> to vector<8x16xf32>
    %339 = arith.addf %337, %338 : vector<8x16xf32>
    %340 = arith.negf %339 : vector<8x16xf32>
    %341 = math.exp %340 : vector<8x16xf32>
    %cst_102 = arith.constant 1.000000e+00 : f32
    %342 = vector.broadcast %cst_102 : f32 to vector<8x16xf32>
    %343 = arith.addf %342, %341 : vector<8x16xf32>
    %344 = arith.divf %342, %343 : vector<8x16xf32>
    %345 = vector.extract_strided_slice %308 {offsets = [0, 16], sizes = [8, 16], strides = [1, 1]} : vector<8x48xf32> to vector<8x16xf32>
    %346 = vector.extract_strided_slice %301 {offsets = [0, 64], sizes = [8, 16], strides = [1, 1]} : vector<8x96xf32> to vector<8x16xf32>
    %347 = arith.addf %345, %346 : vector<8x16xf32>
    %348 = arith.negf %347 : vector<8x16xf32>
    %349 = math.exp %348 : vector<8x16xf32>
    %cst_103 = arith.constant 1.000000e+00 : f32
    %350 = vector.broadcast %cst_103 : f32 to vector<8x16xf32>
    %351 = arith.addf %350, %349 : vector<8x16xf32>
    %352 = arith.divf %350, %351 : vector<8x16xf32>
    %353 = vector.extract_strided_slice %308 {offsets = [0, 32], sizes = [8, 16], strides = [1, 1]} : vector<8x48xf32> to vector<8x16xf32>
    %354 = vector.extract_strided_slice %301 {offsets = [0, 80], sizes = [8, 16], strides = [1, 1]} : vector<8x96xf32> to vector<8x16xf32>
    %355 = vector.broadcast %30 : vector<1x16xf32> to vector<8x16xf32>
    %356 = arith.addf %354, %355 : vector<8x16xf32>
    %357 = arith.mulf %344, %356 : vector<8x16xf32>
    %358 = arith.addf %353, %357 : vector<8x16xf32>
    %359 = math.tanh %358 : vector<8x16xf32>
    %cst_104 = arith.constant 1.000000e+00 : f32
    %360 = vector.broadcast %cst_104 : f32 to vector<8x16xf32>
    %361 = arith.subf %360, %352 : vector<8x16xf32>
    %362 = arith.mulf %361, %359 : vector<8x16xf32>
    %363 = arith.mulf %352, %299 : vector<8x16xf32>
    %364 = arith.addf %362, %363 : vector<8x16xf32>
    %c8_i32_105 = arith.constant 8 : i32
    %365 = arith.muli %arg0, %c8_i32_105 : i32
    %366 = arith.addi %365, %c3_i32 : i32
    %c0_i32_106 = arith.constant 0 : i32
    %367 = arith.subi %c0_i32_106, %arg0 : i32
    %c8_i32_107 = arith.constant 8 : i32
    %368 = arith.muli %367, %c8_i32_107 : i32
    %c7_i32_108 = arith.constant 7 : i32
    %369 = arith.subi %c7_i32_108, %c3_i32 : i32
    %370 = arith.addi %368, %369 : i32
    %c8_i32_109 = arith.constant 8 : i32
    %371 = arith.cmpi slt, %366, %c8_i32_109 : i32
    %372 = arith.extui %371 : i1 to i32
    %373 = arith.sitofp %372 : i32 to f32
    %c8_i32_110 = arith.constant 8 : i32
    %374 = arith.cmpi slt, %370, %c8_i32_110 : i32
    %375 = arith.extui %374 : i1 to i32
    %376 = arith.sitofp %375 : i32 to f32
    %377 = vector.broadcast %373 : f32 to vector<8x16xf32>
    %378 = arith.mulf %377, %336 : vector<8x16xf32>
    %cst_111 = arith.constant 1.000000e+00 : f32
    %379 = arith.subf %cst_111, %373 : f32
    %380 = vector.broadcast %379 : f32 to vector<8x16xf32>
    %381 = arith.mulf %380, %293 : vector<8x16xf32>
    %382 = arith.addf %378, %381 : vector<8x16xf32>
    %383 = vector.broadcast %376 : f32 to vector<8x16xf32>
    %384 = arith.mulf %383, %364 : vector<8x16xf32>
    %cst_112 = arith.constant 1.000000e+00 : f32
    %385 = arith.subf %cst_112, %376 : f32
    %386 = vector.broadcast %385 : f32 to vector<8x16xf32>
    %387 = arith.mulf %386, %299 : vector<8x16xf32>
    %388 = arith.addf %384, %387 : vector<8x16xf32>
    %c4_i32 = arith.constant 4 : i32
    %389 = tpu.concatenate %382, %388 in 1 : vector<8x16xf32>, vector<8x16xf32> -> vector<8x32xf32>
    %cst_113 = arith.constant dense<0.000000e+00> : vector<8x96xf32>
    %390 = tpu.matmul %389, %27, %cst_113 {dimension_numbers = #tpu.dot_dimension_numbers<[1], [0], [0], [1], [0, 0, 1, 1], [], []>} : vector<8x32xf32>, vector<32x96xf32>, vector<8x96xf32> -> vector<8x96xf32>
    %391 = arith.index_cast %c4_i32 : i32 to index
    %c0_114 = arith.constant 0 : index
    %c0_115 = arith.constant 0 : index
    %392 = vector.load %arg16[%391, %c0_114, %c0_115] : memref<8x8x48xf32, #tpu.memory_space<vmem>>, vector<1x8x48xf32>
    %393 = vector.shape_cast %392 : vector<1x8x48xf32> to vector<8x48xf32>
    %c7_i32_116 = arith.constant 7 : i32
    %394 = arith.subi %c7_i32_116, %c4_i32 : i32
    %395 = arith.index_cast %394 : i32 to index
    %c0_117 = arith.constant 0 : index
    %c0_118 = arith.constant 0 : index
    %396 = vector.load %arg17[%395, %c0_117, %c0_118] : memref<8x8x48xf32, #tpu.memory_space<vmem>>, vector<1x8x48xf32>
    %397 = vector.shape_cast %396 : vector<1x8x48xf32> to vector<8x48xf32>
    %398 = vector.extract_strided_slice %393 {offsets = [0, 0], sizes = [8, 16], strides = [1, 1]} : vector<8x48xf32> to vector<8x16xf32>
    %399 = vector.extract_strided_slice %390 {offsets = [0, 0], sizes = [8, 16], strides = [1, 1]} : vector<8x96xf32> to vector<8x16xf32>
    %400 = arith.addf %398, %399 : vector<8x16xf32>
    %401 = arith.negf %400 : vector<8x16xf32>
    %402 = math.exp %401 : vector<8x16xf32>
    %cst_119 = arith.constant 1.000000e+00 : f32
    %403 = vector.broadcast %cst_119 : f32 to vector<8x16xf32>
    %404 = arith.addf %403, %402 : vector<8x16xf32>
    %405 = arith.divf %403, %404 : vector<8x16xf32>
    %406 = vector.extract_strided_slice %393 {offsets = [0, 16], sizes = [8, 16], strides = [1, 1]} : vector<8x48xf32> to vector<8x16xf32>
    %407 = vector.extract_strided_slice %390 {offsets = [0, 16], sizes = [8, 16], strides = [1, 1]} : vector<8x96xf32> to vector<8x16xf32>
    %408 = arith.addf %406, %407 : vector<8x16xf32>
    %409 = arith.negf %408 : vector<8x16xf32>
    %410 = math.exp %409 : vector<8x16xf32>
    %cst_120 = arith.constant 1.000000e+00 : f32
    %411 = vector.broadcast %cst_120 : f32 to vector<8x16xf32>
    %412 = arith.addf %411, %410 : vector<8x16xf32>
    %413 = arith.divf %411, %412 : vector<8x16xf32>
    %414 = vector.extract_strided_slice %393 {offsets = [0, 32], sizes = [8, 16], strides = [1, 1]} : vector<8x48xf32> to vector<8x16xf32>
    %415 = vector.extract_strided_slice %390 {offsets = [0, 32], sizes = [8, 16], strides = [1, 1]} : vector<8x96xf32> to vector<8x16xf32>
    %416 = vector.broadcast %29 : vector<1x16xf32> to vector<8x16xf32>
    %417 = arith.addf %415, %416 : vector<8x16xf32>
    %418 = arith.mulf %405, %417 : vector<8x16xf32>
    %419 = arith.addf %414, %418 : vector<8x16xf32>
    %420 = math.tanh %419 : vector<8x16xf32>
    %cst_121 = arith.constant 1.000000e+00 : f32
    %421 = vector.broadcast %cst_121 : f32 to vector<8x16xf32>
    %422 = arith.subf %421, %413 : vector<8x16xf32>
    %423 = arith.mulf %422, %420 : vector<8x16xf32>
    %424 = arith.mulf %413, %382 : vector<8x16xf32>
    %425 = arith.addf %423, %424 : vector<8x16xf32>
    %426 = vector.extract_strided_slice %397 {offsets = [0, 0], sizes = [8, 16], strides = [1, 1]} : vector<8x48xf32> to vector<8x16xf32>
    %427 = vector.extract_strided_slice %390 {offsets = [0, 48], sizes = [8, 16], strides = [1, 1]} : vector<8x96xf32> to vector<8x16xf32>
    %428 = arith.addf %426, %427 : vector<8x16xf32>
    %429 = arith.negf %428 : vector<8x16xf32>
    %430 = math.exp %429 : vector<8x16xf32>
    %cst_122 = arith.constant 1.000000e+00 : f32
    %431 = vector.broadcast %cst_122 : f32 to vector<8x16xf32>
    %432 = arith.addf %431, %430 : vector<8x16xf32>
    %433 = arith.divf %431, %432 : vector<8x16xf32>
    %434 = vector.extract_strided_slice %397 {offsets = [0, 16], sizes = [8, 16], strides = [1, 1]} : vector<8x48xf32> to vector<8x16xf32>
    %435 = vector.extract_strided_slice %390 {offsets = [0, 64], sizes = [8, 16], strides = [1, 1]} : vector<8x96xf32> to vector<8x16xf32>
    %436 = arith.addf %434, %435 : vector<8x16xf32>
    %437 = arith.negf %436 : vector<8x16xf32>
    %438 = math.exp %437 : vector<8x16xf32>
    %cst_123 = arith.constant 1.000000e+00 : f32
    %439 = vector.broadcast %cst_123 : f32 to vector<8x16xf32>
    %440 = arith.addf %439, %438 : vector<8x16xf32>
    %441 = arith.divf %439, %440 : vector<8x16xf32>
    %442 = vector.extract_strided_slice %397 {offsets = [0, 32], sizes = [8, 16], strides = [1, 1]} : vector<8x48xf32> to vector<8x16xf32>
    %443 = vector.extract_strided_slice %390 {offsets = [0, 80], sizes = [8, 16], strides = [1, 1]} : vector<8x96xf32> to vector<8x16xf32>
    %444 = vector.broadcast %30 : vector<1x16xf32> to vector<8x16xf32>
    %445 = arith.addf %443, %444 : vector<8x16xf32>
    %446 = arith.mulf %433, %445 : vector<8x16xf32>
    %447 = arith.addf %442, %446 : vector<8x16xf32>
    %448 = math.tanh %447 : vector<8x16xf32>
    %cst_124 = arith.constant 1.000000e+00 : f32
    %449 = vector.broadcast %cst_124 : f32 to vector<8x16xf32>
    %450 = arith.subf %449, %441 : vector<8x16xf32>
    %451 = arith.mulf %450, %448 : vector<8x16xf32>
    %452 = arith.mulf %441, %388 : vector<8x16xf32>
    %453 = arith.addf %451, %452 : vector<8x16xf32>
    %c8_i32_125 = arith.constant 8 : i32
    %454 = arith.muli %arg0, %c8_i32_125 : i32
    %455 = arith.addi %454, %c4_i32 : i32
    %c0_i32_126 = arith.constant 0 : i32
    %456 = arith.subi %c0_i32_126, %arg0 : i32
    %c8_i32_127 = arith.constant 8 : i32
    %457 = arith.muli %456, %c8_i32_127 : i32
    %c7_i32_128 = arith.constant 7 : i32
    %458 = arith.subi %c7_i32_128, %c4_i32 : i32
    %459 = arith.addi %457, %458 : i32
    %c8_i32_129 = arith.constant 8 : i32
    %460 = arith.cmpi slt, %455, %c8_i32_129 : i32
    %461 = arith.extui %460 : i1 to i32
    %462 = arith.sitofp %461 : i32 to f32
    %c8_i32_130 = arith.constant 8 : i32
    %463 = arith.cmpi slt, %459, %c8_i32_130 : i32
    %464 = arith.extui %463 : i1 to i32
    %465 = arith.sitofp %464 : i32 to f32
    %466 = vector.broadcast %462 : f32 to vector<8x16xf32>
    %467 = arith.mulf %466, %425 : vector<8x16xf32>
    %cst_131 = arith.constant 1.000000e+00 : f32
    %468 = arith.subf %cst_131, %462 : f32
    %469 = vector.broadcast %468 : f32 to vector<8x16xf32>
    %470 = arith.mulf %469, %382 : vector<8x16xf32>
    %471 = arith.addf %467, %470 : vector<8x16xf32>
    %472 = vector.broadcast %465 : f32 to vector<8x16xf32>
    %473 = arith.mulf %472, %453 : vector<8x16xf32>
    %cst_132 = arith.constant 1.000000e+00 : f32
    %474 = arith.subf %cst_132, %465 : f32
    %475 = vector.broadcast %474 : f32 to vector<8x16xf32>
    %476 = arith.mulf %475, %388 : vector<8x16xf32>
    %477 = arith.addf %473, %476 : vector<8x16xf32>
    %c5_i32 = arith.constant 5 : i32
    %478 = tpu.concatenate %471, %477 in 1 : vector<8x16xf32>, vector<8x16xf32> -> vector<8x32xf32>
    %cst_133 = arith.constant dense<0.000000e+00> : vector<8x96xf32>
    %479 = tpu.matmul %478, %27, %cst_133 {dimension_numbers = #tpu.dot_dimension_numbers<[1], [0], [0], [1], [0, 0, 1, 1], [], []>} : vector<8x32xf32>, vector<32x96xf32>, vector<8x96xf32> -> vector<8x96xf32>
    %480 = arith.index_cast %c5_i32 : i32 to index
    %c0_134 = arith.constant 0 : index
    %c0_135 = arith.constant 0 : index
    %481 = vector.load %arg16[%480, %c0_134, %c0_135] : memref<8x8x48xf32, #tpu.memory_space<vmem>>, vector<1x8x48xf32>
    %482 = vector.shape_cast %481 : vector<1x8x48xf32> to vector<8x48xf32>
    %c7_i32_136 = arith.constant 7 : i32
    %483 = arith.subi %c7_i32_136, %c5_i32 : i32
    %484 = arith.index_cast %483 : i32 to index
    %c0_137 = arith.constant 0 : index
    %c0_138 = arith.constant 0 : index
    %485 = vector.load %arg17[%484, %c0_137, %c0_138] : memref<8x8x48xf32, #tpu.memory_space<vmem>>, vector<1x8x48xf32>
    %486 = vector.shape_cast %485 : vector<1x8x48xf32> to vector<8x48xf32>
    %487 = vector.extract_strided_slice %482 {offsets = [0, 0], sizes = [8, 16], strides = [1, 1]} : vector<8x48xf32> to vector<8x16xf32>
    %488 = vector.extract_strided_slice %479 {offsets = [0, 0], sizes = [8, 16], strides = [1, 1]} : vector<8x96xf32> to vector<8x16xf32>
    %489 = arith.addf %487, %488 : vector<8x16xf32>
    %490 = arith.negf %489 : vector<8x16xf32>
    %491 = math.exp %490 : vector<8x16xf32>
    %cst_139 = arith.constant 1.000000e+00 : f32
    %492 = vector.broadcast %cst_139 : f32 to vector<8x16xf32>
    %493 = arith.addf %492, %491 : vector<8x16xf32>
    %494 = arith.divf %492, %493 : vector<8x16xf32>
    %495 = vector.extract_strided_slice %482 {offsets = [0, 16], sizes = [8, 16], strides = [1, 1]} : vector<8x48xf32> to vector<8x16xf32>
    %496 = vector.extract_strided_slice %479 {offsets = [0, 16], sizes = [8, 16], strides = [1, 1]} : vector<8x96xf32> to vector<8x16xf32>
    %497 = arith.addf %495, %496 : vector<8x16xf32>
    %498 = arith.negf %497 : vector<8x16xf32>
    %499 = math.exp %498 : vector<8x16xf32>
    %cst_140 = arith.constant 1.000000e+00 : f32
    %500 = vector.broadcast %cst_140 : f32 to vector<8x16xf32>
    %501 = arith.addf %500, %499 : vector<8x16xf32>
    %502 = arith.divf %500, %501 : vector<8x16xf32>
    %503 = vector.extract_strided_slice %482 {offsets = [0, 32], sizes = [8, 16], strides = [1, 1]} : vector<8x48xf32> to vector<8x16xf32>
    %504 = vector.extract_strided_slice %479 {offsets = [0, 32], sizes = [8, 16], strides = [1, 1]} : vector<8x96xf32> to vector<8x16xf32>
    %505 = vector.broadcast %29 : vector<1x16xf32> to vector<8x16xf32>
    %506 = arith.addf %504, %505 : vector<8x16xf32>
    %507 = arith.mulf %494, %506 : vector<8x16xf32>
    %508 = arith.addf %503, %507 : vector<8x16xf32>
    %509 = math.tanh %508 : vector<8x16xf32>
    %cst_141 = arith.constant 1.000000e+00 : f32
    %510 = vector.broadcast %cst_141 : f32 to vector<8x16xf32>
    %511 = arith.subf %510, %502 : vector<8x16xf32>
    %512 = arith.mulf %511, %509 : vector<8x16xf32>
    %513 = arith.mulf %502, %471 : vector<8x16xf32>
    %514 = arith.addf %512, %513 : vector<8x16xf32>
    %515 = vector.extract_strided_slice %486 {offsets = [0, 0], sizes = [8, 16], strides = [1, 1]} : vector<8x48xf32> to vector<8x16xf32>
    %516 = vector.extract_strided_slice %479 {offsets = [0, 48], sizes = [8, 16], strides = [1, 1]} : vector<8x96xf32> to vector<8x16xf32>
    %517 = arith.addf %515, %516 : vector<8x16xf32>
    %518 = arith.negf %517 : vector<8x16xf32>
    %519 = math.exp %518 : vector<8x16xf32>
    %cst_142 = arith.constant 1.000000e+00 : f32
    %520 = vector.broadcast %cst_142 : f32 to vector<8x16xf32>
    %521 = arith.addf %520, %519 : vector<8x16xf32>
    %522 = arith.divf %520, %521 : vector<8x16xf32>
    %523 = vector.extract_strided_slice %486 {offsets = [0, 16], sizes = [8, 16], strides = [1, 1]} : vector<8x48xf32> to vector<8x16xf32>
    %524 = vector.extract_strided_slice %479 {offsets = [0, 64], sizes = [8, 16], strides = [1, 1]} : vector<8x96xf32> to vector<8x16xf32>
    %525 = arith.addf %523, %524 : vector<8x16xf32>
    %526 = arith.negf %525 : vector<8x16xf32>
    %527 = math.exp %526 : vector<8x16xf32>
    %cst_143 = arith.constant 1.000000e+00 : f32
    %528 = vector.broadcast %cst_143 : f32 to vector<8x16xf32>
    %529 = arith.addf %528, %527 : vector<8x16xf32>
    %530 = arith.divf %528, %529 : vector<8x16xf32>
    %531 = vector.extract_strided_slice %486 {offsets = [0, 32], sizes = [8, 16], strides = [1, 1]} : vector<8x48xf32> to vector<8x16xf32>
    %532 = vector.extract_strided_slice %479 {offsets = [0, 80], sizes = [8, 16], strides = [1, 1]} : vector<8x96xf32> to vector<8x16xf32>
    %533 = vector.broadcast %30 : vector<1x16xf32> to vector<8x16xf32>
    %534 = arith.addf %532, %533 : vector<8x16xf32>
    %535 = arith.mulf %522, %534 : vector<8x16xf32>
    %536 = arith.addf %531, %535 : vector<8x16xf32>
    %537 = math.tanh %536 : vector<8x16xf32>
    %cst_144 = arith.constant 1.000000e+00 : f32
    %538 = vector.broadcast %cst_144 : f32 to vector<8x16xf32>
    %539 = arith.subf %538, %530 : vector<8x16xf32>
    %540 = arith.mulf %539, %537 : vector<8x16xf32>
    %541 = arith.mulf %530, %477 : vector<8x16xf32>
    %542 = arith.addf %540, %541 : vector<8x16xf32>
    %c8_i32_145 = arith.constant 8 : i32
    %543 = arith.muli %arg0, %c8_i32_145 : i32
    %544 = arith.addi %543, %c5_i32 : i32
    %c0_i32_146 = arith.constant 0 : i32
    %545 = arith.subi %c0_i32_146, %arg0 : i32
    %c8_i32_147 = arith.constant 8 : i32
    %546 = arith.muli %545, %c8_i32_147 : i32
    %c7_i32_148 = arith.constant 7 : i32
    %547 = arith.subi %c7_i32_148, %c5_i32 : i32
    %548 = arith.addi %546, %547 : i32
    %c8_i32_149 = arith.constant 8 : i32
    %549 = arith.cmpi slt, %544, %c8_i32_149 : i32
    %550 = arith.extui %549 : i1 to i32
    %551 = arith.sitofp %550 : i32 to f32
    %c8_i32_150 = arith.constant 8 : i32
    %552 = arith.cmpi slt, %548, %c8_i32_150 : i32
    %553 = arith.extui %552 : i1 to i32
    %554 = arith.sitofp %553 : i32 to f32
    %555 = vector.broadcast %551 : f32 to vector<8x16xf32>
    %556 = arith.mulf %555, %514 : vector<8x16xf32>
    %cst_151 = arith.constant 1.000000e+00 : f32
    %557 = arith.subf %cst_151, %551 : f32
    %558 = vector.broadcast %557 : f32 to vector<8x16xf32>
    %559 = arith.mulf %558, %471 : vector<8x16xf32>
    %560 = arith.addf %556, %559 : vector<8x16xf32>
    %561 = vector.broadcast %554 : f32 to vector<8x16xf32>
    %562 = arith.mulf %561, %542 : vector<8x16xf32>
    %cst_152 = arith.constant 1.000000e+00 : f32
    %563 = arith.subf %cst_152, %554 : f32
    %564 = vector.broadcast %563 : f32 to vector<8x16xf32>
    %565 = arith.mulf %564, %477 : vector<8x16xf32>
    %566 = arith.addf %562, %565 : vector<8x16xf32>
    %c6_i32 = arith.constant 6 : i32
    %567 = tpu.concatenate %560, %566 in 1 : vector<8x16xf32>, vector<8x16xf32> -> vector<8x32xf32>
    %cst_153 = arith.constant dense<0.000000e+00> : vector<8x96xf32>
    %568 = tpu.matmul %567, %27, %cst_153 {dimension_numbers = #tpu.dot_dimension_numbers<[1], [0], [0], [1], [0, 0, 1, 1], [], []>} : vector<8x32xf32>, vector<32x96xf32>, vector<8x96xf32> -> vector<8x96xf32>
    %569 = arith.index_cast %c6_i32 : i32 to index
    %c0_154 = arith.constant 0 : index
    %c0_155 = arith.constant 0 : index
    %570 = vector.load %arg16[%569, %c0_154, %c0_155] : memref<8x8x48xf32, #tpu.memory_space<vmem>>, vector<1x8x48xf32>
    %571 = vector.shape_cast %570 : vector<1x8x48xf32> to vector<8x48xf32>
    %c7_i32_156 = arith.constant 7 : i32
    %572 = arith.subi %c7_i32_156, %c6_i32 : i32
    %573 = arith.index_cast %572 : i32 to index
    %c0_157 = arith.constant 0 : index
    %c0_158 = arith.constant 0 : index
    %574 = vector.load %arg17[%573, %c0_157, %c0_158] : memref<8x8x48xf32, #tpu.memory_space<vmem>>, vector<1x8x48xf32>
    %575 = vector.shape_cast %574 : vector<1x8x48xf32> to vector<8x48xf32>
    %576 = vector.extract_strided_slice %571 {offsets = [0, 0], sizes = [8, 16], strides = [1, 1]} : vector<8x48xf32> to vector<8x16xf32>
    %577 = vector.extract_strided_slice %568 {offsets = [0, 0], sizes = [8, 16], strides = [1, 1]} : vector<8x96xf32> to vector<8x16xf32>
    %578 = arith.addf %576, %577 : vector<8x16xf32>
    %579 = arith.negf %578 : vector<8x16xf32>
    %580 = math.exp %579 : vector<8x16xf32>
    %cst_159 = arith.constant 1.000000e+00 : f32
    %581 = vector.broadcast %cst_159 : f32 to vector<8x16xf32>
    %582 = arith.addf %581, %580 : vector<8x16xf32>
    %583 = arith.divf %581, %582 : vector<8x16xf32>
    %584 = vector.extract_strided_slice %571 {offsets = [0, 16], sizes = [8, 16], strides = [1, 1]} : vector<8x48xf32> to vector<8x16xf32>
    %585 = vector.extract_strided_slice %568 {offsets = [0, 16], sizes = [8, 16], strides = [1, 1]} : vector<8x96xf32> to vector<8x16xf32>
    %586 = arith.addf %584, %585 : vector<8x16xf32>
    %587 = arith.negf %586 : vector<8x16xf32>
    %588 = math.exp %587 : vector<8x16xf32>
    %cst_160 = arith.constant 1.000000e+00 : f32
    %589 = vector.broadcast %cst_160 : f32 to vector<8x16xf32>
    %590 = arith.addf %589, %588 : vector<8x16xf32>
    %591 = arith.divf %589, %590 : vector<8x16xf32>
    %592 = vector.extract_strided_slice %571 {offsets = [0, 32], sizes = [8, 16], strides = [1, 1]} : vector<8x48xf32> to vector<8x16xf32>
    %593 = vector.extract_strided_slice %568 {offsets = [0, 32], sizes = [8, 16], strides = [1, 1]} : vector<8x96xf32> to vector<8x16xf32>
    %594 = vector.broadcast %29 : vector<1x16xf32> to vector<8x16xf32>
    %595 = arith.addf %593, %594 : vector<8x16xf32>
    %596 = arith.mulf %583, %595 : vector<8x16xf32>
    %597 = arith.addf %592, %596 : vector<8x16xf32>
    %598 = math.tanh %597 : vector<8x16xf32>
    %cst_161 = arith.constant 1.000000e+00 : f32
    %599 = vector.broadcast %cst_161 : f32 to vector<8x16xf32>
    %600 = arith.subf %599, %591 : vector<8x16xf32>
    %601 = arith.mulf %600, %598 : vector<8x16xf32>
    %602 = arith.mulf %591, %560 : vector<8x16xf32>
    %603 = arith.addf %601, %602 : vector<8x16xf32>
    %604 = vector.extract_strided_slice %575 {offsets = [0, 0], sizes = [8, 16], strides = [1, 1]} : vector<8x48xf32> to vector<8x16xf32>
    %605 = vector.extract_strided_slice %568 {offsets = [0, 48], sizes = [8, 16], strides = [1, 1]} : vector<8x96xf32> to vector<8x16xf32>
    %606 = arith.addf %604, %605 : vector<8x16xf32>
    %607 = arith.negf %606 : vector<8x16xf32>
    %608 = math.exp %607 : vector<8x16xf32>
    %cst_162 = arith.constant 1.000000e+00 : f32
    %609 = vector.broadcast %cst_162 : f32 to vector<8x16xf32>
    %610 = arith.addf %609, %608 : vector<8x16xf32>
    %611 = arith.divf %609, %610 : vector<8x16xf32>
    %612 = vector.extract_strided_slice %575 {offsets = [0, 16], sizes = [8, 16], strides = [1, 1]} : vector<8x48xf32> to vector<8x16xf32>
    %613 = vector.extract_strided_slice %568 {offsets = [0, 64], sizes = [8, 16], strides = [1, 1]} : vector<8x96xf32> to vector<8x16xf32>
    %614 = arith.addf %612, %613 : vector<8x16xf32>
    %615 = arith.negf %614 : vector<8x16xf32>
    %616 = math.exp %615 : vector<8x16xf32>
    %cst_163 = arith.constant 1.000000e+00 : f32
    %617 = vector.broadcast %cst_163 : f32 to vector<8x16xf32>
    %618 = arith.addf %617, %616 : vector<8x16xf32>
    %619 = arith.divf %617, %618 : vector<8x16xf32>
    %620 = vector.extract_strided_slice %575 {offsets = [0, 32], sizes = [8, 16], strides = [1, 1]} : vector<8x48xf32> to vector<8x16xf32>
    %621 = vector.extract_strided_slice %568 {offsets = [0, 80], sizes = [8, 16], strides = [1, 1]} : vector<8x96xf32> to vector<8x16xf32>
    %622 = vector.broadcast %30 : vector<1x16xf32> to vector<8x16xf32>
    %623 = arith.addf %621, %622 : vector<8x16xf32>
    %624 = arith.mulf %611, %623 : vector<8x16xf32>
    %625 = arith.addf %620, %624 : vector<8x16xf32>
    %626 = math.tanh %625 : vector<8x16xf32>
    %cst_164 = arith.constant 1.000000e+00 : f32
    %627 = vector.broadcast %cst_164 : f32 to vector<8x16xf32>
    %628 = arith.subf %627, %619 : vector<8x16xf32>
    %629 = arith.mulf %628, %626 : vector<8x16xf32>
    %630 = arith.mulf %619, %566 : vector<8x16xf32>
    %631 = arith.addf %629, %630 : vector<8x16xf32>
    %c8_i32_165 = arith.constant 8 : i32
    %632 = arith.muli %arg0, %c8_i32_165 : i32
    %633 = arith.addi %632, %c6_i32 : i32
    %c0_i32_166 = arith.constant 0 : i32
    %634 = arith.subi %c0_i32_166, %arg0 : i32
    %c8_i32_167 = arith.constant 8 : i32
    %635 = arith.muli %634, %c8_i32_167 : i32
    %c7_i32_168 = arith.constant 7 : i32
    %636 = arith.subi %c7_i32_168, %c6_i32 : i32
    %637 = arith.addi %635, %636 : i32
    %c8_i32_169 = arith.constant 8 : i32
    %638 = arith.cmpi slt, %633, %c8_i32_169 : i32
    %639 = arith.extui %638 : i1 to i32
    %640 = arith.sitofp %639 : i32 to f32
    %c8_i32_170 = arith.constant 8 : i32
    %641 = arith.cmpi slt, %637, %c8_i32_170 : i32
    %642 = arith.extui %641 : i1 to i32
    %643 = arith.sitofp %642 : i32 to f32
    %644 = vector.broadcast %640 : f32 to vector<8x16xf32>
    %645 = arith.mulf %644, %603 : vector<8x16xf32>
    %cst_171 = arith.constant 1.000000e+00 : f32
    %646 = arith.subf %cst_171, %640 : f32
    %647 = vector.broadcast %646 : f32 to vector<8x16xf32>
    %648 = arith.mulf %647, %560 : vector<8x16xf32>
    %649 = arith.addf %645, %648 : vector<8x16xf32>
    %650 = vector.broadcast %643 : f32 to vector<8x16xf32>
    %651 = arith.mulf %650, %631 : vector<8x16xf32>
    %cst_172 = arith.constant 1.000000e+00 : f32
    %652 = arith.subf %cst_172, %643 : f32
    %653 = vector.broadcast %652 : f32 to vector<8x16xf32>
    %654 = arith.mulf %653, %566 : vector<8x16xf32>
    %655 = arith.addf %651, %654 : vector<8x16xf32>
    %c7_i32_173 = arith.constant 7 : i32
    %656 = tpu.concatenate %649, %655 in 1 : vector<8x16xf32>, vector<8x16xf32> -> vector<8x32xf32>
    %cst_174 = arith.constant dense<0.000000e+00> : vector<8x96xf32>
    %657 = tpu.matmul %656, %27, %cst_174 {dimension_numbers = #tpu.dot_dimension_numbers<[1], [0], [0], [1], [0, 0, 1, 1], [], []>} : vector<8x32xf32>, vector<32x96xf32>, vector<8x96xf32> -> vector<8x96xf32>
    %658 = arith.index_cast %c7_i32_173 : i32 to index
    %c0_175 = arith.constant 0 : index
    %c0_176 = arith.constant 0 : index
    %659 = vector.load %arg16[%658, %c0_175, %c0_176] : memref<8x8x48xf32, #tpu.memory_space<vmem>>, vector<1x8x48xf32>
    %660 = vector.shape_cast %659 : vector<1x8x48xf32> to vector<8x48xf32>
    %c7_i32_177 = arith.constant 7 : i32
    %661 = arith.subi %c7_i32_177, %c7_i32_173 : i32
    %662 = arith.index_cast %661 : i32 to index
    %c0_178 = arith.constant 0 : index
    %c0_179 = arith.constant 0 : index
    %663 = vector.load %arg17[%662, %c0_178, %c0_179] : memref<8x8x48xf32, #tpu.memory_space<vmem>>, vector<1x8x48xf32>
    %664 = vector.shape_cast %663 : vector<1x8x48xf32> to vector<8x48xf32>
    %665 = vector.extract_strided_slice %660 {offsets = [0, 0], sizes = [8, 16], strides = [1, 1]} : vector<8x48xf32> to vector<8x16xf32>
    %666 = vector.extract_strided_slice %657 {offsets = [0, 0], sizes = [8, 16], strides = [1, 1]} : vector<8x96xf32> to vector<8x16xf32>
    %667 = arith.addf %665, %666 : vector<8x16xf32>
    %668 = arith.negf %667 : vector<8x16xf32>
    %669 = math.exp %668 : vector<8x16xf32>
    %cst_180 = arith.constant 1.000000e+00 : f32
    %670 = vector.broadcast %cst_180 : f32 to vector<8x16xf32>
    %671 = arith.addf %670, %669 : vector<8x16xf32>
    %672 = arith.divf %670, %671 : vector<8x16xf32>
    %673 = vector.extract_strided_slice %660 {offsets = [0, 16], sizes = [8, 16], strides = [1, 1]} : vector<8x48xf32> to vector<8x16xf32>
    %674 = vector.extract_strided_slice %657 {offsets = [0, 16], sizes = [8, 16], strides = [1, 1]} : vector<8x96xf32> to vector<8x16xf32>
    %675 = arith.addf %673, %674 : vector<8x16xf32>
    %676 = arith.negf %675 : vector<8x16xf32>
    %677 = math.exp %676 : vector<8x16xf32>
    %cst_181 = arith.constant 1.000000e+00 : f32
    %678 = vector.broadcast %cst_181 : f32 to vector<8x16xf32>
    %679 = arith.addf %678, %677 : vector<8x16xf32>
    %680 = arith.divf %678, %679 : vector<8x16xf32>
    %681 = vector.extract_strided_slice %660 {offsets = [0, 32], sizes = [8, 16], strides = [1, 1]} : vector<8x48xf32> to vector<8x16xf32>
    %682 = vector.extract_strided_slice %657 {offsets = [0, 32], sizes = [8, 16], strides = [1, 1]} : vector<8x96xf32> to vector<8x16xf32>
    %683 = vector.broadcast %29 : vector<1x16xf32> to vector<8x16xf32>
    %684 = arith.addf %682, %683 : vector<8x16xf32>
    %685 = arith.mulf %672, %684 : vector<8x16xf32>
    %686 = arith.addf %681, %685 : vector<8x16xf32>
    %687 = math.tanh %686 : vector<8x16xf32>
    %cst_182 = arith.constant 1.000000e+00 : f32
    %688 = vector.broadcast %cst_182 : f32 to vector<8x16xf32>
    %689 = arith.subf %688, %680 : vector<8x16xf32>
    %690 = arith.mulf %689, %687 : vector<8x16xf32>
    %691 = arith.mulf %680, %649 : vector<8x16xf32>
    %692 = arith.addf %690, %691 : vector<8x16xf32>
    %693 = vector.extract_strided_slice %664 {offsets = [0, 0], sizes = [8, 16], strides = [1, 1]} : vector<8x48xf32> to vector<8x16xf32>
    %694 = vector.extract_strided_slice %657 {offsets = [0, 48], sizes = [8, 16], strides = [1, 1]} : vector<8x96xf32> to vector<8x16xf32>
    %695 = arith.addf %693, %694 : vector<8x16xf32>
    %696 = arith.negf %695 : vector<8x16xf32>
    %697 = math.exp %696 : vector<8x16xf32>
    %cst_183 = arith.constant 1.000000e+00 : f32
    %698 = vector.broadcast %cst_183 : f32 to vector<8x16xf32>
    %699 = arith.addf %698, %697 : vector<8x16xf32>
    %700 = arith.divf %698, %699 : vector<8x16xf32>
    %701 = vector.extract_strided_slice %664 {offsets = [0, 16], sizes = [8, 16], strides = [1, 1]} : vector<8x48xf32> to vector<8x16xf32>
    %702 = vector.extract_strided_slice %657 {offsets = [0, 64], sizes = [8, 16], strides = [1, 1]} : vector<8x96xf32> to vector<8x16xf32>
    %703 = arith.addf %701, %702 : vector<8x16xf32>
    %704 = arith.negf %703 : vector<8x16xf32>
    %705 = math.exp %704 : vector<8x16xf32>
    %cst_184 = arith.constant 1.000000e+00 : f32
    %706 = vector.broadcast %cst_184 : f32 to vector<8x16xf32>
    %707 = arith.addf %706, %705 : vector<8x16xf32>
    %708 = arith.divf %706, %707 : vector<8x16xf32>
    %709 = vector.extract_strided_slice %664 {offsets = [0, 32], sizes = [8, 16], strides = [1, 1]} : vector<8x48xf32> to vector<8x16xf32>
    %710 = vector.extract_strided_slice %657 {offsets = [0, 80], sizes = [8, 16], strides = [1, 1]} : vector<8x96xf32> to vector<8x16xf32>
    %711 = vector.broadcast %30 : vector<1x16xf32> to vector<8x16xf32>
    %712 = arith.addf %710, %711 : vector<8x16xf32>
    %713 = arith.mulf %700, %712 : vector<8x16xf32>
    %714 = arith.addf %709, %713 : vector<8x16xf32>
    %715 = math.tanh %714 : vector<8x16xf32>
    %cst_185 = arith.constant 1.000000e+00 : f32
    %716 = vector.broadcast %cst_185 : f32 to vector<8x16xf32>
    %717 = arith.subf %716, %708 : vector<8x16xf32>
    %718 = arith.mulf %717, %715 : vector<8x16xf32>
    %719 = arith.mulf %708, %655 : vector<8x16xf32>
    %720 = arith.addf %718, %719 : vector<8x16xf32>
    %c8_i32_186 = arith.constant 8 : i32
    %721 = arith.muli %arg0, %c8_i32_186 : i32
    %722 = arith.addi %721, %c7_i32_173 : i32
    %c0_i32_187 = arith.constant 0 : i32
    %723 = arith.subi %c0_i32_187, %arg0 : i32
    %c8_i32_188 = arith.constant 8 : i32
    %724 = arith.muli %723, %c8_i32_188 : i32
    %c7_i32_189 = arith.constant 7 : i32
    %725 = arith.subi %c7_i32_189, %c7_i32_173 : i32
    %726 = arith.addi %724, %725 : i32
    %c8_i32_190 = arith.constant 8 : i32
    %727 = arith.cmpi slt, %722, %c8_i32_190 : i32
    %728 = arith.extui %727 : i1 to i32
    %729 = arith.sitofp %728 : i32 to f32
    %c8_i32_191 = arith.constant 8 : i32
    %730 = arith.cmpi slt, %726, %c8_i32_191 : i32
    %731 = arith.extui %730 : i1 to i32
    %732 = arith.sitofp %731 : i32 to f32
    %733 = vector.broadcast %729 : f32 to vector<8x16xf32>
    %734 = arith.mulf %733, %692 : vector<8x16xf32>
    %cst_192 = arith.constant 1.000000e+00 : f32
    %735 = arith.subf %cst_192, %729 : f32
    %736 = vector.broadcast %735 : f32 to vector<8x16xf32>
    %737 = arith.mulf %736, %649 : vector<8x16xf32>
    %738 = arith.addf %734, %737 : vector<8x16xf32>
    %739 = vector.broadcast %732 : f32 to vector<8x16xf32>
    %740 = arith.mulf %739, %720 : vector<8x16xf32>
    %cst_193 = arith.constant 1.000000e+00 : f32
    %741 = arith.subf %cst_193, %732 : f32
    %742 = vector.broadcast %741 : f32 to vector<8x16xf32>
    %743 = arith.mulf %742, %655 : vector<8x16xf32>
    %744 = arith.addf %740, %743 : vector<8x16xf32>
    %c8_i32_194 = arith.constant 8 : i32
    %c0_195 = arith.constant 0 : index
    %c0_196 = arith.constant 0 : index
    %745 = vector.load %arg13[%c0_195, %c0_196] : memref<8x16xf32, #tpu.memory_space<vmem>>, vector<8x16xf32>
    tpu.vector_store %arg13[%c0_195, %c0_196], %738 {strides = array<i32>} : memref<8x16xf32, #tpu.memory_space<vmem>>, vector<8x16xf32>,
    %c0_197 = arith.constant 0 : index
    %c0_198 = arith.constant 0 : index
    %746 = vector.load %arg14[%c0_197, %c0_198] : memref<8x16xf32, #tpu.memory_space<vmem>>, vector<8x16xf32>
    tpu.vector_store %arg14[%c0_197, %c0_198], %744 {strides = array<i32>} : memref<8x16xf32, #tpu.memory_space<vmem>>, vector<8x16xf32>,
    %c0_i32_199 = arith.constant 0 : i32
    %747 = arith.cmpi eq, %arg0, %c0_i32_199 : i32
    %748 = arith.extui %747 : i1 to i32
    %c0_i32_200 = arith.constant 0 : i32
    %749 = arith.cmpi ne, %748, %c0_i32_200 : i32
    scf.if %749 {
      %c0_201 = arith.constant 0 : index
      %c0_202 = arith.constant 0 : index
      %c0_203 = arith.constant 0 : index
      %750 = vector.load %arg11[%c0_201, %c0_202, %c0_203] : memref<2x8x16xf32, #tpu.memory_space<vmem>>, vector<1x8x16xf32>
      %751 = vector.shape_cast %750 : vector<1x8x16xf32> to vector<8x16xf32>
      %752 = vector.shape_cast %738 : vector<8x16xf32> to vector<1x8x16xf32>
      tpu.vector_store %arg11[%c0_201, %c0_202, %c0_203], %752 {strides = array<i32>} : memref<2x8x16xf32, #tpu.memory_space<vmem>>, vector<1x8x16xf32>,
      %c1 = arith.constant 1 : index
      %c0_204 = arith.constant 0 : index
      %c0_205 = arith.constant 0 : index
      %753 = vector.load %arg11[%c1, %c0_204, %c0_205] : memref<2x8x16xf32, #tpu.memory_space<vmem>>, vector<1x8x16xf32>
      %754 = vector.shape_cast %753 : vector<1x8x16xf32> to vector<8x16xf32>
      %755 = vector.shape_cast %744 : vector<8x16xf32> to vector<1x8x16xf32>
      tpu.vector_store %arg11[%c1, %c0_204, %c0_205], %755 {strides = array<i32>} : memref<2x8x16xf32, #tpu.memory_space<vmem>>, vector<1x8x16xf32>,
      %c0_206 = arith.constant 0 : index
      %c0_207 = arith.constant 0 : index
      %756 = vector.load %arg15[%c0_206, %c0_207] : memref<8x32xf32, #tpu.memory_space<vmem>>, vector<8x32xf32>
      %cst_208 = arith.constant 1.250000e-01 : f32
      %757 = vector.broadcast %cst_208 : f32 to vector<8x32xf32>
      %758 = arith.mulf %756, %757 : vector<8x32xf32>
      %c0_209 = arith.constant 0 : index
      %c0_210 = arith.constant 0 : index
      %759 = vector.load %arg9[%c0_209, %c0_210] : memref<32x32xf32, #tpu.memory_space<vmem>>, vector<32x32xf32>
      %cst_211 = arith.constant dense<0.000000e+00> : vector<8x32xf32>
      %760 = tpu.matmul %758, %759, %cst_211 {dimension_numbers = #tpu.dot_dimension_numbers<[1], [0], [0], [1], [0, 0, 1, 1], [], []>} : vector<8x32xf32>, vector<32x32xf32>, vector<8x32xf32> -> vector<8x32xf32>
      %c0_212 = arith.constant 0 : index
      %c0_213 = arith.constant 0 : index
      %761 = vector.load %arg10[%c0_212, %c0_213] : memref<1x32xf32, #tpu.memory_space<vmem>>, vector<1x32xf32>
      %762 = vector.broadcast %761 : vector<1x32xf32> to vector<8x32xf32>
      %763 = arith.addf %760, %762 : vector<8x32xf32>
      %c0_214 = arith.constant 0 : index
      %c0_215 = arith.constant 0 : index
      %764 = vector.load %arg12[%c0_214, %c0_215] : memref<8x32xf32, #tpu.memory_space<vmem>>, vector<8x32xf32>
      tpu.vector_store %arg12[%c0_214, %c0_215], %763 {strides = array<i32>} : memref<8x32xf32, #tpu.memory_space<vmem>>, vector<8x32xf32>,
    } else {
    }
    return
  }
  func.func @transform_0(%arg0: i32) -> (i32, i32, i32) {
    %c0_i32 = arith.constant 0 : i32
    %c0_i32_0 = arith.constant 0 : i32
    %c0_i32_1 = arith.constant 0 : i32
    return %arg0, %c0_i32, %c0_i32_0 : i32, i32, i32
  }
  func.func @transform_1(%arg0: i32) -> (i32, i32, i32) {
    %c0_i32 = arith.constant 0 : i32
    %0 = arith.subi %c0_i32, %arg0 : i32
    %c0_i32_0 = arith.constant 0 : i32
    %c0_i32_1 = arith.constant 0 : i32
    %c0_i32_2 = arith.constant 0 : i32
    return %0, %c0_i32_0, %c0_i32_1 : i32, i32, i32
  }
  func.func @transform_2(%arg0: i32) -> (i32, i32) {
    %c0_i32 = arith.constant 0 : i32
    %c0_i32_0 = arith.constant 0 : i32
    %c0_i32_1 = arith.constant 0 : i32
    return %c0_i32, %c0_i32_0 : i32, i32
  }
  func.func @transform_3(%arg0: i32) -> (i32, i32) {
    %c0_i32 = arith.constant 0 : i32
    %c0_i32_0 = arith.constant 0 : i32
    %c0_i32_1 = arith.constant 0 : i32
    return %c0_i32, %c0_i32_0 : i32, i32
  }
  func.func @transform_4(%arg0: i32) -> (i32, i32) {
    %c0_i32 = arith.constant 0 : i32
    %c0_i32_0 = arith.constant 0 : i32
    %c0_i32_1 = arith.constant 0 : i32
    return %c0_i32, %c0_i32_0 : i32, i32
  }
  func.func @transform_5(%arg0: i32) -> (i32, i32) {
    %c0_i32 = arith.constant 0 : i32
    %c0_i32_0 = arith.constant 0 : i32
    %c0_i32_1 = arith.constant 0 : i32
    return %c0_i32, %c0_i32_0 : i32, i32
  }
  func.func @transform_6(%arg0: i32) -> (i32, i32) {
    %c0_i32 = arith.constant 0 : i32
    %c0_i32_0 = arith.constant 0 : i32
    %c0_i32_1 = arith.constant 0 : i32
    return %c0_i32, %c0_i32_0 : i32, i32
  }
  func.func @transform_7(%arg0: i32) -> (i32, i32) {
    %c0_i32 = arith.constant 0 : i32
    %c0_i32_0 = arith.constant 0 : i32
    %c0_i32_1 = arith.constant 0 : i32
    return %c0_i32, %c0_i32_0 : i32, i32
  }
  func.func @transform_8(%arg0: i32) -> (i32, i32) {
    %c0_i32 = arith.constant 0 : i32
    %c0_i32_0 = arith.constant 0 : i32
    %c0_i32_1 = arith.constant 0 : i32
    return %c0_i32, %c0_i32_0 : i32, i32
  }
  func.func @transform_9(%arg0: i32) -> (i32, i32) {
    %c0_i32 = arith.constant 0 : i32
    %c0_i32_0 = arith.constant 0 : i32
    %c0_i32_1 = arith.constant 0 : i32
    return %c0_i32, %c0_i32_0 : i32, i32
  }
  func.func @transform_10(%arg0: i32) -> (i32, i32, i32) {
    %c0_i32 = arith.constant 0 : i32
    %c0_i32_0 = arith.constant 0 : i32
    %c0_i32_1 = arith.constant 0 : i32
    %c0_i32_2 = arith.constant 0 : i32
    return %c0_i32, %c0_i32_0, %c0_i32_1 : i32, i32, i32
  }
  func.func @transform_11(%arg0: i32) -> (i32, i32) {
    %c0_i32 = arith.constant 0 : i32
    %c0_i32_0 = arith.constant 0 : i32
    %c0_i32_1 = arith.constant 0 : i32
    return %c0_i32, %c0_i32_0 : i32, i32
  }
}

</mosaic_0001>

<llo_original>
// kernel: encoder_forward.1
$region0: #{encoder_forward.1}
  #allocation0 [shape = 'u32[]', space=smem, size = 0x4, offset = 0x4, fixed_abs, tag = 'smem constant byte address 0x4 - core index']
  #allocation1 [shape = 'u32[144,128]{1,0:T(1,128)}', space=vmem, size = 0x12000, scoped, tag = 'internal scratch']
  #allocation2 [shape = 'f32[8,16]{1,0:T(8,128)}', space=vmem, size = 0x1000, scoped, tag = 'scratch operand']
  #allocation3 [shape = 'f32[8,16]{1,0:T(8,128)}', space=vmem, size = 0x1000, scoped, tag = 'scratch operand']
  #allocation4 [shape = 'f32[8,32]{1,0:T(8,128)}', space=vmem, size = 0x1000, scoped, tag = 'scratch operand']
  #allocation5 [shape = 'f32[8,8,48]{2,1,0:T(8,128)}', space=vmem, size = 0x8000, scoped, tag = 'scratch operand']
  #allocation6 [shape = 'f32[8,8,48]{2,1,0:T(8,128)}', space=vmem, size = 0x8000, scoped, tag = 'scratch operand']
  %s0 = inlined_call_operand.vmem [shape: f32[8,8,32], index: 0, kind: input, shape index: {}, may-alias: {0,1}]
  %s1 = inlined_call_operand.vmem [shape: f32[8,8,32], index: 1, kind: input, shape index: {}, may-alias: {0,1}]
  %s2 = inlined_call_operand.vmem [shape: bf16[32,48], index: 2, kind: input, shape index: {}]
  %s3 = inlined_call_operand.vmem [shape: bf16[32,48], index: 3, kind: input, shape index: {}]
  %s4 = inlined_call_operand.vmem [shape: f32[1,48], index: 4, kind: input, shape index: {}]
  %s5 = inlined_call_operand.vmem [shape: f32[1,48], index: 5, kind: input, shape index: {}]
  %s6 = inlined_call_operand.vmem [shape: f32[32,96], index: 6, kind: input, shape index: {}]
  %s7 = inlined_call_operand.vmem [shape: f32[1,32], index: 7, kind: input, shape index: {}]
  %s8 = inlined_call_operand.vmem [shape: f32[32,32], index: 8, kind: input, shape index: {}]
  %s9 = inlined_call_operand.vmem [shape: f32[1,32], index: 9, kind: input, shape index: {}]
  %s10 = inlined_call_operand.vmem [shape: f32[2,8,16], index: 10, kind: output, shape index: {0}]
  %s11 = inlined_call_operand.vmem [shape: f32[8,32], index: 11, kind: output, shape index: {1}]
  %12 = xla_tuple %s10, %s11
  %s13 = sld [smem:[#allocation0]]
  $region66: #{encoder_forward.1} parent=0
    _
  %s15 = ssub.s32 1, %s13
  %s16 = scalar_select 0, %s15, %s13
  // Predicated region
  $region2: #{encoder_forward.1} parent=0 // pred_check
    _
  $region3: #{encoder_forward.1} parent=0 // pred_check_branch
    %18 = sbr.rel (0) target = $region5
  $region4: #{encoder_forward.1} parent=0 // pred_region
    _
  $region5: #{encoder_forward.1} parent=0 // pred_fallthru
    _
  // Predicated region
  $region6: #{encoder_forward.1} parent=0 // pred_check
    _
  $region7: #{encoder_forward.1} parent=0 // pred_check_branch
    %20 = sbr.rel (0) target = $region9
  $region8: #{encoder_forward.1} parent=0 // pred_region
    %s21 = ssub.s32 0, 0
    %s22 = smul.u32 8, %s21
    %p23 = scmp.lt.s32.totalorder %s22, 7
    %s24 = scalar_select %p23, %s22, 7
    %s25 = smul.addr %s24, 8
    %s26 = scalar_lea.vmem %s1, %s25
    %s27 = ssub.s32 0, 0
    %s28 = smul.u32 8, %s27
  $region9: #{encoder_forward.1} parent=0 // pred_fallthru
    _
  // Predicated region
  $region10: #{encoder_forward.1} parent=0 // pred_check
    _
  $region11: #{encoder_forward.1} parent=0 // pred_check_branch
    %30 = sbr.rel (0) target = $region13
  $region12: #{encoder_forward.1} parent=0 // pred_region
    _
  $region13: #{encoder_forward.1} parent=0 // pred_fallthru
    _
  // Predicated region
  $region14: #{encoder_forward.1} parent=0 // pred_check
    _
  $region15: #{encoder_forward.1} parent=0 // pred_check_branch
    %32 = sbr.rel (0) target = $region17
  $region16: #{encoder_forward.1} parent=0 // pred_region
    _
  $region17: #{encoder_forward.1} parent=0 // pred_fallthru
    _
  // Predicated region
  $region18: #{encoder_forward.1} parent=0 // pred_check
    _
  $region19: #{encoder_forward.1} parent=0 // pred_check_branch
    %34 = sbr.rel (0) target = $region21
  $region20: #{encoder_forward.1} parent=0 // pred_region
    _
  $region21: #{encoder_forward.1} parent=0 // pred_fallthru
    _
  // Predicated region
  $region22: #{encoder_forward.1} parent=0 // pred_check
    _
  $region23: #{encoder_forward.1} parent=0 // pred_check_branch
    %36 = sbr.rel (0) target = $region25
  $region24: #{encoder_forward.1} parent=0 // pred_region
    _
  $region25: #{encoder_forward.1} parent=0 // pred_fallthru
    _
  // Predicated region
  $region26: #{encoder_forward.1} parent=0 // pred_check
    _
  $region27: #{encoder_forward.1} parent=0 // pred_check_branch
    %38 = sbr.rel (0) target = $region29
  $region28: #{encoder_forward.1} parent=0 // pred_region
    _
  $region29: #{encoder_forward.1} parent=0 // pred_fallthru
    _
  // Predicated region
  $region30: #{encoder_forward.1} parent=0 // pred_check
    _
  $region31: #{encoder_forward.1} parent=0 // pred_check_branch
    %40 = sbr.rel (0) target = $region33
  $region32: #{encoder_forward.1} parent=0 // pred_region
    _
  $region33: #{encoder_forward.1} parent=0 // pred_fallthru
    _
  // Predicated region
  $region34: #{encoder_forward.1} parent=0 // pred_check
    _
  $region35: #{encoder_forward.1} parent=0 // pred_check_branch
    %42 = sbr.rel (0) target = $region37
  $region36: #{encoder_forward.1} parent=0 // pred_region
    _
  $region37: #{encoder_forward.1} parent=0 // pred_fallthru
    _
  // Predicated region
  $region38: #{encoder_forward.1} parent=0 // pred_check
    _
  $region39: #{encoder_forward.1} parent=0 // pred_check_branch
    %44 = sbr.rel (0) target = $region41
  $region40: #{encoder_forward.1} parent=0 // pred_region
    _
  $region41: #{encoder_forward.1} parent=0 // pred_fallthru
    _
  %s45 = ssub.s32 0, 0
  %s46 = smul.u32 8, %s45
  %p47 = scmp.lt.s32.totalorder %s46, 7
  %s48 = scalar_select %p47, %s46, 7
  %s49 = smul.addr %s48, 8
  %s50 = scalar_lea.vmem %s1, %s49
  %s51 = ssub.s32 0, 0
  %s52 = smul.u32 8, %s51
  %p53 = scmp.lt.s32.totalorder %s52, 7
  %s54 = scalar_select %p53, %s52, 7
  %s55 = smul.addr %s54, 8
  %s56 = scalar_lea.vmem %s1, %s55
  %s57 = ssub.s32 0, 0
  %s58 = smul.u32 8, %s57
  %p60 = scmp.eq.s32.totalorder 0, 0
  // Predicated region
  $region42: #{encoder_forward.1} parent=0 // pred_check
    %p61 = pneg %p60
  $region43: #{encoder_forward.1} parent=0 // pred_check_branch
    %63 = sbr.rel (%p61) target = $region45
  $region44: #{encoder_forward.1} parent=0 // pred_region
    %vm64 = vcmask 130048
    %65 = vst.msk [vmem:[#allocation2] sm:$0xff] %vm64, 0.0
    %66 = vst.msk [vmem:[#allocation3] sm:$0xff] %vm64, 0.0
    %vm67 = vcmask 261120
    %68 = vst.msk [vmem:[#allocation4] sm:$0xff] %vm67, 0.0
  $region45: #{encoder_forward.1} parent=0 // pred_fallthru
    _
  %v69 = vld [vmem:[%s0] sm:$0xff]
  %v70 = vld [vmem:[%s0 + $0x8] sm:$0xff]
  %v71 = vld [vmem:[%s0 + $0x10] sm:$0xff]
  %v72 = vld [vmem:[%s0 + $0x18] sm:$0xff]
  %v73 = vld [vmem:[%s0 + $0x20] sm:$0xff]
  %v74 = vld [vmem:[%s0 + $0x28] sm:$0xff]
  %v75 = vld [vmem:[%s0 + $0x30] sm:$0xff]
  %v76 = vld [vmem:[%s0 + $0x38] sm:$0xff]
  %v77 = vld [vmem:[%s56] sm:$0xff]
  %v78 = vld [vmem:[%s56 + $0x8] sm:$0xff]
  %v79 = vld [vmem:[%s56 + $0x10] sm:$0xff]
  %v80 = vld [vmem:[%s56 + $0x18] sm:$0xff]
  %v81 = vld [vmem:[%s56 + $0x20] sm:$0xff]
  %v82 = vld [vmem:[%s56 + $0x28] sm:$0xff]
  %v83 = vld [vmem:[%s56 + $0x30] sm:$0xff]
  %v84 = vld [vmem:[%s56 + $0x38] sm:$0xff]
  %v85 = vld [vmem:[#allocation4] sm:$0xff]
  %vm86 = vcmask 261120
  %v87 = vsel %vm86, %v69, 0.0
  %v88 = vsel %vm86, %v70, 0.0
  %v89 = vadd.f32 %v87, %v88
  %v90 = vsel %vm86, %v71, 0.0
  %v91 = vadd.f32 %v89, %v90
  %v92 = vsel %vm86, %v72, 0.0
  %v93 = vadd.f32 %v91, %v92
  %v94 = vsel %vm86, %v73, 0.0
  %v95 = vadd.f32 %v93, %v94
  %v96 = vsel %vm86, %v74, 0.0
  %v97 = vadd.f32 %v95, %v96
  %v98 = vsel %vm86, %v75, 0.0
  %v99 = vadd.f32 %v97, %v98
  %v100 = vsel %vm86, %v76, 0.0
  %v101 = vadd.f32 %v99, %v100
  %v102 = vadd.f32 %v85, %v101
  %103 = vst.msk [vmem:[#allocation4] sm:$0xff] %vm86, %v102
  %v104 = vpack.c.bf16 %v70, %v69
  %v105 = vpack.c.bf16 %v72, %v71
  %v106 = vpack.c.bf16 %v74, %v73
  %v107 = vpack.c.bf16 %v76, %v75
  %v108 = vpack.c.bf16 %v78, %v77
  %v109 = vpack.c.bf16 %v80, %v79
  %v110 = vpack.c.bf16 %v82, %v81
  %v111 = vpack.c.bf16 %v84, %v83
  %v112 = vld [vmem:[%s2] sm:$0xf]
  %v113 = vld [vmem:[%s2 + $0x4] sm:$0xf]
  %v114 = vld [vmem:[%s2 + $0x8] sm:$0xf]
  %v115 = vld [vmem:[%s2 + $0xc] sm:$0xf]
  %v116 = vld [vmem:[%s4] sm:$0x1]
  %v118 = vlaneseq
  %v119 = vshrl.u32 %v118, 7
  %v120 = vsub.s32 0, %v119
  %v121 = vrot.slane %v116, %v120
  %v127 = vunpack.c.l.b16 %v112
  %v128 = vunpack.c.l.b16 %v113
  %v129 = vunpack.c.l.b16 %v114
  %v130 = vunpack.c.l.b16 %v115
  %v131 = vpack.c.b16 %v128, %v127
  %v132 = vpack.c.b16 %v130, %v129
  %v136 = vsel %vm86, %v104, 0
  %v139 = vsel %vm86, %v105, 0
  %v142 = vsel %vm86, %v106, 0
  %v145 = vsel %vm86, %v107, 0
  %147 = vmatprep.subr.bf16.mxu0 0
  %148 = vmatpush1.bf16.msra.mxu0 0
  %149 = vmatprep.subr.bf16.mxu0 0
  %150 = vmatpush1.bf16.msra.mxu0 0
  %151 = vmatprep.subr.bf16.mxu0 0
  %152 = vmatpush1.bf16.msra.mxu0 0
  %153 = vmatprep.subr.bf16.mxu0 0
  %154 = vmatpush1.bf16.msra.mxu0 0
  %155 = vmatprep.subr.bf16.mxu0 0
  %156 = vmatpush1.bf16.msra.mxu0 0
  %157 = vmatprep.subr.bf16.mxu0 0
  %158 = vmatpush1.bf16.msra.mxu0 0
  %159 = vmatprep.subr.bf16.mxu0 0
  %160 = vmatpush1.bf16.msra.mxu0 %v132
  %161 = vmatprep.subr.bf16.mxu0 0
  %162 = vmatpush1.bf16.msra.mxu0 %v131
  %163 = vmatprep.subr.bf16.mxu0 0
  %164 = vmatpush2.bf16.msra.mxu0 0
  %165 = vmatprep.subr.bf16.mxu0 0
  %166 = vmatpush2.bf16.msra.mxu0 0
  %167 = vmatprep.subr.bf16.mxu0 0
  %168 = vmatpush2.bf16.msra.mxu0 0
  %169 = vmatprep.subr.bf16.mxu0 0
  %170 = vmatpush2.bf16.msra.mxu0 0
  %171 = vmatprep.subr.bf16.mxu0 0
  %172 = vmatpush2.bf16.msra.mxu0 0
  %173 = vmatprep.subr.bf16.mxu0 0
  %174 = vmatpush2.bf16.msra.mxu0 0
  %175 = vmatprep.subr.bf16.mxu0 0
  %176 = vmatpush2.bf16.msra.mxu0 0
  %177 = vmatprep.subr.bf16.mxu0 0
  %178 = vmatpush2.bf16.msra.mxu0 0
  %179 = vmatprep.mubr.bf16.mxu0 0
  %180 = vmatmul.mubr.bf16.gmra.mxu0 %v136
  %v181 = vpop.f32.mrf.mxu0
  %v182 = vadd.f32 %v121, %v181
  %v183 = vpop.f32.mrf.mxu0
  %v184 = vpop.f32.mrf.mxu0
  %v185 = vadd.f32 %v121, %v184
  %v186 = vpop.f32.mrf.mxu0
  %187 = vmatprep.mubr.bf16.mxu0 0
  %188 = vmatmul.mubr.bf16.gmra.mxu0 %v139
  %v189 = vpop.f32.mrf.mxu0
  %v190 = vadd.f32 %v121, %v189
  %v191 = vpop.f32.mrf.mxu0
  %v192 = vpop.f32.mrf.mxu0
  %v193 = vadd.f32 %v121, %v192
  %v194 = vpop.f32.mrf.mxu0
  %195 = vmatprep.mubr.bf16.mxu0 0
  %196 = vmatmul.mubr.bf16.gmra.mxu0 %v142
  %v197 = vpop.f32.mrf.mxu0
  %v198 = vadd.f32 %v121, %v197
  %v199 = vpop.f32.mrf.mxu0
  %v200 = vpop.f32.mrf.mxu0
  %v201 = vadd.f32 %v121, %v200
  %v202 = vpop.f32.mrf.mxu0
  %203 = vmatprep.mubr.bf16.mxu0 0
  %204 = vmatmul.mubr.bf16.gmra.mxu0 %v145
  %v205 = vpop.f32.mrf.mxu0
  %v206 = vadd.f32 %v121, %v205
  %v207 = vpop.f32.mrf.mxu0
  %v208 = vpop.f32.mrf.mxu0
  %v209 = vadd.f32 %v121, %v208
  %v210 = vpop.f32.mrf.mxu0
  %211 = vdwg.mxu0
  %vm212 = vcmask 392192
  %213 = vst.msk [vmem:[#allocation5] sm:$0xff] %vm212, %v182
  %214 = vst.msk [vmem:[#allocation5 + $0x8] sm:$0xff] %vm212, %v185
  %215 = vst.msk [vmem:[#allocation5 + $0x10] sm:$0xff] %vm212, %v190
  %216 = vst.msk [vmem:[#allocation5 + $0x18] sm:$0xff] %vm212, %v193
  %217 = vst.msk [vmem:[#allocation5 + $0x20] sm:$0xff] %vm212, %v198
  %218 = vst.msk [vmem:[#allocation5 + $0x28] sm:$0xff] %vm212, %v201
  %219 = vst.msk [vmem:[#allocation5 + $0x30] sm:$0xff] %vm212, %v206
  %220 = vst.msk [vmem:[#allocation5 + $0x38] sm:$0xff] %vm212, %v209
  %v221 = vld [vmem:[%s3] sm:$0xf]
  %v222 = vld [vmem:[%s3 + $0x4] sm:$0xf]
  %v223 = vld [vmem:[%s3 + $0x8] sm:$0xf]
  %v224 = vld [vmem:[%s3 + $0xc] sm:$0xf]
  %v225 = vld [vmem:[%s5] sm:$0x1]
  %v227 = vlaneseq
  %v228 = vshrl.u32 %v227, 7
  %v229 = vsub.s32 0, %v228
  %v230 = vrot.slane %v225, %v229
  %v236 = vunpack.c.l.b16 %v221
  %v237 = vunpack.c.l.b16 %v222
  %v238 = vunpack.c.l.b16 %v223
  %v239 = vunpack.c.l.b16 %v224
  %v240 = vpack.c.b16 %v237, %v236
  %v241 = vpack.c.b16 %v239, %v238
  %v245 = vsel %vm86, %v108, 0
  %v248 = vsel %vm86, %v109, 0
  %v251 = vsel %vm86, %v110, 0
  %v254 = vsel %vm86, %v111, 0
  %256 = vmatprep.subr.bf16.mxu0 0
  %257 = vmatpush1.bf16.msra.mxu0 0
  %258 = vmatprep.subr.bf16.mxu0 0
  %259 = vmatpush1.bf16.msra.mxu0 0
  %260 = vmatprep.subr.bf16.mxu0 0
  %261 = vmatpush1.bf16.msra.mxu0 0
  %262 = vmatprep.subr.bf16.mxu0 0
  %263 = vmatpush1.bf16.msra.mxu0 0
  %264 = vmatprep.subr.bf16.mxu0 0
  %265 = vmatpush1.bf16.msra.mxu0 0
  %266 = vmatprep.subr.bf16.mxu0 0
  %267 = vmatpush1.bf16.msra.mxu0 0
  %268 = vmatprep.subr.bf16.mxu0 0
  %269 = vmatpush1.bf16.msra.mxu0 %v241
  %270 = vmatprep.subr.bf16.mxu0 0
  %271 = vmatpush1.bf16.msra.mxu0 %v240
  %272 = vmatprep.subr.bf16.mxu0 0
  %273 = vmatpush2.bf16.msra.mxu0 0
  %274 = vmatprep.subr.bf16.mxu0 0
  %275 = vmatpush2.bf16.msra.mxu0 0
  %276 = vmatprep.subr.bf16.mxu0 0
  %277 = vmatpush2.bf16.msra.mxu0 0
  %278 = vmatprep.subr.bf16.mxu0 0
  %279 = vmatpush2.bf16.msra.mxu0 0
  %280 = vmatprep.subr.bf16.mxu0 0
  %281 = vmatpush2.bf16.msra.mxu0 0
  %282 = vmatprep.subr.bf16.mxu0 0
  %283 = vmatpush2.bf16.msra.mxu0 0
  %284 = vmatprep.subr.bf16.mxu0 0
  %285 = vmatpush2.bf16.msra.mxu0 0
  %286 = vmatprep.subr.bf16.mxu0 0
  %287 = vmatpush2.bf16.msra.mxu0 0
  %288 = vmatprep.mubr.bf16.mxu0 0
  %289 = vmatmul.mubr.bf16.gmra.mxu0 %v245
  %v290 = vpop.f32.mrf.mxu0
  %v291 = vadd.f32 %v230, %v290
  %v292 = vpop.f32.mrf.mxu0
  %v293 = vpop.f32.mrf.mxu0
  %v294 = vadd.f32 %v230, %v293
  %v295 = vpop.f32.mrf.mxu0
  %296 = vmatprep.mubr.bf16.mxu0 0
  %297 = vmatmul.mubr.bf16.gmra.mxu0 %v248
  %v298 = vpop.f32.mrf.mxu0
  %v299 = vadd.f32 %v230, %v298
  %v300 = vpop.f32.mrf.mxu0
  %v301 = vpop.f32.mrf.mxu0
  %v302 = vadd.f32 %v230, %v301
  %v303 = vpop.f32.mrf.mxu0
  %304 = vmatprep.mubr.bf16.mxu0 0
  %305 = vmatmul.mubr.bf16.gmra.mxu0 %v251
  %v306 = vpop.f32.mrf.mxu0
  %v307 = vadd.f32 %v230, %v306
  %v308 = vpop.f32.mrf.mxu0
  %v309 = vpop.f32.mrf.mxu0
  %v310 = vadd.f32 %v230, %v309
  %v311 = vpop.f32.mrf.mxu0
  %312 = vmatprep.mubr.bf16.mxu0 0
  %313 = vmatmul.mubr.bf16.gmra.mxu0 %v254
  %v314 = vpop.f32.mrf.mxu0
  %v315 = vadd.f32 %v230, %v314
  %v316 = vpop.f32.mrf.mxu0
  %v317 = vpop.f32.mrf.mxu0
  %v318 = vadd.f32 %v230, %v317
  %v319 = vpop.f32.mrf.mxu0
  %320 = vdwg.mxu0
  %321 = vst.msk [vmem:[#allocation6] sm:$0xff] %vm212, %v291
  %322 = vst.msk [vmem:[#allocation6 + $0x8] sm:$0xff] %vm212, %v294
  %323 = vst.msk [vmem:[#allocation6 + $0x10] sm:$0xff] %vm212, %v299
  %324 = vst.msk [vmem:[#allocation6 + $0x18] sm:$0xff] %vm212, %v302
  %325 = vst.msk [vmem:[#allocation6 + $0x20] sm:$0xff] %vm212, %v307
  %326 = vst.msk [vmem:[#allocation6 + $0x28] sm:$0xff] %vm212, %v310
  %327 = vst.msk [vmem:[#allocation6 + $0x30] sm:$0xff] %vm212, %v315
  %328 = vst.msk [vmem:[#allocation6 + $0x38] sm:$0xff] %vm212, %v318
  %v329 = vld [vmem:[%s6] sm:$0xff]
  %v330 = vld [vmem:[%s6 + $0x8] sm:$0xff]
  %v331 = vld [vmem:[%s6 + $0x10] sm:$0xff]
  %v332 = vld [vmem:[%s6 + $0x18] sm:$0xff]
  %v333 = vld [vmem:[%s7] sm:$0x1]
  %v334 = vld [vmem:[#allocation2] sm:$0xff]
  %v335 = vld [vmem:[#allocation3] sm:$0xff]
  %337 = vrot.lane.b32.xlu0 %v335, 16
  %v338 = vpop.permute.xlu0 %337
  %vm340 = vcmask 130048
  %v341 = vsel %vm340, %v334, %v338
  %v343 = vsel %vm86, %v341, 0
  %345 = vmatprep.subr.mxu0 0.0
  %346 = vmatpush1.msra.mxu0 0.0
  %347 = vmatprep.subr.mxu0 0.0
  %348 = vmatpush1.msra.mxu0 0.0
  %349 = vmatprep.subr.mxu0 0.0
  %350 = vmatpush1.msra.mxu0 0.0
  %351 = vmatprep.subr.mxu0 0.0
  %352 = vmatpush1.msra.mxu0 0.0
  %353 = vmatprep.subr.mxu0 0.0
  %354 = vmatpush1.msra.mxu0 0.0
  %355 = vmatprep.subr.mxu0 0.0
  %356 = vmatpush1.msra.mxu0 0.0
  %357 = vmatprep.subr.mxu0 0.0
  %358 = vmatpush1.msra.mxu0 0.0
  %359 = vmatprep.subr.mxu0 0.0
  %360 = vmatpush1.msra.mxu0 0.0
  %361 = vmatprep.subr.mxu0 0.0
  %362 = vmatpush1.msra.mxu0 0.0
  %363 = vmatprep.subr.mxu0 0.0
  %364 = vmatpush1.msra.mxu0 0.0
  %365 = vmatprep.subr.mxu0 0.0
  %366 = vmatpush1.msra.mxu0 0.0
  %367 = vmatprep.subr.mxu0 0.0
  %368 = vmatpush1.msra.mxu0 0.0
  %369 = vmatprep.subr.mxu0 0.0
  %370 = vmatpush1.msra.mxu0 %v332
  %371 = vmatprep.subr.mxu0 0.0
  %372 = vmatpush1.msra.mxu0 %v331
  %373 = vmatprep.subr.mxu0 0.0
  %374 = vmatpush1.msra.mxu0 %v330
  %375 = vmatprep.subr.mxu0 0.0
  %376 = vmatpush1.msra.mxu0 %v329
  %377 = vmatprep.subr.mxu0 0.0
  %378 = vmatpush2.msra.mxu0 0.0
  %379 = vmatprep.subr.mxu0 0.0
  %380 = vmatpush2.msra.mxu0 0.0
  %381 = vmatprep.subr.mxu0 0.0
  %382 = vmatpush2.msra.mxu0 0.0
  %383 = vmatprep.subr.mxu0 0.0
  %384 = vmatpush2.msra.mxu0 0.0
  %385 = vmatprep.subr.mxu0 0.0
  %386 = vmatpush2.msra.mxu0 0.0
  %387 = vmatprep.subr.mxu0 0.0
  %388 = vmatpush2.msra.mxu0 0.0
  %389 = vmatprep.subr.mxu0 0.0
  %390 = vmatpush2.msra.mxu0 0.0
  %391 = vmatprep.subr.mxu0 0.0
  %392 = vmatpush2.msra.mxu0 0.0
  %393 = vmatprep.subr.mxu0 0.0
  %394 = vmatpush2.msra.mxu0 0.0
  %395 = vmatprep.subr.mxu0 0.0
  %396 = vmatpush2.msra.mxu0 0.0
  %397 = vmatprep.subr.mxu0 0.0
  %398 = vmatpush2.msra.mxu0 0.0
  %399 = vmatprep.subr.mxu0 0.0
  %400 = vmatpush2.msra.mxu0 0.0
  %401 = vmatprep.subr.mxu0 0.0
  %402 = vmatpush2.msra.mxu0 0.0
  %403 = vmatprep.subr.mxu0 0.0
  %404 = vmatpush2.msra.mxu0 0.0
  %405 = vmatprep.subr.mxu0 0.0
  %406 = vmatpush2.msra.mxu0 0.0
  %407 = vmatprep.subr.mxu0 0.0
  %408 = vmatpush2.msra.mxu0 0.0
  %409 = vmatprep.mubr.f32.mxu0 0.0
  %410 = vmatmul.mubr.f32.gmra.mxu0 %v343
  %v411 = vpop.f32.mrf.mxu0
  %v412 = vadd.f32 0.0, %v411
  %v413 = vpop.f32.mrf.mxu0
  %414 = vdwg.mxu0
  %v415 = vld [vmem:[#allocation5] sm:$0xff]
  %s416 = scalar_lea.vmem [#allocation6], 56
  %v417 = vld [vmem:[%s416] sm:$0xff]
  %v418 = vadd.f32 %v415, %v412
  %v419 = vxor.u32 %v418, 2147483648
  %v420 = vmul.f32 %v419, 1.442695
  %v421 = vpow.pop %v420
  %v422 = vadd.f32 %v421, 1.0
  %v423 = vrcp.pop %v422
  %v424 = vmul.f32 1.0, %v423
  %v426 = vlaneseq
  %v427 = vshrl.u32 %v426, 7
  %v428 = vsub.s32 0, %v427
  %v429 = vrot.slane %v333, %v428
  %430 = vrot.lane.b32.xlu0 %v429, 32
  %v431 = vpop.permute.xlu0 %430
  %v433 = vadd.f32 %v412, %v431
  %435 = vrot.lane.b32.xlu0 %v433, 96
  %v436 = vpop.permute.xlu0 %435
  %v438 = vmul.f32 %v424, %v436
  %440 = vrot.lane.b32.xlu0 %v438, 32
  %v441 = vpop.permute.xlu0 %440
  %v443 = vadd.f32 %v415, %v441
  %v444 = vtanh.pop %v443
  %v445 = vsub.f32 1.0, %v424
  %447 = vrot.lane.b32.xlu0 %v444, 112
  %v448 = vpop.permute.xlu0 %447
  %v450 = vmul.f32 %v445, %v448
  %452 = vrot.lane.b32.xlu0 %v334, 16
  %v453 = vpop.permute.xlu0 %452
  %v455 = vmul.f32 %v424, %v453
  %v456 = vadd.f32 %v450, %v455
  %458 = vrot.lane.b32.xlu0 %v412, 80
  %v459 = vpop.permute.xlu0 %458
  %v461 = vadd.f32 %v417, %v459
  %v462 = vxor.u32 %v461, 2147483648
  %v463 = vmul.f32 %v462, 1.442695
  %v464 = vpow.pop %v463
  %v465 = vadd.f32 %v464, 1.0
  %v466 = vrcp.pop %v465
  %v467 = vmul.f32 1.0, %v466
  %468 = vrot.lane.b32.xlu0 %v429, 64
  %v469 = vpop.permute.xlu0 %468
  %v471 = vadd.f32 %v412, %v469
  %473 = vrot.lane.b32.xlu0 %v471, 48
  %v474 = vpop.permute.xlu0 %473
  %v476 = vmul.f32 %v467, %v474
  %478 = vrot.lane.b32.xlu0 %v476, 32
  %v479 = vpop.permute.xlu0 %478
  %v481 = vadd.f32 %v417, %v479
  %v482 = vtanh.pop %v481
  %v483 = vsub.f32 1.0, %v467
  %485 = vrot.lane.b32.xlu0 %v482, 112
  %v486 = vpop.permute.xlu0 %485
  %v488 = vmul.f32 %v483, %v486
  %v489 = vmul.f32 %v467, %v338
  %v490 = vadd.f32 %v488, %v489
  %s491 = smul.u32 0, 8
  %s492 = ssub.s32 0, 0
  %s493 = smul.u32 %s492, 8
  %s494 = sadd.s32 %s493, 7
  %p495 = scmp.lt.s32.totalorder %s491, 8
  %s496 = scalar_select %p495, 1, 0
  %s497 = scvt.s32.f32 %s496
  %p498 = scmp.lt.s32.totalorder %s494, 8
  %s499 = scalar_select %p498, 1, 0
  %s500 = scvt.s32.f32 %s499
  %v501 = vstv %s497
  %v502 = vmul.f32 %v501, %v456
  %s503 = ssub.f32 1.0, %s497
  %v504 = vstv %s503
  %v505 = vmul.f32 %v504, %v334
  %507 = vrot.lane.b32.xlu0 %v505, 16
  %v508 = vpop.permute.xlu0 %507
  %v510 = vadd.f32 %v502, %v508
  %v511 = vstv %s500
  %v512 = vmul.f32 %v511, %v490
  %s513 = ssub.f32 1.0, %s500
  %v514 = vstv %s513
  %v515 = vmul.f32 %v514, %v335
  %517 = vrot.lane.b32.xlu0 %v515, 16
  %v518 = vpop.permute.xlu0 %517
  %v520 = vadd.f32 %v512, %v518
  %522 = vrot.lane.b32.xlu0 %v510, 112
  %v523 = vpop.permute.xlu0 %522
  %v525 = vsel %vm340, %v523, %v520
  %v527 = vsel %vm86, %v525, 0
  %529 = vmatprep.subr.mxu0 0.0
  %530 = vmatpush1.msra.mxu0 0.0
  %531 = vmatprep.subr.mxu0 0.0
  %532 = vmatpush1.msra.mxu0 0.0
  %533 = vmatprep.subr.mxu0 0.0
  %534 = vmatpush1.msra.mxu0 0.0
  %535 = vmatprep.subr.mxu0 0.0
  %536 = vmatpush1.msra.mxu0 0.0
  %537 = vmatprep.subr.mxu0 0.0
  %538 = vmatpush1.msra.mxu0 0.0
  %539 = vmatprep.subr.mxu0 0.0
  %540 = vmatpush1.msra.mxu0 0.0
  %541 = vmatprep.subr.mxu0 0.0
  %542 = vmatpush1.msra.mxu0 0.0
  %543 = vmatprep.subr.mxu0 0.0
  %544 = vmatpush1.msra.mxu0 0.0
  %545 = vmatprep.subr.mxu0 0.0
  %546 = vmatpush1.msra.mxu0 0.0
  %547 = vmatprep.subr.mxu0 0.0
  %548 = vmatpush1.msra.mxu0 0.0
  %549 = vmatprep.subr.mxu0 0.0
  %550 = vmatpush1.msra.mxu0 0.0
  %551 = vmatprep.subr.mxu0 0.0
  %552 = vmatpush1.msra.mxu0 0.0
  %553 = vmatprep.subr.mxu0 0.0
  %554 = vmatpush1.msra.mxu0 %v332
  %555 = vmatprep.subr.mxu0 0.0
  %556 = vmatpush1.msra.mxu0 %v331
  %557 = vmatprep.subr.mxu0 0.0
  %558 = vmatpush1.msra.mxu0 %v330
  %559 = vmatprep.subr.mxu0 0.0
  %560 = vmatpush1.msra.mxu0 %v329
  %561 = vmatprep.subr.mxu0 0.0
  %562 = vmatpush2.msra.mxu0 0.0
  %563 = vmatprep.subr.mxu0 0.0
  %564 = vmatpush2.msra.mxu0 0.0
  %565 = vmatprep.subr.mxu0 0.0
  %566 = vmatpush2.msra.mxu0 0.0
  %567 = vmatprep.subr.mxu0 0.0
  %568 = vmatpush2.msra.mxu0 0.0
  %569 = vmatprep.subr.mxu0 0.0
  %570 = vmatpush2.msra.mxu0 0.0
  %571 = vmatprep.subr.mxu0 0.0
  %572 = vmatpush2.msra.mxu0 0.0
  %573 = vmatprep.subr.mxu0 0.0
  %574 = vmatpush2.msra.mxu0 0.0
  %575 = vmatprep.subr.mxu0 0.0
  %576 = vmatpush2.msra.mxu0 0.0
  %577 = vmatprep.subr.mxu0 0.0
  %578 = vmatpush2.msra.mxu0 0.0
  %579 = vmatprep.subr.mxu0 0.0
  %580 = vmatpush2.msra.mxu0 0.0
  %581 = vmatprep.subr.mxu0 0.0
  %582 = vmatpush2.msra.mxu0 0.0
  %583 = vmatprep.subr.mxu0 0.0
  %584 = vmatpush2.msra.mxu0 0.0
  %585 = vmatprep.subr.mxu0 0.0
  %586 = vmatpush2.msra.mxu0 0.0
  %587 = vmatprep.subr.mxu0 0.0
  %588 = vmatpush2.msra.mxu0 0.0
  %589 = vmatprep.subr.mxu0 0.0
  %590 = vmatpush2.msra.mxu0 0.0
  %591 = vmatprep.subr.mxu0 0.0
  %592 = vmatpush2.msra.mxu0 0.0
  %593 = vmatprep.mubr.f32.mxu0 0.0
  %594 = vmatmul.mubr.f32.gmra.mxu0 %v527
  %v595 = vpop.f32.mrf.mxu0
  %v596 = vadd.f32 0.0, %v595
  %v597 = vpop.f32.mrf.mxu0
  %598 = vdwg.mxu0
  %s599 = scalar_lea.vmem [#allocation5], 8
  %v600 = vld [vmem:[%s599] sm:$0xff]
  %s601 = scalar_lea.vmem [#allocation6], 48
  %v602 = vld [vmem:[%s601] sm:$0xff]
  %v603 = vadd.f32 %v600, %v596
  %v604 = vxor.u32 %v603, 2147483648
  %v605 = vmul.f32 %v604, 1.442695
  %v606 = vpow.pop %v605
  %v607 = vadd.f32 %v606, 1.0
  %v608 = vrcp.pop %v607
  %v609 = vmul.f32 1.0, %v608
  %v610 = vadd.f32 %v596, %v431
  %612 = vrot.lane.b32.xlu0 %v610, 96
  %v613 = vpop.permute.xlu0 %612
  %v615 = vmul.f32 %v609, %v613
  %617 = vrot.lane.b32.xlu0 %v615, 32
  %v618 = vpop.permute.xlu0 %617
  %v620 = vadd.f32 %v600, %v618
  %v621 = vtanh.pop %v620
  %v622 = vsub.f32 1.0, %v609
  %624 = vrot.lane.b32.xlu0 %v621, 112
  %v625 = vpop.permute.xlu0 %624
  %v627 = vmul.f32 %v622, %v625
  %v628 = vmul.f32 %v609, %v510
  %v629 = vadd.f32 %v627, %v628
  %631 = vrot.lane.b32.xlu0 %v596, 80
  %v632 = vpop.permute.xlu0 %631
  %v634 = vadd.f32 %v602, %v632
  %v635 = vxor.u32 %v634, 2147483648
  %v636 = vmul.f32 %v635, 1.442695
  %v637 = vpow.pop %v636
  %v638 = vadd.f32 %v637, 1.0
  %v639 = vrcp.pop %v638
  %v640 = vmul.f32 1.0, %v639
  %v641 = vadd.f32 %v596, %v469
  %643 = vrot.lane.b32.xlu0 %v641, 48
  %v644 = vpop.permute.xlu0 %643
  %v646 = vmul.f32 %v640, %v644
  %648 = vrot.lane.b32.xlu0 %v646, 32
  %v649 = vpop.permute.xlu0 %648
  %v651 = vadd.f32 %v602, %v649
  %v652 = vtanh.pop %v651
  %v653 = vsub.f32 1.0, %v640
  %655 = vrot.lane.b32.xlu0 %v652, 112
  %v656 = vpop.permute.xlu0 %655
  %v658 = vmul.f32 %v653, %v656
  %v659 = vmul.f32 %v640, %v520
  %v660 = vadd.f32 %v658, %v659
  %s661 = sadd.s32 %s491, 1
  %s662 = sadd.s32 %s493, 6
  %p663 = scmp.lt.s32.totalorder %s661, 8
  %s664 = scalar_select %p663, 1, 0
  %s665 = scvt.s32.f32 %s664
  %p666 = scmp.lt.s32.totalorder %s662, 8
  %s667 = scalar_select %p666, 1, 0
  %s668 = scvt.s32.f32 %s667
  %v669 = vstv %s665
  %v670 = vmul.f32 %v669, %v629
  %s671 = ssub.f32 1.0, %s665
  %v672 = vstv %s671
  %v673 = vmul.f32 %v672, %v510
  %v674 = vadd.f32 %v670, %v673
  %v675 = vstv %s668
  %v676 = vmul.f32 %v675, %v660
  %s677 = ssub.f32 1.0, %s668
  %v678 = vstv %s677
  %v679 = vmul.f32 %v678, %v520
  %v680 = vadd.f32 %v676, %v679
  %682 = vrot.lane.b32.xlu0 %v674, 112
  %v683 = vpop.permute.xlu0 %682
  %v685 = vsel %vm340, %v683, %v680
  %v687 = vsel %vm86, %v685, 0
  %689 = vmatprep.subr.mxu0 0.0
  %690 = vmatpush1.msra.mxu0 0.0
  %691 = vmatprep.subr.mxu0 0.0
  %692 = vmatpush1.msra.mxu0 0.0
  %693 = vmatprep.subr.mxu0 0.0
  %694 = vmatpush1.msra.mxu0 0.0
  %695 = vmatprep.subr.mxu0 0.0
  %696 = vmatpush1.msra.mxu0 0.0
  %697 = vmatprep.subr.mxu0 0.0
  %698 = vmatpush1.msra.mxu0 0.0
  %699 = vmatprep.subr.mxu0 0.0
  %700 = vmatpush1.msra.mxu0 0.0
  %701 = vmatprep.subr.mxu0 0.0
  %702 = vmatpush1.msra.mxu0 0.0
  %703 = vmatprep.subr.mxu0 0.0
  %704 = vmatpush1.msra.mxu0 0.0
  %705 = vmatprep.subr.mxu0 0.0
  %706 = vmatpush1.msra.mxu0 0.0
  %707 = vmatprep.subr.mxu0 0.0
  %708 = vmatpush1.msra.mxu0 0.0
  %709 = vmatprep.subr.mxu0 0.0
  %710 = vmatpush1.msra.mxu0 0.0
  %711 = vmatprep.subr.mxu0 0.0
  %712 = vmatpush1.msra.mxu0 0.0
  %713 = vmatprep.subr.mxu0 0.0
  %714 = vmatpush1.msra.mxu0 %v332
  %715 = vmatprep.subr.mxu0 0.0
  %716 = vmatpush1.msra.mxu0 %v331
  %717 = vmatprep.subr.mxu0 0.0
  %718 = vmatpush1.msra.mxu0 %v330
  %719 = vmatprep.subr.mxu0 0.0
  %720 = vmatpush1.msra.mxu0 %v329
  %721 = vmatprep.subr.mxu0 0.0
  %722 = vmatpush2.msra.mxu0 0.0
  %723 = vmatprep.subr.mxu0 0.0
  %724 = vmatpush2.msra.mxu0 0.0
  %725 = vmatprep.subr.mxu0 0.0
  %726 = vmatpush2.msra.mxu0 0.0
  %727 = vmatprep.subr.mxu0 0.0
  %728 = vmatpush2.msra.mxu0 0.0
  %729 = vmatprep.subr.mxu0 0.0
  %730 = vmatpush2.msra.mxu0 0.0
  %731 = vmatprep.subr.mxu0 0.0
  %732 = vmatpush2.msra.mxu0 0.0
  %733 = vmatprep.subr.mxu0 0.0
  %734 = vmatpush2.msra.mxu0 0.0
  %735 = vmatprep.subr.mxu0 0.0
  %736 = vmatpush2.msra.mxu0 0.0
  %737 = vmatprep.subr.mxu0 0.0
  %738 = vmatpush2.msra.mxu0 0.0
  %739 = vmatprep.subr.mxu0 0.0
  %740 = vmatpush2.msra.mxu0 0.0
  %741 = vmatprep.subr.mxu0 0.0
  %742 = vmatpush2.msra.mxu0 0.0
  %743 = vmatprep.subr.mxu0 0.0
  %744 = vmatpush2.msra.mxu0 0.0
  %745 = vmatprep.subr.mxu0 0.0
  %746 = vmatpush2.msra.mxu0 0.0
  %747 = vmatprep.subr.mxu0 0.0
  %748 = vmatpush2.msra.mxu0 0.0
  %749 = vmatprep.subr.mxu0 0.0
  %750 = vmatpush2.msra.mxu0 0.0
  %751 = vmatprep.subr.mxu0 0.0
  %752 = vmatpush2.msra.mxu0 0.0
  %753 = vmatprep.mubr.f32.mxu0 0.0
  %754 = vmatmul.mubr.f32.gmra.mxu0 %v687
  %v755 = vpop.f32.mrf.mxu0
  %v756 = vadd.f32 0.0, %v755
  %v757 = vpop.f32.mrf.mxu0
  %758 = vdwg.mxu0
  %s759 = scalar_lea.vmem [#allocation5], 16
  %v760 = vld [vmem:[%s759] sm:$0xff]
  %s761 = scalar_lea.vmem [#allocation6], 40
  %v762 = vld [vmem:[%s761] sm:$0xff]
  %v763 = vadd.f32 %v760, %v756
  %v764 = vxor.u32 %v763, 2147483648
  %v765 = vmul.f32 %v764, 1.442695
  %v766 = vpow.pop %v765
  %v767 = vadd.f32 %v766, 1.0
  %v768 = vrcp.pop %v767
  %v769 = vmul.f32 1.0, %v768
  %v770 = vadd.f32 %v756, %v431
  %772 = vrot.lane.b32.xlu0 %v770, 96
  %v773 = vpop.permute.xlu0 %772
  %v775 = vmul.f32 %v769, %v773
  %777 = vrot.lane.b32.xlu0 %v775, 32
  %v778 = vpop.permute.xlu0 %777
  %v780 = vadd.f32 %v760, %v778
  %v781 = vtanh.pop %v780
  %v782 = vsub.f32 1.0, %v769
  %784 = vrot.lane.b32.xlu0 %v781, 112
  %v785 = vpop.permute.xlu0 %784
  %v787 = vmul.f32 %v782, %v785
  %v788 = vmul.f32 %v769, %v674
  %v789 = vadd.f32 %v787, %v788
  %791 = vrot.lane.b32.xlu0 %v756, 80
  %v792 = vpop.permute.xlu0 %791
  %v794 = vadd.f32 %v762, %v792
  %v795 = vxor.u32 %v794, 2147483648
  %v796 = vmul.f32 %v795, 1.442695
  %v797 = vpow.pop %v796
  %v798 = vadd.f32 %v797, 1.0
  %v799 = vrcp.pop %v798
  %v800 = vmul.f32 1.0, %v799
  %v801 = vadd.f32 %v756, %v469
  %803 = vrot.lane.b32.xlu0 %v801, 48
  %v804 = vpop.permute.xlu0 %803
  %v806 = vmul.f32 %v800, %v804
  %808 = vrot.lane.b32.xlu0 %v806, 32
  %v809 = vpop.permute.xlu0 %808
  %v811 = vadd.f32 %v762, %v809
  %v812 = vtanh.pop %v811
  %v813 = vsub.f32 1.0, %v800
  %815 = vrot.lane.b32.xlu0 %v812, 112
  %v816 = vpop.permute.xlu0 %815
  %v818 = vmul.f32 %v813, %v816
  %v819 = vmul.f32 %v800, %v680
  %v820 = vadd.f32 %v818, %v819
  %s821 = sadd.s32 %s491, 2
  %s822 = sadd.s32 %s493, 5
  %p823 = scmp.lt.s32.totalorder %s821, 8
  %s824 = scalar_select %p823, 1, 0
  %s825 = scvt.s32.f32 %s824
  %p826 = scmp.lt.s32.totalorder %s822, 8
  %s827 = scalar_select %p826, 1, 0
  %s828 = scvt.s32.f32 %s827
  %v829 = vstv %s825
  %v830 = vmul.f32 %v829, %v789
  %s831 = ssub.f32 1.0, %s825
  %v832 = vstv %s831
  %v833 = vmul.f32 %v832, %v674
  %v834 = vadd.f32 %v830, %v833
  %v835 = vstv %s828
  %v836 = vmul.f32 %v835, %v820
  %s837 = ssub.f32 1.0, %s828
  %v838 = vstv %s837
  %v839 = vmul.f32 %v838, %v680
  %v840 = vadd.f32 %v836, %v839
  %842 = vrot.lane.b32.xlu0 %v834, 112
  %v843 = vpop.permute.xlu0 %842
  %v845 = vsel %vm340, %v843, %v840
  %v847 = vsel %vm86, %v845, 0
  %849 = vmatprep.subr.mxu0 0.0
  %850 = vmatpush1.msra.mxu0 0.0
  %851 = vmatprep.subr.mxu0 0.0
  %852 = vmatpush1.msra.mxu0 0.0
  %853 = vmatprep.subr.mxu0 0.0
  %854 = vmatpush1.msra.mxu0 0.0
  %855 = vmatprep.subr.mxu0 0.0
  %856 = vmatpush1.msra.mxu0 0.0
  %857 = vmatprep.subr.mxu0 0.0
  %858 = vmatpush1.msra.mxu0 0.0
  %859 = vmatprep.subr.mxu0 0.0
  %860 = vmatpush1.msra.mxu0 0.0
  %861 = vmatprep.subr.mxu0 0.0
  %862 = vmatpush1.msra.mxu0 0.0
  %863 = vmatprep.subr.mxu0 0.0
  %864 = vmatpush1.msra.mxu0 0.0
  %865 = vmatprep.subr.mxu0 0.0
  %866 = vmatpush1.msra.mxu0 0.0
  %867 = vmatprep.subr.mxu0 0.0
  %868 = vmatpush1.msra.mxu0 0.0
  %869 = vmatprep.subr.mxu0 0.0
  %870 = vmatpush1.msra.mxu0 0.0
  %871 = vmatprep.subr.mxu0 0.0
  %872 = vmatpush1.msra.mxu0 0.0
  %873 = vmatprep.subr.mxu0 0.0
  %874 = vmatpush1.msra.mxu0 %v332
  %875 = vmatprep.subr.mxu0 0.0
  %876 = vmatpush1.msra.mxu0 %v331
  %877 = vmatprep.subr.mxu0 0.0
  %878 = vmatpush1.msra.mxu0 %v330
  %879 = vmatprep.subr.mxu0 0.0
  %880 = vmatpush1.msra.mxu0 %v329
  %881 = vmatprep.subr.mxu0 0.0
  %882 = vmatpush2.msra.mxu0 0.0
  %883 = vmatprep.subr.mxu0 0.0
  %884 = vmatpush2.msra.mxu0 0.0
  %885 = vmatprep.subr.mxu0 0.0
  %886 = vmatpush2.msra.mxu0 0.0
  %887 = vmatprep.subr.mxu0 0.0
  %888 = vmatpush2.msra.mxu0 0.0
  %889 = vmatprep.subr.mxu0 0.0
  %890 = vmatpush2.msra.mxu0 0.0
  %891 = vmatprep.subr.mxu0 0.0
  %892 = vmatpush2.msra.mxu0 0.0
  %893 = vmatprep.subr.mxu0 0.0
  %894 = vmatpush2.msra.mxu0 0.0
  %895 = vmatprep.subr.mxu0 0.0
  %896 = vmatpush2.msra.mxu0 0.0
  %897 = vmatprep.subr.mxu0 0.0
  %898 = vmatpush2.msra.mxu0 0.0
  %899 = vmatprep.subr.mxu0 0.0
  %900 = vmatpush2.msra.mxu0 0.0
  %901 = vmatprep.subr.mxu0 0.0
  %902 = vmatpush2.msra.mxu0 0.0
  %903 = vmatprep.subr.mxu0 0.0
  %904 = vmatpush2.msra.mxu0 0.0
  %905 = vmatprep.subr.mxu0 0.0
  %906 = vmatpush2.msra.mxu0 0.0
  %907 = vmatprep.subr.mxu0 0.0
  %908 = vmatpush2.msra.mxu0 0.0
  %909 = vmatprep.subr.mxu0 0.0
  %910 = vmatpush2.msra.mxu0 0.0
  %911 = vmatprep.subr.mxu0 0.0
  %912 = vmatpush2.msra.mxu0 0.0
  %913 = vmatprep.mubr.f32.mxu0 0.0
  %914 = vmatmul.mubr.f32.gmra.mxu0 %v847
  %v915 = vpop.f32.mrf.mxu0
  %v916 = vadd.f32 0.0, %v915
  %v917 = vpop.f32.mrf.mxu0
  %918 = vdwg.mxu0
  %s919 = scalar_lea.vmem [#allocation5], 24
  %v920 = vld [vmem:[%s919] sm:$0xff]
  %s921 = scalar_lea.vmem [#allocation6], 32
  %v922 = vld [vmem:[%s921] sm:$0xff]
  %v923 = vadd.f32 %v920, %v916
  %v924 = vxor.u32 %v923, 2147483648
  %v925 = vmul.f32 %v924, 1.442695
  %v926 = vpow.pop %v925
  %v927 = vadd.f32 %v926, 1.0
  %v928 = vrcp.pop %v927
  %v929 = vmul.f32 1.0, %v928
  %v930 = vadd.f32 %v916, %v431
  %932 = vrot.lane.b32.xlu0 %v930, 96
  %v933 = vpop.permute.xlu0 %932
  %v935 = vmul.f32 %v929, %v933
  %937 = vrot.lane.b32.xlu0 %v935, 32
  %v938 = vpop.permute.xlu0 %937
  %v940 = vadd.f32 %v920, %v938
  %v941 = vtanh.pop %v940
  %v942 = vsub.f32 1.0, %v929
  %944 = vrot.lane.b32.xlu0 %v941, 112
  %v945 = vpop.permute.xlu0 %944
  %v947 = vmul.f32 %v942, %v945
  %v948 = vmul.f32 %v929, %v834
  %v949 = vadd.f32 %v947, %v948
  %951 = vrot.lane.b32.xlu0 %v916, 80
  %v952 = vpop.permute.xlu0 %951
  %v954 = vadd.f32 %v922, %v952
  %v955 = vxor.u32 %v954, 2147483648
  %v956 = vmul.f32 %v955, 1.442695
  %v957 = vpow.pop %v956
  %v958 = vadd.f32 %v957, 1.0
  %v959 = vrcp.pop %v958
  %v960 = vmul.f32 1.0, %v959
  %v961 = vadd.f32 %v916, %v469
  %963 = vrot.lane.b32.xlu0 %v961, 48
  %v964 = vpop.permute.xlu0 %963
  %v966 = vmul.f32 %v960, %v964
  %968 = vrot.lane.b32.xlu0 %v966, 32
  %v969 = vpop.permute.xlu0 %968
  %v971 = vadd.f32 %v922, %v969
  %v972 = vtanh.pop %v971
  %v973 = vsub.f32 1.0, %v960
  %975 = vrot.lane.b32.xlu0 %v972, 112
  %v976 = vpop.permute.xlu0 %975
  %v978 = vmul.f32 %v973, %v976
  %v979 = vmul.f32 %v960, %v840
  %v980 = vadd.f32 %v978, %v979
  %s981 = sadd.s32 %s491, 3
  %s982 = sadd.s32 %s493, 4
  %p983 = scmp.lt.s32.totalorder %s981, 8
  %s984 = scalar_select %p983, 1, 0
  %s985 = scvt.s32.f32 %s984
  %p986 = scmp.lt.s32.totalorder %s982, 8
  %s987 = scalar_select %p986, 1, 0
  %s988 = scvt.s32.f32 %s987
  %v989 = vstv %s985
  %v990 = vmul.f32 %v989, %v949
  %s991 = ssub.f32 1.0, %s985
  %v992 = vstv %s991
  %v993 = vmul.f32 %v992, %v834
  %v994 = vadd.f32 %v990, %v993
  %v995 = vstv %s988
  %v996 = vmul.f32 %v995, %v980
  %s997 = ssub.f32 1.0, %s988
  %v998 = vstv %s997
  %v999 = vmul.f32 %v998, %v840
  %v1000 = vadd.f32 %v996, %v999
  %1002 = vrot.lane.b32.xlu0 %v994, 112
  %v1003 = vpop.permute.xlu0 %1002
  %v1005 = vsel %vm340, %v1003, %v1000
  %v1007 = vsel %vm86, %v1005, 0
  %1009 = vmatprep.subr.mxu0 0.0
  %1010 = vmatpush1.msra.mxu0 0.0
  %1011 = vmatprep.subr.mxu0 0.0
  %1012 = vmatpush1.msra.mxu0 0.0
  %1013 = vmatprep.subr.mxu0 0.0
  %1014 = vmatpush1.msra.mxu0 0.0
  %1015 = vmatprep.subr.mxu0 0.0
  %1016 = vmatpush1.msra.mxu0 0.0
  %1017 = vmatprep.subr.mxu0 0.0
  %1018 = vmatpush1.msra.mxu0 0.0
  %1019 = vmatprep.subr.mxu0 0.0
  %1020 = vmatpush1.msra.mxu0 0.0
  %1021 = vmatprep.subr.mxu0 0.0
  %1022 = vmatpush1.msra.mxu0 0.0
  %1023 = vmatprep.subr.mxu0 0.0
  %1024 = vmatpush1.msra.mxu0 0.0
  %1025 = vmatprep.subr.mxu0 0.0
  %1026 = vmatpush1.msra.mxu0 0.0
  %1027 = vmatprep.subr.mxu0 0.0
  %1028 = vmatpush1.msra.mxu0 0.0
  %1029 = vmatprep.subr.mxu0 0.0
  %1030 = vmatpush1.msra.mxu0 0.0
  %1031 = vmatprep.subr.mxu0 0.0
  %1032 = vmatpush1.msra.mxu0 0.0
  %1033 = vmatprep.subr.mxu0 0.0
  %1034 = vmatpush1.msra.mxu0 %v332
  %1035 = vmatprep.subr.mxu0 0.0
  %1036 = vmatpush1.msra.mxu0 %v331
  %1037 = vmatprep.subr.mxu0 0.0
  %1038 = vmatpush1.msra.mxu0 %v330
  %1039 = vmatprep.subr.mxu0 0.0
  %1040 = vmatpush1.msra.mxu0 %v329
  %1041 = vmatprep.subr.mxu0 0.0
  %1042 = vmatpush2.msra.mxu0 0.0
  %1043 = vmatprep.subr.mxu0 0.0
  %1044 = vmatpush2.msra.mxu0 0.0
  %1045 = vmatprep.subr.mxu0 0.0
  %1046 = vmatpush2.msra.mxu0 0.0
  %1047 = vmatprep.subr.mxu0 0.0
  %1048 = vmatpush2.msra.mxu0 0.0
  %1049 = vmatprep.subr.mxu0 0.0
  %1050 = vmatpush2.msra.mxu0 0.0
  %1051 = vmatprep.subr.mxu0 0.0
  %1052 = vmatpush2.msra.mxu0 0.0
  %1053 = vmatprep.subr.mxu0 0.0
  %1054 = vmatpush2.msra.mxu0 0.0
  %1055 = vmatprep.subr.mxu0 0.0
  %1056 = vmatpush2.msra.mxu0 0.0
  %1057 = vmatprep.subr.mxu0 0.0
  %1058 = vmatpush2.msra.mxu0 0.0
  %1059 = vmatprep.subr.mxu0 0.0
  %1060 = vmatpush2.msra.mxu0 0.0
  %1061 = vmatprep.subr.mxu0 0.0
  %1062 = vmatpush2.msra.mxu0 0.0
  %1063 = vmatprep.subr.mxu0 0.0
  %1064 = vmatpush2.msra.mxu0 0.0
  %1065 = vmatprep.subr.mxu0 0.0
  %1066 = vmatpush2.msra.mxu0 0.0
  %1067 = vmatprep.subr.mxu0 0.0
  %1068 = vmatpush2.msra.mxu0 0.0
  %1069 = vmatprep.subr.mxu0 0.0
  %1070 = vmatpush2.msra.mxu0 0.0
  %1071 = vmatprep.subr.mxu0 0.0
  %1072 = vmatpush2.msra.mxu0 0.0
  %1073 = vmatprep.mubr.f32.mxu0 0.0
  %1074 = vmatmul.mubr.f32.gmra.mxu0 %v1007
  %v1075 = vpop.f32.mrf.mxu0
  %v1076 = vadd.f32 0.0, %v1075
  %v1077 = vpop.f32.mrf.mxu0
  %1078 = vdwg.mxu0
  %s1079 = scalar_lea.vmem [#allocation5], 32
  %v1080 = vld [vmem:[%s1079] sm:$0xff]
  %s1081 = scalar_lea.vmem [#allocation6], 24
  %v1082 = vld [vmem:[%s1081] sm:$0xff]
  %v1083 = vadd.f32 %v1080, %v1076
  %v1084 = vxor.u32 %v1083, 2147483648
  %v1085 = vmul.f32 %v1084, 1.442695
  %v1086 = vpow.pop %v1085
  %v1087 = vadd.f32 %v1086, 1.0
  %v1088 = vrcp.pop %v1087
  %v1089 = vmul.f32 1.0, %v1088
  %v1090 = vadd.f32 %v1076, %v431
  %1092 = vrot.lane.b32.xlu0 %v1090, 96
  %v1093 = vpop.permute.xlu0 %1092
  %v1095 = vmul.f32 %v1089, %v1093
  %1097 = vrot.lane.b32.xlu0 %v1095, 32
  %v1098 = vpop.permute.xlu0 %1097
  %v1100 = vadd.f32 %v1080, %v1098
  %v1101 = vtanh.pop %v1100
  %v1102 = vsub.f32 1.0, %v1089
  %1104 = vrot.lane.b32.xlu0 %v1101, 112
  %v1105 = vpop.permute.xlu0 %1104
  %v1107 = vmul.f32 %v1102, %v1105
  %v1108 = vmul.f32 %v1089, %v994
  %v1109 = vadd.f32 %v1107, %v1108
  %1111 = vrot.lane.b32.xlu0 %v1076, 80
  %v1112 = vpop.permute.xlu0 %1111
  %v1114 = vadd.f32 %v1082, %v1112
  %v1115 = vxor.u32 %v1114, 2147483648
  %v1116 = vmul.f32 %v1115, 1.442695
  %v1117 = vpow.pop %v1116
  %v1118 = vadd.f32 %v1117, 1.0
  %v1119 = vrcp.pop %v1118
  %v1120 = vmul.f32 1.0, %v1119
  %v1121 = vadd.f32 %v1076, %v469
  %1123 = vrot.lane.b32.xlu0 %v1121, 48
  %v1124 = vpop.permute.xlu0 %1123
  %v1126 = vmul.f32 %v1120, %v1124
  %1128 = vrot.lane.b32.xlu0 %v1126, 32
  %v1129 = vpop.permute.xlu0 %1128
  %v1131 = vadd.f32 %v1082, %v1129
  %v1132 = vtanh.pop %v1131
  %v1133 = vsub.f32 1.0, %v1120
  %1135 = vrot.lane.b32.xlu0 %v1132, 112
  %v1136 = vpop.permute.xlu0 %1135
  %v1138 = vmul.f32 %v1133, %v1136
  %v1139 = vmul.f32 %v1120, %v1000
  %v1140 = vadd.f32 %v1138, %v1139
  %s1141 = sadd.s32 %s491, 4
  %s1142 = sadd.s32 %s493, 3
  %p1143 = scmp.lt.s32.totalorder %s1141, 8
  %s1144 = scalar_select %p1143, 1, 0
  %s1145 = scvt.s32.f32 %s1144
  %p1146 = scmp.lt.s32.totalorder %s1142, 8
  %s1147 = scalar_select %p1146, 1, 0
  %s1148 = scvt.s32.f32 %s1147
  %v1149 = vstv %s1145
  %v1150 = vmul.f32 %v1149, %v1109
  %s1151 = ssub.f32 1.0, %s1145
  %v1152 = vstv %s1151
  %v1153 = vmul.f32 %v1152, %v994
  %v1154 = vadd.f32 %v1150, %v1153
  %v1155 = vstv %s1148
  %v1156 = vmul.f32 %v1155, %v1140
  %s1157 = ssub.f32 1.0, %s1148
  %v1158 = vstv %s1157
  %v1159 = vmul.f32 %v1158, %v1000
  %v1160 = vadd.f32 %v1156, %v1159
  %1162 = vrot.lane.b32.xlu0 %v1154, 112
  %v1163 = vpop.permute.xlu0 %1162
  %v1165 = vsel %vm340, %v1163, %v1160
  %v1167 = vsel %vm86, %v1165, 0
  %1169 = vmatprep.subr.mxu0 0.0
  %1170 = vmatpush1.msra.mxu0 0.0
  %1171 = vmatprep.subr.mxu0 0.0
  %1172 = vmatpush1.msra.mxu0 0.0
  %1173 = vmatprep.subr.mxu0 0.0
  %1174 = vmatpush1.msra.mxu0 0.0
  %1175 = vmatprep.subr.mxu0 0.0
  %1176 = vmatpush1.msra.mxu0 0.0
  %1177 = vmatprep.subr.mxu0 0.0
  %1178 = vmatpush1.msra.mxu0 0.0
  %1179 = vmatprep.subr.mxu0 0.0
  %1180 = vmatpush1.msra.mxu0 0.0
  %1181 = vmatprep.subr.mxu0 0.0
  %1182 = vmatpush1.msra.mxu0 0.0
  %1183 = vmatprep.subr.mxu0 0.0
  %1184 = vmatpush1.msra.mxu0 0.0
  %1185 = vmatprep.subr.mxu0 0.0
  %1186 = vmatpush1.msra.mxu0 0.0
  %1187 = vmatprep.subr.mxu0 0.0
  %1188 = vmatpush1.msra.mxu0 0.0
  %1189 = vmatprep.subr.mxu0 0.0
  %1190 = vmatpush1.msra.mxu0 0.0
  %1191 = vmatprep.subr.mxu0 0.0
  %1192 = vmatpush1.msra.mxu0 0.0
  %1193 = vmatprep.subr.mxu0 0.0
  %1194 = vmatpush1.msra.mxu0 %v332
  %1195 = vmatprep.subr.mxu0 0.0
  %1196 = vmatpush1.msra.mxu0 %v331
  %1197 = vmatprep.subr.mxu0 0.0
  %1198 = vmatpush1.msra.mxu0 %v330
  %1199 = vmatprep.subr.mxu0 0.0
  %1200 = vmatpush1.msra.mxu0 %v329
  %1201 = vmatprep.subr.mxu0 0.0
  %1202 = vmatpush2.msra.mxu0 0.0
  %1203 = vmatprep.subr.mxu0 0.0
  %1204 = vmatpush2.msra.mxu0 0.0
  %1205 = vmatprep.subr.mxu0 0.0
  %1206 = vmatpush2.msra.mxu0 0.0
  %1207 = vmatprep.subr.mxu0 0.0
  %1208 = vmatpush2.msra.mxu0 0.0
  %1209 = vmatprep.subr.mxu0 0.0
  %1210 = vmatpush2.msra.mxu0 0.0
  %1211 = vmatprep.subr.mxu0 0.0
  %1212 = vmatpush2.msra.mxu0 0.0
  %1213 = vmatprep.subr.mxu0 0.0
  %1214 = vmatpush2.msra.mxu0 0.0
  %1215 = vmatprep.subr.mxu0 0.0
  %1216 = vmatpush2.msra.mxu0 0.0
  %1217 = vmatprep.subr.mxu0 0.0
  %1218 = vmatpush2.msra.mxu0 0.0
  %1219 = vmatprep.subr.mxu0 0.0
  %1220 = vmatpush2.msra.mxu0 0.0
  %1221 = vmatprep.subr.mxu0 0.0
  %1222 = vmatpush2.msra.mxu0 0.0
  %1223 = vmatprep.subr.mxu0 0.0
  %1224 = vmatpush2.msra.mxu0 0.0
  %1225 = vmatprep.subr.mxu0 0.0
  %1226 = vmatpush2.msra.mxu0 0.0
  %1227 = vmatprep.subr.mxu0 0.0
  %1228 = vmatpush2.msra.mxu0 0.0
  %1229 = vmatprep.subr.mxu0 0.0
  %1230 = vmatpush2.msra.mxu0 0.0
  %1231 = vmatprep.subr.mxu0 0.0
  %1232 = vmatpush2.msra.mxu0 0.0
  %1233 = vmatprep.mubr.f32.mxu0 0.0
  %1234 = vmatmul.mubr.f32.gmra.mxu0 %v1167
  %v1235 = vpop.f32.mrf.mxu0
  %v1236 = vadd.f32 0.0, %v1235
  %v1237 = vpop.f32.mrf.mxu0
  %1238 = vdwg.mxu0
  %s1239 = scalar_lea.vmem [#allocation5], 40
  %v1240 = vld [vmem:[%s1239] sm:$0xff]
  %s1241 = scalar_lea.vmem [#allocation6], 16
  %v1242 = vld [vmem:[%s1241] sm:$0xff]
  %v1243 = vadd.f32 %v1240, %v1236
  %v1244 = vxor.u32 %v1243, 2147483648
  %v1245 = vmul.f32 %v1244, 1.442695
  %v1246 = vpow.pop %v1245
  %v1247 = vadd.f32 %v1246, 1.0
  %v1248 = vrcp.pop %v1247
  %v1249 = vmul.f32 1.0, %v1248
  %v1250 = vadd.f32 %v1236, %v431
  %1252 = vrot.lane.b32.xlu0 %v1250, 96
  %v1253 = vpop.permute.xlu0 %1252
  %v1255 = vmul.f32 %v1249, %v1253
  %1257 = vrot.lane.b32.xlu0 %v1255, 32
  %v1258 = vpop.permute.xlu0 %1257
  %v1260 = vadd.f32 %v1240, %v1258
  %v1261 = vtanh.pop %v1260
  %v1262 = vsub.f32 1.0, %v1249
  %1264 = vrot.lane.b32.xlu0 %v1261, 112
  %v1265 = vpop.permute.xlu0 %1264
  %v1267 = vmul.f32 %v1262, %v1265
  %v1268 = vmul.f32 %v1249, %v1154
  %v1269 = vadd.f32 %v1267, %v1268
  %1271 = vrot.lane.b32.xlu0 %v1236, 80
  %v1272 = vpop.permute.xlu0 %1271
  %v1274 = vadd.f32 %v1242, %v1272
  %v1275 = vxor.u32 %v1274, 2147483648
  %v1276 = vmul.f32 %v1275, 1.442695
  %v1277 = vpow.pop %v1276
  %v1278 = vadd.f32 %v1277, 1.0
  %v1279 = vrcp.pop %v1278
  %v1280 = vmul.f32 1.0, %v1279
  %v1281 = vadd.f32 %v1236, %v469
  %1283 = vrot.lane.b32.xlu0 %v1281, 48
  %v1284 = vpop.permute.xlu0 %1283
  %v1286 = vmul.f32 %v1280, %v1284
  %1288 = vrot.lane.b32.xlu0 %v1286, 32
  %v1289 = vpop.permute.xlu0 %1288
  %v1291 = vadd.f32 %v1242, %v1289
  %v1292 = vtanh.pop %v1291
  %v1293 = vsub.f32 1.0, %v1280
  %1295 = vrot.lane.b32.xlu0 %v1292, 112
  %v1296 = vpop.permute.xlu0 %1295
  %v1298 = vmul.f32 %v1293, %v1296
  %v1299 = vmul.f32 %v1280, %v1160
  %v1300 = vadd.f32 %v1298, %v1299
  %s1301 = sadd.s32 %s491, 5
  %s1302 = sadd.s32 %s493, 2
  %p1303 = scmp.lt.s32.totalorder %s1301, 8
  %s1304 = scalar_select %p1303, 1, 0
  %s1305 = scvt.s32.f32 %s1304
  %p1306 = scmp.lt.s32.totalorder %s1302, 8
  %s1307 = scalar_select %p1306, 1, 0
  %s1308 = scvt.s32.f32 %s1307
  %v1309 = vstv %s1305
  %v1310 = vmul.f32 %v1309, %v1269
  %s1311 = ssub.f32 1.0, %s1305
  %v1312 = vstv %s1311
  %v1313 = vmul.f32 %v1312, %v1154
  %v1314 = vadd.f32 %v1310, %v1313
  %v1315 = vstv %s1308
  %v1316 = vmul.f32 %v1315, %v1300
  %s1317 = ssub.f32 1.0, %s1308
  %v1318 = vstv %s1317
  %v1319 = vmul.f32 %v1318, %v1160
  %v1320 = vadd.f32 %v1316, %v1319
  %1322 = vrot.lane.b32.xlu0 %v1314, 112
  %v1323 = vpop.permute.xlu0 %1322
  %v1325 = vsel %vm340, %v1323, %v1320
  %v1327 = vsel %vm86, %v1325, 0
  %1329 = vmatprep.subr.mxu0 0.0
  %1330 = vmatpush1.msra.mxu0 0.0
  %1331 = vmatprep.subr.mxu0 0.0
  %1332 = vmatpush1.msra.mxu0 0.0
  %1333 = vmatprep.subr.mxu0 0.0
  %1334 = vmatpush1.msra.mxu0 0.0
  %1335 = vmatprep.subr.mxu0 0.0
  %1336 = vmatpush1.msra.mxu0 0.0
  %1337 = vmatprep.subr.mxu0 0.0
  %1338 = vmatpush1.msra.mxu0 0.0
  %1339 = vmatprep.subr.mxu0 0.0
  %1340 = vmatpush1.msra.mxu0 0.0
  %1341 = vmatprep.subr.mxu0 0.0
  %1342 = vmatpush1.msra.mxu0 0.0
  %1343 = vmatprep.subr.mxu0 0.0
  %1344 = vmatpush1.msra.mxu0 0.0
  %1345 = vmatprep.subr.mxu0 0.0
  %1346 = vmatpush1.msra.mxu0 0.0
  %1347 = vmatprep.subr.mxu0 0.0
  %1348 = vmatpush1.msra.mxu0 0.0
  %1349 = vmatprep.subr.mxu0 0.0
  %1350 = vmatpush1.msra.mxu0 0.0
  %1351 = vmatprep.subr.mxu0 0.0
  %1352 = vmatpush1.msra.mxu0 0.0
  %1353 = vmatprep.subr.mxu0 0.0
  %1354 = vmatpush1.msra.mxu0 %v332
  %1355 = vmatprep.subr.mxu0 0.0
  %1356 = vmatpush1.msra.mxu0 %v331
  %1357 = vmatprep.subr.mxu0 0.0
  %1358 = vmatpush1.msra.mxu0 %v330
  %1359 = vmatprep.subr.mxu0 0.0
  %1360 = vmatpush1.msra.mxu0 %v329
  %1361 = vmatprep.subr.mxu0 0.0
  %1362 = vmatpush2.msra.mxu0 0.0
  %1363 = vmatprep.subr.mxu0 0.0
  %1364 = vmatpush2.msra.mxu0 0.0
  %1365 = vmatprep.subr.mxu0 0.0
  %1366 = vmatpush2.msra.mxu0 0.0
  %1367 = vmatprep.subr.mxu0 0.0
  %1368 = vmatpush2.msra.mxu0 0.0
  %1369 = vmatprep.subr.mxu0 0.0
  %1370 = vmatpush2.msra.mxu0 0.0
  %1371 = vmatprep.subr.mxu0 0.0
  %1372 = vmatpush2.msra.mxu0 0.0
  %1373 = vmatprep.subr.mxu0 0.0
  %1374 = vmatpush2.msra.mxu0 0.0
  %1375 = vmatprep.subr.mxu0 0.0
  %1376 = vmatpush2.msra.mxu0 0.0
  %1377 = vmatprep.subr.mxu0 0.0
  %1378 = vmatpush2.msra.mxu0 0.0
  %1379 = vmatprep.subr.mxu0 0.0
  %1380 = vmatpush2.msra.mxu0 0.0
  %1381 = vmatprep.subr.mxu0 0.0
  %1382 = vmatpush2.msra.mxu0 0.0
  %1383 = vmatprep.subr.mxu0 0.0
  %1384 = vmatpush2.msra.mxu0 0.0
  %1385 = vmatprep.subr.mxu0 0.0
  %1386 = vmatpush2.msra.mxu0 0.0
  %1387 = vmatprep.subr.mxu0 0.0
  %1388 = vmatpush2.msra.mxu0 0.0
  %1389 = vmatprep.subr.mxu0 0.0
  %1390 = vmatpush2.msra.mxu0 0.0
  %1391 = vmatprep.subr.mxu0 0.0
  %1392 = vmatpush2.msra.mxu0 0.0
  %1393 = vmatprep.mubr.f32.mxu0 0.0
  %1394 = vmatmul.mubr.f32.gmra.mxu0 %v1327
  %v1395 = vpop.f32.mrf.mxu0
  %v1396 = vadd.f32 0.0, %v1395
  %v1397 = vpop.f32.mrf.mxu0
  %1398 = vdwg.mxu0
  %s1399 = scalar_lea.vmem [#allocation5], 48
  %v1400 = vld [vmem:[%s1399] sm:$0xff]
  %s1401 = scalar_lea.vmem [#allocation6], 8
  %v1402 = vld [vmem:[%s1401] sm:$0xff]
  %v1403 = vadd.f32 %v1400, %v1396
  %v1404 = vxor.u32 %v1403, 2147483648
  %v1405 = vmul.f32 %v1404, 1.442695
  %v1406 = vpow.pop %v1405
  %v1407 = vadd.f32 %v1406, 1.0
  %v1408 = vrcp.pop %v1407
  %v1409 = vmul.f32 1.0, %v1408
  %v1410 = vadd.f32 %v1396, %v431
  %1412 = vrot.lane.b32.xlu0 %v1410, 96
  %v1413 = vpop.permute.xlu0 %1412
  %v1415 = vmul.f32 %v1409, %v1413
  %1417 = vrot.lane.b32.xlu0 %v1415, 32
  %v1418 = vpop.permute.xlu0 %1417
  %v1420 = vadd.f32 %v1400, %v1418
  %v1421 = vtanh.pop %v1420
  %v1422 = vsub.f32 1.0, %v1409
  %1424 = vrot.lane.b32.xlu0 %v1421, 112
  %v1425 = vpop.permute.xlu0 %1424
  %v1427 = vmul.f32 %v1422, %v1425
  %v1428 = vmul.f32 %v1409, %v1314
  %v1429 = vadd.f32 %v1427, %v1428
  %1431 = vrot.lane.b32.xlu0 %v1396, 80
  %v1432 = vpop.permute.xlu0 %1431
  %v1434 = vadd.f32 %v1402, %v1432
  %v1435 = vxor.u32 %v1434, 2147483648
  %v1436 = vmul.f32 %v1435, 1.442695
  %v1437 = vpow.pop %v1436
  %v1438 = vadd.f32 %v1437, 1.0
  %v1439 = vrcp.pop %v1438
  %v1440 = vmul.f32 1.0, %v1439
  %v1441 = vadd.f32 %v1396, %v469
  %1443 = vrot.lane.b32.xlu0 %v1441, 48
  %v1444 = vpop.permute.xlu0 %1443
  %v1446 = vmul.f32 %v1440, %v1444
  %1448 = vrot.lane.b32.xlu0 %v1446, 32
  %v1449 = vpop.permute.xlu0 %1448
  %v1451 = vadd.f32 %v1402, %v1449
  %v1452 = vtanh.pop %v1451
  %v1453 = vsub.f32 1.0, %v1440
  %1455 = vrot.lane.b32.xlu0 %v1452, 112
  %v1456 = vpop.permute.xlu0 %1455
  %v1458 = vmul.f32 %v1453, %v1456
  %v1459 = vmul.f32 %v1440, %v1320
  %v1460 = vadd.f32 %v1458, %v1459
  %s1461 = sadd.s32 %s491, 6
  %s1462 = sadd.s32 %s493, 1
  %p1463 = scmp.lt.s32.totalorder %s1461, 8
  %s1464 = scalar_select %p1463, 1, 0
  %s1465 = scvt.s32.f32 %s1464
  %p1466 = scmp.lt.s32.totalorder %s1462, 8
  %s1467 = scalar_select %p1466, 1, 0
  %s1468 = scvt.s32.f32 %s1467
  %v1469 = vstv %s1465
  %v1470 = vmul.f32 %v1469, %v1429
  %s1471 = ssub.f32 1.0, %s1465
  %v1472 = vstv %s1471
  %v1473 = vmul.f32 %v1472, %v1314
  %v1474 = vadd.f32 %v1470, %v1473
  %v1475 = vstv %s1468
  %v1476 = vmul.f32 %v1475, %v1460
  %s1477 = ssub.f32 1.0, %s1468
  %v1478 = vstv %s1477
  %v1479 = vmul.f32 %v1478, %v1320
  %v1480 = vadd.f32 %v1476, %v1479
  %1482 = vrot.lane.b32.xlu0 %v1474, 112
  %v1483 = vpop.permute.xlu0 %1482
  %v1485 = vsel %vm340, %v1483, %v1480
  %v1487 = vsel %vm86, %v1485, 0
  %1489 = vmatprep.subr.mxu0 0.0
  %1490 = vmatpush1.msra.mxu0 0.0
  %1491 = vmatprep.subr.mxu0 0.0
  %1492 = vmatpush1.msra.mxu0 0.0
  %1493 = vmatprep.subr.mxu0 0.0
  %1494 = vmatpush1.msra.mxu0 0.0
  %1495 = vmatprep.subr.mxu0 0.0
  %1496 = vmatpush1.msra.mxu0 0.0
  %1497 = vmatprep.subr.mxu0 0.0
  %1498 = vmatpush1.msra.mxu0 0.0
  %1499 = vmatprep.subr.mxu0 0.0
  %1500 = vmatpush1.msra.mxu0 0.0
  %1501 = vmatprep.subr.mxu0 0.0
  %1502 = vmatpush1.msra.mxu0 0.0
  %1503 = vmatprep.subr.mxu0 0.0
  %1504 = vmatpush1.msra.mxu0 0.0
  %1505 = vmatprep.subr.mxu0 0.0
  %1506 = vmatpush1.msra.mxu0 0.0
  %1507 = vmatprep.subr.mxu0 0.0
  %1508 = vmatpush1.msra.mxu0 0.0
  %1509 = vmatprep.subr.mxu0 0.0
  %1510 = vmatpush1.msra.mxu0 0.0
  %1511 = vmatprep.subr.mxu0 0.0
  %1512 = vmatpush1.msra.mxu0 0.0
  %1513 = vmatprep.subr.mxu0 0.0
  %1514 = vmatpush1.msra.mxu0 %v332
  %1515 = vmatprep.subr.mxu0 0.0
  %1516 = vmatpush1.msra.mxu0 %v331
  %1517 = vmatprep.subr.mxu0 0.0
  %1518 = vmatpush1.msra.mxu0 %v330
  %1519 = vmatprep.subr.mxu0 0.0
  %1520 = vmatpush1.msra.mxu0 %v329
  %1521 = vmatprep.subr.mxu0 0.0
  %1522 = vmatpush2.msra.mxu0 0.0
  %1523 = vmatprep.subr.mxu0 0.0
  %1524 = vmatpush2.msra.mxu0 0.0
  %1525 = vmatprep.subr.mxu0 0.0
  %1526 = vmatpush2.msra.mxu0 0.0
  %1527 = vmatprep.subr.mxu0 0.0
  %1528 = vmatpush2.msra.mxu0 0.0
  %1529 = vmatprep.subr.mxu0 0.0
  %1530 = vmatpush2.msra.mxu0 0.0
  %1531 = vmatprep.subr.mxu0 0.0
  %1532 = vmatpush2.msra.mxu0 0.0
  %1533 = vmatprep.subr.mxu0 0.0
  %1534 = vmatpush2.msra.mxu0 0.0
  %1535 = vmatprep.subr.mxu0 0.0
  %1536 = vmatpush2.msra.mxu0 0.0
  %1537 = vmatprep.subr.mxu0 0.0
  %1538 = vmatpush2.msra.mxu0 0.0
  %1539 = vmatprep.subr.mxu0 0.0
  %1540 = vmatpush2.msra.mxu0 0.0
  %1541 = vmatprep.subr.mxu0 0.0
  %1542 = vmatpush2.msra.mxu0 0.0
  %1543 = vmatprep.subr.mxu0 0.0
  %1544 = vmatpush2.msra.mxu0 0.0
  %1545 = vmatprep.subr.mxu0 0.0
  %1546 = vmatpush2.msra.mxu0 0.0
  %1547 = vmatprep.subr.mxu0 0.0
  %1548 = vmatpush2.msra.mxu0 0.0
  %1549 = vmatprep.subr.mxu0 0.0
  %1550 = vmatpush2.msra.mxu0 0.0
  %1551 = vmatprep.subr.mxu0 0.0
  %1552 = vmatpush2.msra.mxu0 0.0
  %1553 = vmatprep.mubr.f32.mxu0 0.0
  %1554 = vmatmul.mubr.f32.gmra.mxu0 %v1487
  %v1555 = vpop.f32.mrf.mxu0
  %v1556 = vadd.f32 0.0, %v1555
  %v1557 = vpop.f32.mrf.mxu0
  %1558 = vdwg.mxu0
  %s1559 = scalar_lea.vmem [#allocation5], 56
  %v1560 = vld [vmem:[%s1559] sm:$0xff]
  %v1561 = vld [vmem:[#allocation6] sm:$0xff]
  %v1562 = vadd.f32 %v1560, %v1556
  %v1563 = vxor.u32 %v1562, 2147483648
  %v1564 = vmul.f32 %v1563, 1.442695
  %v1565 = vpow.pop %v1564
  %v1566 = vadd.f32 %v1565, 1.0
  %v1567 = vrcp.pop %v1566
  %v1568 = vmul.f32 1.0, %v1567
  %v1569 = vadd.f32 %v1556, %v431
  %1571 = vrot.lane.b32.xlu0 %v1569, 96
  %v1572 = vpop.permute.xlu0 %1571
  %v1574 = vmul.f32 %v1568, %v1572
  %1576 = vrot.lane.b32.xlu0 %v1574, 32
  %v1577 = vpop.permute.xlu0 %1576
  %v1579 = vadd.f32 %v1560, %v1577
  %v1580 = vtanh.pop %v1579
  %v1581 = vsub.f32 1.0, %v1568
  %1583 = vrot.lane.b32.xlu0 %v1580, 112
  %v1584 = vpop.permute.xlu0 %1583
  %v1586 = vmul.f32 %v1581, %v1584
  %v1587 = vmul.f32 %v1568, %v1474
  %v1588 = vadd.f32 %v1586, %v1587
  %1590 = vrot.lane.b32.xlu0 %v1556, 80
  %v1591 = vpop.permute.xlu0 %1590
  %v1593 = vadd.f32 %v1561, %v1591
  %v1594 = vxor.u32 %v1593, 2147483648
  %v1595 = vmul.f32 %v1594, 1.442695
  %v1596 = vpow.pop %v1595
  %v1597 = vadd.f32 %v1596, 1.0
  %v1598 = vrcp.pop %v1597
  %v1599 = vmul.f32 1.0, %v1598
  %v1600 = vadd.f32 %v1556, %v469
  %1602 = vrot.lane.b32.xlu0 %v1600, 48
  %v1603 = vpop.permute.xlu0 %1602
  %v1605 = vmul.f32 %v1599, %v1603
  %1607 = vrot.lane.b32.xlu0 %v1605, 32
  %v1608 = vpop.permute.xlu0 %1607
  %v1610 = vadd.f32 %v1561, %v1608
  %v1611 = vtanh.pop %v1610
  %v1612 = vsub.f32 1.0, %v1599
  %1614 = vrot.lane.b32.xlu0 %v1611, 112
  %v1615 = vpop.permute.xlu0 %1614
  %v1617 = vmul.f32 %v1612, %v1615
  %v1618 = vmul.f32 %v1599, %v1480
  %v1619 = vadd.f32 %v1617, %v1618
  %s1620 = sadd.s32 %s491, 7
  %p1621 = scmp.lt.s32.totalorder %s1620, 8
  %s1622 = scalar_select %p1621, 1, 0
  %s1623 = scvt.s32.f32 %s1622
  %p1624 = scmp.lt.s32.totalorder %s493, 8
  %s1625 = scalar_select %p1624, 1, 0
  %s1626 = scvt.s32.f32 %s1625
  %v1627 = vstv %s1623
  %v1628 = vmul.f32 %v1627, %v1588
  %s1629 = ssub.f32 1.0, %s1623
  %v1630 = vstv %s1629
  %v1631 = vmul.f32 %v1630, %v1474
  %v1632 = vadd.f32 %v1628, %v1631
  %v1633 = vstv %s1626
  %v1634 = vmul.f32 %v1633, %v1619
  %s1635 = ssub.f32 1.0, %s1626
  %v1636 = vstv %s1635
  %v1637 = vmul.f32 %v1636, %v1480
  %v1638 = vadd.f32 %v1634, %v1637
  %1640 = vrot.lane.b32.xlu0 %v1632, 112
  %v1641 = vpop.permute.xlu0 %1640
  %1643 = vst.msk [vmem:[#allocation2] sm:$0xff] %vm340, %v1641
  %1645 = vrot.lane.b32.xlu0 %v1638, 112
  %v1646 = vpop.permute.xlu0 %1645
  %1648 = vst.msk [vmem:[#allocation3] sm:$0xff] %vm340, %v1646
  // Predicated region
  $region46: #{encoder_forward.1} parent=0 // pred_check
    %p1649 = pneg %p60
  $region47: #{encoder_forward.1} parent=0 // pred_check_branch
    %1651 = sbr.rel (%p1649) target = $region49
  $region48: #{encoder_forward.1} parent=0 // pred_region
    %1652 = vst.msk [vmem:[%s10] sm:$0xff] %vm340, %v1641
    %s1653 = scalar_lea.vmem %s10, 8
    %1654 = vst.msk [vmem:[%s1653] sm:$0xff] %vm340, %v1646
    %v1655 = vld [vmem:[#allocation4] sm:$0xff]
    %v1656 = vmul.f32 %v1655, 0.125
    %v1657 = vld [vmem:[%s8] sm:$0xff]
    %v1658 = vld [vmem:[%s8 + $0x8] sm:$0xff]
    %v1659 = vld [vmem:[%s8 + $0x10] sm:$0xff]
    %v1660 = vld [vmem:[%s8 + $0x18] sm:$0xff]
    %v1661 = vld [vmem:[%s9] sm:$0x1]
    %v1663 = vlaneseq
    %v1664 = vshrl.u32 %v1663, 7
    %v1665 = vsub.s32 0, %v1664
    %v1666 = vrot.slane %v1661, %v1665
    %v1669 = vsel %vm86, %v1656, 0
    %1671 = vmatprep.subr.mxu0 0.0
    %1672 = vmatpush1.msra.mxu0 0.0
    %1673 = vmatprep.subr.mxu0 0.0
    %1674 = vmatpush1.msra.mxu0 0.0
    %1675 = vmatprep.subr.mxu0 0.0
    %1676 = vmatpush1.msra.mxu0 0.0
    %1677 = vmatprep.subr.mxu0 0.0
    %1678 = vmatpush1.msra.mxu0 0.0
    %1679 = vmatprep.subr.mxu0 0.0
    %1680 = vmatpush1.msra.mxu0 0.0
    %1681 = vmatprep.subr.mxu0 0.0
    %1682 = vmatpush1.msra.mxu0 0.0
    %1683 = vmatprep.subr.mxu0 0.0
    %1684 = vmatpush1.msra.mxu0 0.0
    %1685 = vmatprep.subr.mxu0 0.0
    %1686 = vmatpush1.msra.mxu0 0.0
    %1687 = vmatprep.subr.mxu0 0.0
    %1688 = vmatpush1.msra.mxu0 0.0
    %1689 = vmatprep.subr.mxu0 0.0
    %1690 = vmatpush1.msra.mxu0 0.0
    %1691 = vmatprep.subr.mxu0 0.0
    %1692 = vmatpush1.msra.mxu0 0.0
    %1693 = vmatprep.subr.mxu0 0.0
    %1694 = vmatpush1.msra.mxu0 0.0
    %1695 = vmatprep.subr.mxu0 0.0
    %1696 = vmatpush1.msra.mxu0 %v1660
    %1697 = vmatprep.subr.mxu0 0.0
    %1698 = vmatpush1.msra.mxu0 %v1659
    %1699 = vmatprep.subr.mxu0 0.0
    %1700 = vmatpush1.msra.mxu0 %v1658
    %1701 = vmatprep.subr.mxu0 0.0
    %1702 = vmatpush1.msra.mxu0 %v1657
    %1703 = vmatprep.subr.mxu0 0.0
    %1704 = vmatpush2.msra.mxu0 0.0
    %1705 = vmatprep.subr.mxu0 0.0
    %1706 = vmatpush2.msra.mxu0 0.0
    %1707 = vmatprep.subr.mxu0 0.0
    %1708 = vmatpush2.msra.mxu0 0.0
    %1709 = vmatprep.subr.mxu0 0.0
    %1710 = vmatpush2.msra.mxu0 0.0
    %1711 = vmatprep.subr.mxu0 0.0
    %1712 = vmatpush2.msra.mxu0 0.0
    %1713 = vmatprep.subr.mxu0 0.0
    %1714 = vmatpush2.msra.mxu0 0.0
    %1715 = vmatprep.subr.mxu0 0.0
    %1716 = vmatpush2.msra.mxu0 0.0
    %1717 = vmatprep.subr.mxu0 0.0
    %1718 = vmatpush2.msra.mxu0 0.0
    %1719 = vmatprep.subr.mxu0 0.0
    %1720 = vmatpush2.msra.mxu0 0.0
    %1721 = vmatprep.subr.mxu0 0.0
    %1722 = vmatpush2.msra.mxu0 0.0
    %1723 = vmatprep.subr.mxu0 0.0
    %1724 = vmatpush2.msra.mxu0 0.0
    %1725 = vmatprep.subr.mxu0 0.0
    %1726 = vmatpush2.msra.mxu0 0.0
    %1727 = vmatprep.subr.mxu0 0.0
    %1728 = vmatpush2.msra.mxu0 0.0
    %1729 = vmatprep.subr.mxu0 0.0
    %1730 = vmatpush2.msra.mxu0 0.0
    %1731 = vmatprep.subr.mxu0 0.0
    %1732 = vmatpush2.msra.mxu0 0.0
    %1733 = vmatprep.subr.mxu0 0.0
    %1734 = vmatpush2.msra.mxu0 0.0
    %1735 = vmatprep.mubr.f32.mxu0 0.0
    %1736 = vmatmul.mubr.f32.gmra.mxu0 %v1669
    %v1737 = vpop.f32.mrf.mxu0
    %v1738 = vadd.f32 %v1666, %v1737
    %v1739 = vpop.f32.mrf.mxu0
    %1740 = vdwg.mxu0
    %1741 = vst.msk [vmem:[%s11] sm:$0xff] %vm86, %v1738
  $region49: #{encoder_forward.1} parent=0 // pred_fallthru
    _
  // Predicated region
  $region50: #{encoder_forward.1} parent=0 // pred_check
    _
  $region51: #{encoder_forward.1} parent=0 // pred_check_branch
    %1743 = sbr.rel (0) target = $region53
  $region52: #{encoder_forward.1} parent=0 // pred_region
    _
  $region53: #{encoder_forward.1} parent=0 // pred_fallthru
    _
  // Predicated region
  $region54: #{encoder_forward.1} parent=0 // pred_check
    _
  $region55: #{encoder_forward.1} parent=0 // pred_check_branch
    %1745 = sbr.rel (0) target = $region57
  $region56: #{encoder_forward.1} parent=0 // pred_region
    _
  $region57: #{encoder_forward.1} parent=0 // pred_fallthru
    _
  // Predicated region
  $region58: #{encoder_forward.1} parent=0 // pred_check
    _
  $region59: #{encoder_forward.1} parent=0 // pred_check_branch
    %1747 = sbr.rel (0) target = $region61
  $region60: #{encoder_forward.1} parent=0 // pred_region
    _
  $region61: #{encoder_forward.1} parent=0 // pred_fallthru
    _
  // Predicated region
  $region62: #{encoder_forward.1} parent=0 // pred_check
    _
  $region63: #{encoder_forward.1} parent=0 // pred_check_branch
    %1749 = sbr.rel (0) target = $region65
  $region64: #{encoder_forward.1} parent=0 // pred_region
    _
  $region65: #{encoder_forward.1} parent=0 // pred_fallthru
    _

</llo_original>
